<compile_context>
chip_gen: v7x
topology: tpu7x:2x2x1
jax: 0.10.0
libtpu: 0.0.40
codegen_flags: <defaults>
</compile_context>

<pallas_src>
import functools
import math

import jax
import jax.numpy as jnp
from jax.experimental import pallas as pl
from jax.experimental.pallas import tpu as pltpu


def _fused_block_kernel(x_ref, ctx_ref, mask_ref,
                        n1g_ref, n1b_ref, n2g_ref, n2b_ref, n3g_ref, n3b_ref,
                        a1q_ref, a1k_ref, a1v_ref, a1o_ref, a1bo_ref,
                        a2q_ref, a2k_ref, a2v_ref, a2o_ref, a2bo_ref,
                        wa_ref, ba_ref, wg_ref, bg_ref, w2_ref, b2_ref,
                        o_ref, *, heads, dim_head):
    f32, bf16 = jnp.float32, jnp.bfloat16
    scale = dim_head ** (-0.5)
    neg = -jnp.finfo(f32).max

    def layernorm(x, g_ref, b_ref):
        mu = jnp.mean(x, axis=-1, keepdims=True)
        var = jnp.mean(jnp.square(x - mu), axis=-1, keepdims=True)
        return (x - mu) * jax.lax.rsqrt(var + 1e-5) * g_ref[...] + b_ref[...]

    def attention(xn, ctx, wq_ref, wk_ref, wv_ref, wo_ref, bo_ref, mask):
        # Heads-leading batched projections: (H, N, D) @ (H, D, Dh) -> (H, N, Dh).
        # Weights are already (H, D, Dh) / (H, Dh, D) bf16 (pre-reshaped in wrapper).
        xb = jnp.broadcast_to(xn.astype(bf16)[None], (heads,) + xn.shape)
        cb = jnp.broadcast_to(ctx.astype(bf16)[None], (heads,) + ctx.shape)
        q = jnp.einsum('hnd,hdk->hnk', xb, wq_ref[...], preferred_element_type=f32)
        k = jnp.einsum('hmd,hdk->hmk', cb, wk_ref[...], preferred_element_type=f32)
        v = jnp.einsum('hmd,hdk->hmk', cb, wv_ref[...], preferred_element_type=f32)

        sim = jnp.einsum('hnk,hmk->hnm', q.astype(bf16), k.astype(bf16),
                         preferred_element_type=f32) * scale        # (H, N, M)
        if mask is not None:
            # masked_fill(~mask, -max), applied once for all heads / queries
            sim = jnp.where(mask, sim, neg)
        sim = sim - jnp.max(sim, axis=-1, keepdims=True)            # softmax over keys
        p = jnp.exp(sim)
        p = p * pl.reciprocal(jnp.sum(p, axis=-1, keepdims=True), approx=True)

        out = jnp.einsum('hnm,hmk->hnk', p.astype(bf16), v.astype(bf16),
                         preferred_element_type=f32)                 # (H, N, Dh)
        # to_out: Linear(inner_dim, query_dim) == sum_h out_h @ Wo_h  (+ bias)
        proj = jnp.einsum('hnk,hkd->hnd', out.astype(bf16), wo_ref[...],
                          preferred_element_type=f32)                # (H, N, D)
        return jnp.sum(proj, axis=0) + bo_ref[...]                   # (N, D)

    def geglu_ff(xn):
        xb = xn.astype(bf16)
        a = jnp.dot(xb, wa_ref[...], preferred_element_type=f32) + ba_ref[...]
        gate = jnp.dot(xb, wg_ref[...], preferred_element_type=f32) + bg_ref[...]
        # exact (erf) GELU — matches torch.nn.functional.gelu default
        g = a * (0.5 * gate * (1.0 + jax.lax.erf(gate * (1.0 / math.sqrt(2.0)))))
        return jnp.dot(g.astype(bf16), w2_ref[...], preferred_element_type=f32) + b2_ref[...]

    x = x_ref[0].astype(f32)                                         # (N, D)

    # --- attn1: self-attention (context None -> K/V from normed x, no mask) ---
    xn = layernorm(x, n1g_ref, n1b_ref)
    x = x + attention(xn, xn, a1q_ref, a1k_ref, a1v_ref, a1o_ref, a1bo_ref, mask=None)

    # --- attn2: cross-attention with context['states'] + key-padding mask ---
    xn = layernorm(x, n2g_ref, n2b_ref)
    ctx = ctx_ref[0].astype(f32)                                     # (M, Dc)
    mvec = mask_ref[0] != 0                                          # (1, M) bool
    x = x + attention(xn, ctx, a2q_ref, a2k_ref, a2v_ref, a2o_ref, a2bo_ref, mask=mvec)

    # --- GEGLU feed-forward ---
    xn = layernorm(x, n3g_ref, n3b_ref)
    x = x + geglu_ff(xn)

    o_ref[0] = x.astype(o_ref.dtype)


def basic_transformer_block(x, context_states, context_mask, params, *, n_heads, d_head):
    """x = attn1(norm1(x)) + x ; x = attn2(norm2(x), context) + x ; x = ff(norm3(x)) + x"""
    B, N, D = x.shape
    _, M, Dc = context_states.shape
    H, Dh = n_heads, d_head
    F = 4 * D                                   # FeedForward mult=4 (GEGLU inner dim)
    bf = jnp.bfloat16

    # ---- one-time weight layout prep (outside the kernel) ----
    def qkv3(w, din):                           # (H*Dh, din) -> (H, din, Dh) bf16
        return jnp.transpose(w.reshape(H, Dh, din), (0, 2, 1)).astype(bf)

    def out3(w):                                # (D, H*Dh) -> (H, Dh, D) bf16
        return jnp.transpose(w, (1, 0)).reshape(H, Dh, D).astype(bf)

    a1q, a1k, a1v = qkv3(params["attn1_wq"], D), qkv3(params["attn1_wk"], D), qkv3(params["attn1_wv"], D)
    a1o, a1bo = out3(params["attn1_wo"]), params["attn1_bo"].reshape(1, D)
    a2q, a2k, a2v = qkv3(params["attn2_wq"], D), qkv3(params["attn2_wk"], Dc), qkv3(params["attn2_wv"], Dc)
    a2o, a2bo = out3(params["attn2_wo"]), params["attn2_bo"].reshape(1, D)

    w1 = params["ff_w1"]                        # (2F, D): rows [:F] -> 'a', rows [F:] -> gate
    ffwa = jnp.transpose(w1[:F], (1, 0)).astype(bf)          # (D, F)
    ffwg = jnp.transpose(w1[F:], (1, 0)).astype(bf)          # (D, F)
    ffba = params["ff_b1"][:F].reshape(1, F)
    ffbg = params["ff_b1"][F:].reshape(1, F)
    ffw2 = jnp.transpose(params["ff_w2"], (1, 0)).astype(bf)  # (F, D)
    ffb2 = params["ff_b2"].reshape(1, D)

    n1g, n1b = params["norm1_g"].reshape(1, D), params["norm1_b"].reshape(1, D)
    n2g, n2b = params["norm2_g"].reshape(1, D), params["norm2_b"].reshape(1, D)
    n3g, n3b = params["norm3_g"].reshape(1, D), params["norm3_b"].reshape(1, D)

    mask3 = context_mask.reshape(B, 1, M).astype(jnp.int32)

    kernel = functools.partial(_fused_block_kernel, heads=H, dim_head=Dh)

    def bcast(shape):                           # grid-constant operand (same block every step)
        return pl.BlockSpec(shape, lambda b, _n=len(shape): (0,) * _n)

    in_specs = [
        pl.BlockSpec((1, N, D), lambda b: (b, 0, 0)),        # x
        pl.BlockSpec((1, M, Dc), lambda b: (b, 0, 0)),       # context states
        pl.BlockSpec((1, 1, M), lambda b: (b, 0, 0)),        # context mask
        bcast((1, D)), bcast((1, D)),                        # norm1 g/b
        bcast((1, D)), bcast((1, D)),                        # norm2 g/b
        bcast((1, D)), bcast((1, D)),                        # norm3 g/b
        bcast((H, D, Dh)), bcast((H, D, Dh)), bcast((H, D, Dh)),   # attn1 q/k/v
        bcast((H, Dh, D)), bcast((1, D)),                           # attn1 out w/b
        bcast((H, D, Dh)), bcast((H, Dc, Dh)), bcast((H, Dc, Dh)),  # attn2 q/k/v
        bcast((H, Dh, D)), bcast((1, D)),                           # attn2 out w/b
        bcast((D, F)), bcast((1, F)),                        # GEGLU 'a' proj
        bcast((D, F)), bcast((1, F)),                        # GEGLU gate proj
        bcast((F, D)), bcast((1, D)),                        # FF out proj
    ]

    return pl.pallas_call(
        kernel,
        out_shape=jax.ShapeDtypeStruct((B, N, D), x.dtype),
        grid_spec=pltpu.PrefetchScalarGridSpec(
            num_scalar_prefetch=0,
            grid=(B,),
            in_specs=in_specs,
            out_specs=pl.BlockSpec((1, N, D), lambda b: (b, 0, 0)),
        ),
        compiler_params=pltpu.CompilerParams(
            dimension_semantics=("parallel",),
            vmem_limit_bytes=64 * 1024 * 1024,
        ),
    )(x, context_states, mask3,
      n1g, n1b, n2g, n2b, n3g, n3b,
      a1q, a1k, a1v, a1o, a1bo,
      a2q, a2k, a2v, a2o, a2bo,
      ffwa, ffba, ffwg, ffbg, ffw2, ffb2)


def init_params(key, dim, n_heads, d_head, context_dim):
    inner = n_heads * d_head
    ff_inner = dim * 4
    keys = jax.random.split(key, 10)

    def w(k, shape, fan_in):
        bound = 1.0 / math.sqrt(fan_in)
        return jax.random.uniform(k, shape, jnp.float32, -bound, bound)

    return {
        "norm1_g": jnp.ones((dim,), jnp.float32), "norm1_b": jnp.zeros((dim,), jnp.float32),
        "norm2_g": jnp.ones((dim,), jnp.float32), "norm2_b": jnp.zeros((dim,), jnp.float32),
        "norm3_g": jnp.ones((dim,), jnp.float32), "norm3_b": jnp.zeros((dim,), jnp.float32),
        "attn1_wq": w(keys[0], (inner, dim), dim),
        "attn1_wk": w(keys[1], (inner, dim), dim),
        "attn1_wv": w(keys[2], (inner, dim), dim),
        "attn1_wo": w(keys[3], (dim, inner), inner),
        "attn1_bo": jnp.zeros((dim,), jnp.float32),
        "attn2_wq": w(keys[4], (inner, dim), dim),
        "attn2_wk": w(keys[5], (inner, context_dim), context_dim),
        "attn2_wv": w(keys[6], (inner, context_dim), context_dim),
        "attn2_wo": w(keys[7], (dim, inner), inner),
        "attn2_bo": jnp.zeros((dim,), jnp.float32),
        "ff_w1": w(keys[8], (2 * ff_inner, dim), dim),
        "ff_b1": jnp.zeros((2 * ff_inner,), jnp.float32),
        "ff_w2": w(keys[9], (dim, ff_inner), ff_inner),
        "ff_b2": jnp.zeros((dim,), jnp.float32),
    }


if __name__ == "__main__":
    # small shapes consistent with the module (dropout=0 -> dropout is identity)
    dim, n_heads, d_head, context_dim = 32, 4, 8, 16
    B, N, M = 2, 16, 8

    key = jax.random.PRNGKey(0)
    kx, kc, kp = jax.random.split(key, 3)
    x = jax.random.normal(kx, (B, N, dim), jnp.float32)
    context_states = jax.random.normal(kc, (B, M, context_dim), jnp.float32)
    # key-padding mask: first half of the context tokens valid
    context_mask = jnp.concatenate(
        [jnp.ones((B, M // 2), jnp.int32), jnp.zeros((B, M - M // 2), jnp.int32)], axis=1)

    params = init_params(kp, dim, n_heads, d_head, context_dim)

    fwd = jax.jit(functools.partial(basic_transformer_block, n_heads=n_heads, d_head=d_head))
    out = fwd(x, context_states, context_mask, params)
    out = jax.block_until_ready(out)

    assert out.shape == (B, N, dim)
    assert bool(jnp.all(jnp.isfinite(out)))
    print("KERNEL_OK")
</pallas_src>

<mosaic_0001>
module attributes {stable_mosaic.version = 11 : i64} {
  func.func @_fused_block_kernel(%arg0: i32, %arg1: memref<1x16x32xf32, #tpu.memory_space<vmem>>, %arg2: memref<1x8x16xf32, #tpu.memory_space<vmem>>, %arg3: memref<1x1x8xi32, #tpu.memory_space<vmem>>, %arg4: memref<1x32xf32, #tpu.memory_space<vmem>>, %arg5: memref<1x32xf32, #tpu.memory_space<vmem>>, %arg6: memref<1x32xf32, #tpu.memory_space<vmem>>, %arg7: memref<1x32xf32, #tpu.memory_space<vmem>>, %arg8: memref<1x32xf32, #tpu.memory_space<vmem>>, %arg9: memref<1x32xf32, #tpu.memory_space<vmem>>, %arg10: memref<4x32x8xbf16, #tpu.memory_space<vmem>>, %arg11: memref<4x32x8xbf16, #tpu.memory_space<vmem>>, %arg12: memref<4x32x8xbf16, #tpu.memory_space<vmem>>, %arg13: memref<4x8x32xbf16, #tpu.memory_space<vmem>>, %arg14: memref<1x32xf32, #tpu.memory_space<vmem>>, %arg15: memref<4x32x8xbf16, #tpu.memory_space<vmem>>, %arg16: memref<4x16x8xbf16, #tpu.memory_space<vmem>>, %arg17: memref<4x16x8xbf16, #tpu.memory_space<vmem>>, %arg18: memref<4x8x32xbf16, #tpu.memory_space<vmem>>, %arg19: memref<1x32xf32, #tpu.memory_space<vmem>>, %arg20: memref<32x128xbf16, #tpu.memory_space<vmem>>, %arg21: memref<1x128xf32, #tpu.memory_space<vmem>>, %arg22: memref<32x128xbf16, #tpu.memory_space<vmem>>, %arg23: memref<1x128xf32, #tpu.memory_space<vmem>>, %arg24: memref<128x32xbf16, #tpu.memory_space<vmem>>, %arg25: memref<1x32xf32, #tpu.memory_space<vmem>>, %arg26: memref<1x16x32xf32, #tpu.memory_space<vmem>>) attributes {dimension_semantics = [#tpu.dimension_semantics<parallel>], iteration_bounds = array<i64: 2>, scalar_prefetch = 0 : i64, scratch_operands = 0 : i64, tpu.core_type = #tpu.core_type<tc>, window_params = [{transform_indices = @transform_0, window_bounds = array<i64: 1, 16, 32>}, {transform_indices = @transform_1, window_bounds = array<i64: 1, 8, 16>}, {transform_indices = @transform_2, window_bounds = array<i64: 1, 1, 8>}, {pipeline_mode = #tpu.pipeline_mode<synchronous>, transform_indices = @transform_3, window_bounds = array<i64: 1, 32>}, {pipeline_mode = #tpu.pipeline_mode<synchronous>, transform_indices = @transform_4, window_bounds = array<i64: 1, 32>}, {pipeline_mode = #tpu.pipeline_mode<synchronous>, transform_indices = @transform_5, window_bounds = array<i64: 1, 32>}, {pipeline_mode = #tpu.pipeline_mode<synchronous>, transform_indices = @transform_6, window_bounds = array<i64: 1, 32>}, {pipeline_mode = #tpu.pipeline_mode<synchronous>, transform_indices = @transform_7, window_bounds = array<i64: 1, 32>}, {pipeline_mode = #tpu.pipeline_mode<synchronous>, transform_indices = @transform_8, window_bounds = array<i64: 1, 32>}, {pipeline_mode = #tpu.pipeline_mode<synchronous>, transform_indices = @transform_9, window_bounds = array<i64: 4, 32, 8>}, {pipeline_mode = #tpu.pipeline_mode<synchronous>, transform_indices = @transform_10, window_bounds = array<i64: 4, 32, 8>}, {pipeline_mode = #tpu.pipeline_mode<synchronous>, transform_indices = @transform_11, window_bounds = array<i64: 4, 32, 8>}, {pipeline_mode = #tpu.pipeline_mode<synchronous>, transform_indices = @transform_12, window_bounds = array<i64: 4, 8, 32>}, {pipeline_mode = #tpu.pipeline_mode<synchronous>, transform_indices = @transform_13, window_bounds = array<i64: 1, 32>}, {pipeline_mode = #tpu.pipeline_mode<synchronous>, transform_indices = @transform_14, window_bounds = array<i64: 4, 32, 8>}, {pipeline_mode = #tpu.pipeline_mode<synchronous>, transform_indices = @transform_15, window_bounds = array<i64: 4, 16, 8>}, {pipeline_mode = #tpu.pipeline_mode<synchronous>, transform_indices = @transform_16, window_bounds = array<i64: 4, 16, 8>}, {pipeline_mode = #tpu.pipeline_mode<synchronous>, transform_indices = @transform_17, window_bounds = array<i64: 4, 8, 32>}, {pipeline_mode = #tpu.pipeline_mode<synchronous>, transform_indices = @transform_18, window_bounds = array<i64: 1, 32>}, {pipeline_mode = #tpu.pipeline_mode<synchronous>, transform_indices = @transform_19, window_bounds = array<i64: 32, 128>}, {pipeline_mode = #tpu.pipeline_mode<synchronous>, transform_indices = @transform_20, window_bounds = array<i64: 1, 128>}, {pipeline_mode = #tpu.pipeline_mode<synchronous>, transform_indices = @transform_21, window_bounds = array<i64: 32, 128>}, {pipeline_mode = #tpu.pipeline_mode<synchronous>, transform_indices = @transform_22, window_bounds = array<i64: 1, 128>}, {pipeline_mode = #tpu.pipeline_mode<synchronous>, transform_indices = @transform_23, window_bounds = array<i64: 128, 32>}, {pipeline_mode = #tpu.pipeline_mode<synchronous>, transform_indices = @transform_24, window_bounds = array<i64: 1, 32>}, {transform_indices = @transform_25, window_bounds = array<i64: 1, 16, 32>}]} {
    %c0 = arith.constant 0 : index
    %c0_0 = arith.constant 0 : index
    %c0_1 = arith.constant 0 : index
    %0 = vector.load %arg1[%c0, %c0_0, %c0_1] : memref<1x16x32xf32, #tpu.memory_space<vmem>>, vector<1x16x32xf32>
    %1 = vector.shape_cast %0 : vector<1x16x32xf32> to vector<16x32xf32>
    %cst = arith.constant dense<0.000000e+00> : vector<16xf32>
    %2 = vector.multi_reduction <add>, %1, %cst [1] : vector<16x32xf32> to vector<16xf32>
    %3 = vector.shape_cast %2 : vector<16xf32> to vector<16x1xf32>
    %cst_2 = arith.constant 3.200000e+01 : f32
    %4 = vector.broadcast %cst_2 : f32 to vector<16x1xf32>
    %5 = arith.divf %3, %4 : vector<16x1xf32>
    %6 = vector.broadcast %5 : vector<16x1xf32> to vector<16x32xf32>
    %7 = arith.subf %1, %6 : vector<16x32xf32>
    %8 = arith.mulf %7, %7 : vector<16x32xf32>
    %cst_3 = arith.constant dense<0.000000e+00> : vector<16xf32>
    %9 = vector.multi_reduction <add>, %8, %cst_3 [1] : vector<16x32xf32> to vector<16xf32>
    %10 = vector.shape_cast %9 : vector<16xf32> to vector<16x1xf32>
    %cst_4 = arith.constant 3.200000e+01 : f32
    %11 = vector.broadcast %cst_4 : f32 to vector<16x1xf32>
    %12 = arith.divf %10, %11 : vector<16x1xf32>
    %13 = vector.broadcast %5 : vector<16x1xf32> to vector<16x32xf32>
    %14 = arith.subf %1, %13 : vector<16x32xf32>
    %cst_5 = arith.constant 9.99999974E-6 : f32
    %15 = vector.broadcast %cst_5 : f32 to vector<16x1xf32>
    %16 = arith.addf %12, %15 : vector<16x1xf32>
    %17 = math.rsqrt %16 : vector<16x1xf32>
    %18 = vector.broadcast %17 : vector<16x1xf32> to vector<16x32xf32>
    %19 = arith.mulf %14, %18 : vector<16x32xf32>
    %c0_6 = arith.constant 0 : index
    %c0_7 = arith.constant 0 : index
    %20 = vector.load %arg4[%c0_6, %c0_7] : memref<1x32xf32, #tpu.memory_space<vmem>>, vector<1x32xf32>
    %21 = vector.broadcast %20 : vector<1x32xf32> to vector<16x32xf32>
    %22 = arith.mulf %19, %21 : vector<16x32xf32>
    %c0_8 = arith.constant 0 : index
    %c0_9 = arith.constant 0 : index
    %23 = vector.load %arg5[%c0_8, %c0_9] : memref<1x32xf32, #tpu.memory_space<vmem>>, vector<1x32xf32>
    %24 = vector.broadcast %23 : vector<1x32xf32> to vector<16x32xf32>
    %25 = arith.addf %22, %24 : vector<16x32xf32>
    %26 = arith.truncf %25 : vector<16x32xf32> to vector<16x32xbf16>
    %27 = vector.shape_cast %26 : vector<16x32xbf16> to vector<1x16x32xbf16>
    %28 = vector.shape_cast %27 : vector<1x16x32xbf16> to vector<1x16x32xbf16>
    %29 = vector.broadcast %28 : vector<1x16x32xbf16> to vector<4x16x32xbf16>
    %30 = arith.truncf %25 : vector<16x32xf32> to vector<16x32xbf16>
    %31 = vector.shape_cast %30 : vector<16x32xbf16> to vector<1x16x32xbf16>
    %32 = vector.shape_cast %31 : vector<1x16x32xbf16> to vector<1x16x32xbf16>
    %33 = vector.broadcast %32 : vector<1x16x32xbf16> to vector<4x16x32xbf16>
    %c0_10 = arith.constant 0 : index
    %c0_11 = arith.constant 0 : index
    %c0_12 = arith.constant 0 : index
    %34 = vector.load %arg10[%c0_10, %c0_11, %c0_12] : memref<4x32x8xbf16, #tpu.memory_space<vmem>>, vector<4x32x8xbf16>
    "tpu.trace_start"() <{level = 10 : i32, message = "hnd,hdk->hnk"}> : () -> ()
    %cst_13 = arith.constant dense<0.000000e+00> : vector<4x16x8xf32>
    %35 = tpu.matmul %29, %34, %cst_13 {dimension_numbers = #tpu.dot_dimension_numbers<[2], [1], [1], [2], [0, 0, 0, 1, 1, 2], [0], [0]>} : vector<4x16x32xbf16>, vector<4x32x8xbf16>, vector<4x16x8xf32> -> vector<4x16x8xf32>
    "tpu.trace_stop"() : () -> ()
    %c0_14 = arith.constant 0 : index
    %c0_15 = arith.constant 0 : index
    %c0_16 = arith.constant 0 : index
    %36 = vector.load %arg11[%c0_14, %c0_15, %c0_16] : memref<4x32x8xbf16, #tpu.memory_space<vmem>>, vector<4x32x8xbf16>
    "tpu.trace_start"() <{level = 10 : i32, message = "hmd,hdk->hmk"}> : () -> ()
    %cst_17 = arith.constant dense<0.000000e+00> : vector<4x16x8xf32>
    %37 = tpu.matmul %33, %36, %cst_17 {dimension_numbers = #tpu.dot_dimension_numbers<[2], [1], [1], [2], [0, 0, 0, 1, 1, 2], [0], [0]>} : vector<4x16x32xbf16>, vector<4x32x8xbf16>, vector<4x16x8xf32> -> vector<4x16x8xf32>
    "tpu.trace_stop"() : () -> ()
    %c0_18 = arith.constant 0 : index
    %c0_19 = arith.constant 0 : index
    %c0_20 = arith.constant 0 : index
    %38 = vector.load %arg12[%c0_18, %c0_19, %c0_20] : memref<4x32x8xbf16, #tpu.memory_space<vmem>>, vector<4x32x8xbf16>
    "tpu.trace_start"() <{level = 10 : i32, message = "hmd,hdk->hmk"}> : () -> ()
    %cst_21 = arith.constant dense<0.000000e+00> : vector<4x16x8xf32>
    %39 = tpu.matmul %33, %38, %cst_21 {dimension_numbers = #tpu.dot_dimension_numbers<[2], [1], [1], [2], [0, 0, 0, 1, 1, 2], [0], [0]>} : vector<4x16x32xbf16>, vector<4x32x8xbf16>, vector<4x16x8xf32> -> vector<4x16x8xf32>
    "tpu.trace_stop"() : () -> ()
    %40 = arith.truncf %35 : vector<4x16x8xf32> to vector<4x16x8xbf16>
    %41 = arith.truncf %37 : vector<4x16x8xf32> to vector<4x16x8xbf16>
    "tpu.trace_start"() <{level = 10 : i32, message = "hnk,hmk->hnm"}> : () -> ()
    %cst_22 = arith.constant dense<0.000000e+00> : vector<4x16x16xf32>
    %42 = tpu.matmul %40, %41, %cst_22 {dimension_numbers = #tpu.dot_dimension_numbers<[2], [2], [1], [1], [0, 0, 0, 1, 1, 1], [0], [0]>} : vector<4x16x8xbf16>, vector<4x16x8xbf16>, vector<4x16x16xf32> -> vector<4x16x16xf32>
    "tpu.trace_stop"() : () -> ()
    %cst_23 = arith.constant 0.353553385 : f32
    %43 = vector.broadcast %cst_23 : f32 to vector<4x16x16xf32>
    %44 = arith.mulf %42, %43 : vector<4x16x16xf32>
    %cst_24 = arith.constant dense<0xFF800000> : vector<4x16xf32>
    %45 = vector.multi_reduction <maximumf>, %44, %cst_24 [2] : vector<4x16x16xf32> to vector<4x16xf32>
    %46 = vector.shape_cast %45 : vector<4x16xf32> to vector<4x16x1xf32>
    %47 = vector.broadcast %46 : vector<4x16x1xf32> to vector<4x16x16xf32>
    %48 = arith.subf %44, %47 : vector<4x16x16xf32>
    %49 = math.exp %48 : vector<4x16x16xf32>
    %cst_25 = arith.constant dense<0.000000e+00> : vector<4x16xf32>
    %50 = vector.multi_reduction <add>, %49, %cst_25 [2] : vector<4x16x16xf32> to vector<4x16xf32>
    %51 = vector.shape_cast %50 : vector<4x16xf32> to vector<4x16x1xf32>
    %52 = tpu.reciprocal %51 {approx = true} : vector<4x16x1xf32> -> vector<4x16x1xf32>
    %53 = vector.broadcast %52 : vector<4x16x1xf32> to vector<4x16x16xf32>
    %54 = arith.mulf %49, %53 : vector<4x16x16xf32>
    %55 = arith.truncf %54 : vector<4x16x16xf32> to vector<4x16x16xbf16>
    %56 = arith.truncf %39 : vector<4x16x8xf32> to vector<4x16x8xbf16>
    "tpu.trace_start"() <{level = 10 : i32, message = "hnm,hmk->hnk"}> : () -> ()
    %cst_26 = arith.constant dense<0.000000e+00> : vector<4x16x8xf32>
    %57 = tpu.matmul %55, %56, %cst_26 {dimension_numbers = #tpu.dot_dimension_numbers<[2], [1], [1], [2], [0, 0, 0, 1, 1, 2], [0], [0]>} : vector<4x16x16xbf16>, vector<4x16x8xbf16>, vector<4x16x8xf32> -> vector<4x16x8xf32>
    "tpu.trace_stop"() : () -> ()
    %58 = arith.truncf %57 : vector<4x16x8xf32> to vector<4x16x8xbf16>
    %c0_27 = arith.constant 0 : index
    %c0_28 = arith.constant 0 : index
    %c0_29 = arith.constant 0 : index
    %59 = vector.load %arg13[%c0_27, %c0_28, %c0_29] : memref<4x8x32xbf16, #tpu.memory_space<vmem>>, vector<4x8x32xbf16>
    "tpu.trace_start"() <{level = 10 : i32, message = "hnk,hkd->hnd"}> : () -> ()
    %cst_30 = arith.constant dense<0.000000e+00> : vector<4x16x32xf32>
    %60 = tpu.matmul %58, %59, %cst_30 {dimension_numbers = #tpu.dot_dimension_numbers<[2], [1], [1], [2], [0, 0, 0, 1, 1, 2], [0], [0]>} : vector<4x16x8xbf16>, vector<4x8x32xbf16>, vector<4x16x32xf32> -> vector<4x16x32xf32>
    "tpu.trace_stop"() : () -> ()
    %cst_31 = arith.constant dense<0.000000e+00> : vector<16x32xf32>
    %61 = vector.multi_reduction <add>, %60, %cst_31 [0] : vector<4x16x32xf32> to vector<16x32xf32>
    %c0_32 = arith.constant 0 : index
    %c0_33 = arith.constant 0 : index
    %62 = vector.load %arg14[%c0_32, %c0_33] : memref<1x32xf32, #tpu.memory_space<vmem>>, vector<1x32xf32>
    %63 = vector.broadcast %62 : vector<1x32xf32> to vector<16x32xf32>
    %64 = arith.addf %61, %63 : vector<16x32xf32>
    %65 = arith.addf %1, %64 : vector<16x32xf32>
    %cst_34 = arith.constant dense<0.000000e+00> : vector<16xf32>
    %66 = vector.multi_reduction <add>, %65, %cst_34 [1] : vector<16x32xf32> to vector<16xf32>
    %67 = vector.shape_cast %66 : vector<16xf32> to vector<16x1xf32>
    %cst_35 = arith.constant 3.200000e+01 : f32
    %68 = vector.broadcast %cst_35 : f32 to vector<16x1xf32>
    %69 = arith.divf %67, %68 : vector<16x1xf32>
    %70 = vector.broadcast %69 : vector<16x1xf32> to vector<16x32xf32>
    %71 = arith.subf %65, %70 : vector<16x32xf32>
    %72 = arith.mulf %71, %71 : vector<16x32xf32>
    %cst_36 = arith.constant dense<0.000000e+00> : vector<16xf32>
    %73 = vector.multi_reduction <add>, %72, %cst_36 [1] : vector<16x32xf32> to vector<16xf32>
    %74 = vector.shape_cast %73 : vector<16xf32> to vector<16x1xf32>
    %cst_37 = arith.constant 3.200000e+01 : f32
    %75 = vector.broadcast %cst_37 : f32 to vector<16x1xf32>
    %76 = arith.divf %74, %75 : vector<16x1xf32>
    %77 = vector.broadcast %69 : vector<16x1xf32> to vector<16x32xf32>
    %78 = arith.subf %65, %77 : vector<16x32xf32>
    %cst_38 = arith.constant 9.99999974E-6 : f32
    %79 = vector.broadcast %cst_38 : f32 to vector<16x1xf32>
    %80 = arith.addf %76, %79 : vector<16x1xf32>
    %81 = math.rsqrt %80 : vector<16x1xf32>
    %82 = vector.broadcast %81 : vector<16x1xf32> to vector<16x32xf32>
    %83 = arith.mulf %78, %82 : vector<16x32xf32>
    %c0_39 = arith.constant 0 : index
    %c0_40 = arith.constant 0 : index
    %84 = vector.load %arg6[%c0_39, %c0_40] : memref<1x32xf32, #tpu.memory_space<vmem>>, vector<1x32xf32>
    %85 = vector.broadcast %84 : vector<1x32xf32> to vector<16x32xf32>
    %86 = arith.mulf %83, %85 : vector<16x32xf32>
    %c0_41 = arith.constant 0 : index
    %c0_42 = arith.constant 0 : index
    %87 = vector.load %arg7[%c0_41, %c0_42] : memref<1x32xf32, #tpu.memory_space<vmem>>, vector<1x32xf32>
    %88 = vector.broadcast %87 : vector<1x32xf32> to vector<16x32xf32>
    %89 = arith.addf %86, %88 : vector<16x32xf32>
    %c0_43 = arith.constant 0 : index
    %c0_44 = arith.constant 0 : index
    %c0_45 = arith.constant 0 : index
    %90 = vector.load %arg2[%c0_43, %c0_44, %c0_45] : memref<1x8x16xf32, #tpu.memory_space<vmem>>, vector<1x8x16xf32>
    %91 = vector.shape_cast %90 : vector<1x8x16xf32> to vector<8x16xf32>
    %c0_46 = arith.constant 0 : index
    %c0_47 = arith.constant 0 : index
    %c0_48 = arith.constant 0 : index
    %92 = vector.load %arg3[%c0_46, %c0_47, %c0_48] : memref<1x1x8xi32, #tpu.memory_space<vmem>>, vector<1x1x8xi32>
    %93 = vector.shape_cast %92 : vector<1x1x8xi32> to vector<1x8xi32>
    %c0_i32 = arith.constant 0 : i32
    %94 = vector.broadcast %c0_i32 : i32 to vector<1x8xi32>
    %95 = arith.cmpi ne, %93, %94 : vector<1x8xi32>
    %96 = arith.truncf %89 : vector<16x32xf32> to vector<16x32xbf16>
    %97 = vector.shape_cast %96 : vector<16x32xbf16> to vector<1x16x32xbf16>
    %98 = vector.shape_cast %97 : vector<1x16x32xbf16> to vector<1x16x32xbf16>
    %99 = vector.broadcast %98 : vector<1x16x32xbf16> to vector<4x16x32xbf16>
    %100 = arith.truncf %91 : vector<8x16xf32> to vector<8x16xbf16>
    %101 = vector.shape_cast %100 : vector<8x16xbf16> to vector<1x8x16xbf16>
    %102 = vector.shape_cast %101 : vector<1x8x16xbf16> to vector<1x8x16xbf16>
    %103 = vector.broadcast %102 : vector<1x8x16xbf16> to vector<4x8x16xbf16>
    %c0_49 = arith.constant 0 : index
    %c0_50 = arith.constant 0 : index
    %c0_51 = arith.constant 0 : index
    %104 = vector.load %arg15[%c0_49, %c0_50, %c0_51] : memref<4x32x8xbf16, #tpu.memory_space<vmem>>, vector<4x32x8xbf16>
    "tpu.trace_start"() <{level = 10 : i32, message = "hnd,hdk->hnk"}> : () -> ()
    %cst_52 = arith.constant dense<0.000000e+00> : vector<4x16x8xf32>
    %105 = tpu.matmul %99, %104, %cst_52 {dimension_numbers = #tpu.dot_dimension_numbers<[2], [1], [1], [2], [0, 0, 0, 1, 1, 2], [0], [0]>} : vector<4x16x32xbf16>, vector<4x32x8xbf16>, vector<4x16x8xf32> -> vector<4x16x8xf32>
    "tpu.trace_stop"() : () -> ()
    %c0_53 = arith.constant 0 : index
    %c0_54 = arith.constant 0 : index
    %c0_55 = arith.constant 0 : index
    %106 = vector.load %arg16[%c0_53, %c0_54, %c0_55] : memref<4x16x8xbf16, #tpu.memory_space<vmem>>, vector<4x16x8xbf16>
    "tpu.trace_start"() <{level = 10 : i32, message = "hmd,hdk->hmk"}> : () -> ()
    %cst_56 = arith.constant dense<0.000000e+00> : vector<4x8x8xf32>
    %107 = tpu.matmul %103, %106, %cst_56 {dimension_numbers = #tpu.dot_dimension_numbers<[2], [1], [1], [2], [0, 0, 0, 1, 1, 2], [0], [0]>} : vector<4x8x16xbf16>, vector<4x16x8xbf16>, vector<4x8x8xf32> -> vector<4x8x8xf32>
    "tpu.trace_stop"() : () -> ()
    %c0_57 = arith.constant 0 : index
    %c0_58 = arith.constant 0 : index
    %c0_59 = arith.constant 0 : index
    %108 = vector.load %arg17[%c0_57, %c0_58, %c0_59] : memref<4x16x8xbf16, #tpu.memory_space<vmem>>, vector<4x16x8xbf16>
    "tpu.trace_start"() <{level = 10 : i32, message = "hmd,hdk->hmk"}> : () -> ()
    %cst_60 = arith.constant dense<0.000000e+00> : vector<4x8x8xf32>
    %109 = tpu.matmul %103, %108, %cst_60 {dimension_numbers = #tpu.dot_dimension_numbers<[2], [1], [1], [2], [0, 0, 0, 1, 1, 2], [0], [0]>} : vector<4x8x16xbf16>, vector<4x16x8xbf16>, vector<4x8x8xf32> -> vector<4x8x8xf32>
    "tpu.trace_stop"() : () -> ()
    %110 = arith.truncf %105 : vector<4x16x8xf32> to vector<4x16x8xbf16>
    %111 = arith.truncf %107 : vector<4x8x8xf32> to vector<4x8x8xbf16>
    "tpu.trace_start"() <{level = 10 : i32, message = "hnk,hmk->hnm"}> : () -> ()
    %cst_61 = arith.constant dense<0.000000e+00> : vector<4x16x8xf32>
    %112 = tpu.matmul %110, %111, %cst_61 {dimension_numbers = #tpu.dot_dimension_numbers<[2], [2], [1], [1], [0, 0, 0, 1, 1, 1], [0], [0]>} : vector<4x16x8xbf16>, vector<4x8x8xbf16>, vector<4x16x8xf32> -> vector<4x16x8xf32>
    "tpu.trace_stop"() : () -> ()
    %cst_62 = arith.constant 0.353553385 : f32
    %113 = vector.broadcast %cst_62 : f32 to vector<4x16x8xf32>
    %114 = arith.mulf %112, %113 : vector<4x16x8xf32>
    %cst_63 = arith.constant -3.40282347E+38 : f32
    %115 = vector.shape_cast %95 : vector<1x8xi1> to vector<1x1x8xi1>
    %116 = vector.broadcast %115 : vector<1x1x8xi1> to vector<4x16x8xi1>
    %117 = vector.broadcast %cst_63 : f32 to vector<4x16x8xf32>
    %118 = arith.select %116, %114, %117 : vector<4x16x8xi1>, vector<4x16x8xf32>
    %cst_64 = arith.constant dense<0xFF800000> : vector<4x16xf32>
    %119 = vector.multi_reduction <maximumf>, %118, %cst_64 [2] : vector<4x16x8xf32> to vector<4x16xf32>
    %120 = vector.shape_cast %119 : vector<4x16xf32> to vector<4x16x1xf32>
    %121 = vector.broadcast %120 : vector<4x16x1xf32> to vector<4x16x8xf32>
    %122 = arith.subf %118, %121 : vector<4x16x8xf32>
    %123 = math.exp %122 : vector<4x16x8xf32>
    %cst_65 = arith.constant dense<0.000000e+00> : vector<4x16xf32>
    %124 = vector.multi_reduction <add>, %123, %cst_65 [2] : vector<4x16x8xf32> to vector<4x16xf32>
    %125 = vector.shape_cast %124 : vector<4x16xf32> to vector<4x16x1xf32>
    %126 = tpu.reciprocal %125 {approx = true} : vector<4x16x1xf32> -> vector<4x16x1xf32>
    %127 = vector.broadcast %126 : vector<4x16x1xf32> to vector<4x16x8xf32>
    %128 = arith.mulf %123, %127 : vector<4x16x8xf32>
    %129 = arith.truncf %128 : vector<4x16x8xf32> to vector<4x16x8xbf16>
    %130 = arith.truncf %109 : vector<4x8x8xf32> to vector<4x8x8xbf16>
    "tpu.trace_start"() <{level = 10 : i32, message = "hnm,hmk->hnk"}> : () -> ()
    %cst_66 = arith.constant dense<0.000000e+00> : vector<4x16x8xf32>
    %131 = tpu.matmul %129, %130, %cst_66 {dimension_numbers = #tpu.dot_dimension_numbers<[2], [1], [1], [2], [0, 0, 0, 1, 1, 2], [0], [0]>} : vector<4x16x8xbf16>, vector<4x8x8xbf16>, vector<4x16x8xf32> -> vector<4x16x8xf32>
    "tpu.trace_stop"() : () -> ()
    %132 = arith.truncf %131 : vector<4x16x8xf32> to vector<4x16x8xbf16>
    %c0_67 = arith.constant 0 : index
    %c0_68 = arith.constant 0 : index
    %c0_69 = arith.constant 0 : index
    %133 = vector.load %arg18[%c0_67, %c0_68, %c0_69] : memref<4x8x32xbf16, #tpu.memory_space<vmem>>, vector<4x8x32xbf16>
    "tpu.trace_start"() <{level = 10 : i32, message = "hnk,hkd->hnd"}> : () -> ()
    %cst_70 = arith.constant dense<0.000000e+00> : vector<4x16x32xf32>
    %134 = tpu.matmul %132, %133, %cst_70 {dimension_numbers = #tpu.dot_dimension_numbers<[2], [1], [1], [2], [0, 0, 0, 1, 1, 2], [0], [0]>} : vector<4x16x8xbf16>, vector<4x8x32xbf16>, vector<4x16x32xf32> -> vector<4x16x32xf32>
    "tpu.trace_stop"() : () -> ()
    %cst_71 = arith.constant dense<0.000000e+00> : vector<16x32xf32>
    %135 = vector.multi_reduction <add>, %134, %cst_71 [0] : vector<4x16x32xf32> to vector<16x32xf32>
    %c0_72 = arith.constant 0 : index
    %c0_73 = arith.constant 0 : index
    %136 = vector.load %arg19[%c0_72, %c0_73] : memref<1x32xf32, #tpu.memory_space<vmem>>, vector<1x32xf32>
    %137 = vector.broadcast %136 : vector<1x32xf32> to vector<16x32xf32>
    %138 = arith.addf %135, %137 : vector<16x32xf32>
    %139 = arith.addf %65, %138 : vector<16x32xf32>
    %cst_74 = arith.constant dense<0.000000e+00> : vector<16xf32>
    %140 = vector.multi_reduction <add>, %139, %cst_74 [1] : vector<16x32xf32> to vector<16xf32>
    %141 = vector.shape_cast %140 : vector<16xf32> to vector<16x1xf32>
    %cst_75 = arith.constant 3.200000e+01 : f32
    %142 = vector.broadcast %cst_75 : f32 to vector<16x1xf32>
    %143 = arith.divf %141, %142 : vector<16x1xf32>
    %144 = vector.broadcast %143 : vector<16x1xf32> to vector<16x32xf32>
    %145 = arith.subf %139, %144 : vector<16x32xf32>
    %146 = arith.mulf %145, %145 : vector<16x32xf32>
    %cst_76 = arith.constant dense<0.000000e+00> : vector<16xf32>
    %147 = vector.multi_reduction <add>, %146, %cst_76 [1] : vector<16x32xf32> to vector<16xf32>
    %148 = vector.shape_cast %147 : vector<16xf32> to vector<16x1xf32>
    %cst_77 = arith.constant 3.200000e+01 : f32
    %149 = vector.broadcast %cst_77 : f32 to vector<16x1xf32>
    %150 = arith.divf %148, %149 : vector<16x1xf32>
    %151 = vector.broadcast %143 : vector<16x1xf32> to vector<16x32xf32>
    %152 = arith.subf %139, %151 : vector<16x32xf32>
    %cst_78 = arith.constant 9.99999974E-6 : f32
    %153 = vector.broadcast %cst_78 : f32 to vector<16x1xf32>
    %154 = arith.addf %150, %153 : vector<16x1xf32>
    %155 = math.rsqrt %154 : vector<16x1xf32>
    %156 = vector.broadcast %155 : vector<16x1xf32> to vector<16x32xf32>
    %157 = arith.mulf %152, %156 : vector<16x32xf32>
    %c0_79 = arith.constant 0 : index
    %c0_80 = arith.constant 0 : index
    %158 = vector.load %arg8[%c0_79, %c0_80] : memref<1x32xf32, #tpu.memory_space<vmem>>, vector<1x32xf32>
    %159 = vector.broadcast %158 : vector<1x32xf32> to vector<16x32xf32>
    %160 = arith.mulf %157, %159 : vector<16x32xf32>
    %c0_81 = arith.constant 0 : index
    %c0_82 = arith.constant 0 : index
    %161 = vector.load %arg9[%c0_81, %c0_82] : memref<1x32xf32, #tpu.memory_space<vmem>>, vector<1x32xf32>
    %162 = vector.broadcast %161 : vector<1x32xf32> to vector<16x32xf32>
    %163 = arith.addf %160, %162 : vector<16x32xf32>
    %164 = arith.truncf %163 : vector<16x32xf32> to vector<16x32xbf16>
    %c0_83 = arith.constant 0 : index
    %c0_84 = arith.constant 0 : index
    %165 = vector.load %arg20[%c0_83, %c0_84] : memref<32x128xbf16, #tpu.memory_space<vmem>>, vector<32x128xbf16>
    %cst_85 = arith.constant dense<0.000000e+00> : vector<16x128xf32>
    %166 = tpu.matmul %164, %165, %cst_85 {dimension_numbers = #tpu.dot_dimension_numbers<[1], [0], [0], [1], [0, 0, 1, 1], [], []>} : vector<16x32xbf16>, vector<32x128xbf16>, vector<16x128xf32> -> vector<16x128xf32>
    %c0_86 = arith.constant 0 : index
    %c0_87 = arith.constant 0 : index
    %167 = vector.load %arg21[%c0_86, %c0_87] : memref<1x128xf32, #tpu.memory_space<vmem>>, vector<1x128xf32>
    %168 = vector.broadcast %167 : vector<1x128xf32> to vector<16x128xf32>
    %169 = arith.addf %166, %168 : vector<16x128xf32>
    %c0_88 = arith.constant 0 : index
    %c0_89 = arith.constant 0 : index
    %170 = vector.load %arg22[%c0_88, %c0_89] : memref<32x128xbf16, #tpu.memory_space<vmem>>, vector<32x128xbf16>
    %cst_90 = arith.constant dense<0.000000e+00> : vector<16x128xf32>
    %171 = tpu.matmul %164, %170, %cst_90 {dimension_numbers = #tpu.dot_dimension_numbers<[1], [0], [0], [1], [0, 0, 1, 1], [], []>} : vector<16x32xbf16>, vector<32x128xbf16>, vector<16x128xf32> -> vector<16x128xf32>
    %c0_91 = arith.constant 0 : index
    %c0_92 = arith.constant 0 : index
    %172 = vector.load %arg23[%c0_91, %c0_92] : memref<1x128xf32, #tpu.memory_space<vmem>>, vector<1x128xf32>
    %173 = vector.broadcast %172 : vector<1x128xf32> to vector<16x128xf32>
    %174 = arith.addf %171, %173 : vector<16x128xf32>
    %cst_93 = arith.constant 5.000000e-01 : f32
    %175 = vector.broadcast %cst_93 : f32 to vector<16x128xf32>
    %176 = arith.mulf %175, %174 : vector<16x128xf32>
    %cst_94 = arith.constant 0.707106769 : f32
    %177 = vector.broadcast %cst_94 : f32 to vector<16x128xf32>
    %178 = arith.mulf %174, %177 : vector<16x128xf32>
    %179 = math.erf %178 : vector<16x128xf32>
    %cst_95 = arith.constant 1.000000e+00 : f32
    %180 = vector.broadcast %cst_95 : f32 to vector<16x128xf32>
    %181 = arith.addf %180, %179 : vector<16x128xf32>
    %182 = arith.mulf %176, %181 : vector<16x128xf32>
    %183 = arith.mulf %169, %182 : vector<16x128xf32>
    %184 = arith.truncf %183 : vector<16x128xf32> to vector<16x128xbf16>
    %c0_96 = arith.constant 0 : index
    %c0_97 = arith.constant 0 : index
    %185 = vector.load %arg24[%c0_96, %c0_97] : memref<128x32xbf16, #tpu.memory_space<vmem>>, vector<128x32xbf16>
    %cst_98 = arith.constant dense<0.000000e+00> : vector<16x32xf32>
    %186 = tpu.matmul %184, %185, %cst_98 {dimension_numbers = #tpu.dot_dimension_numbers<[1], [0], [0], [1], [0, 0, 1, 1], [], []>} : vector<16x128xbf16>, vector<128x32xbf16>, vector<16x32xf32> -> vector<16x32xf32>
    %c0_99 = arith.constant 0 : index
    %c0_100 = arith.constant 0 : index
    %187 = vector.load %arg25[%c0_99, %c0_100] : memref<1x32xf32, #tpu.memory_space<vmem>>, vector<1x32xf32>
    %188 = vector.broadcast %187 : vector<1x32xf32> to vector<16x32xf32>
    %189 = arith.addf %186, %188 : vector<16x32xf32>
    %190 = arith.addf %139, %189 : vector<16x32xf32>
    %c0_101 = arith.constant 0 : index
    %c0_102 = arith.constant 0 : index
    %c0_103 = arith.constant 0 : index
    %191 = vector.load %arg26[%c0_101, %c0_102, %c0_103] : memref<1x16x32xf32, #tpu.memory_space<vmem>>, vector<1x16x32xf32>
    %192 = vector.shape_cast %191 : vector<1x16x32xf32> to vector<16x32xf32>
    %193 = vector.shape_cast %190 : vector<16x32xf32> to vector<1x16x32xf32>
    tpu.vector_store %arg26[%c0_101, %c0_102, %c0_103], %193 {strides = array<i32>} : memref<1x16x32xf32, #tpu.memory_space<vmem>>, vector<1x16x32xf32>,
    return
  }
  func.func @transform_0(%arg0: i32) -> (i32, i32, i32) {
    %c0_i32 = arith.constant 0 : i32
    %c0_i32_0 = arith.constant 0 : i32
    %c0_i32_1 = arith.constant 0 : i32
    return %arg0, %c0_i32, %c0_i32_0 : i32, i32, i32
  }
  func.func @transform_1(%arg0: i32) -> (i32, i32, i32) {
    %c0_i32 = arith.constant 0 : i32
    %c0_i32_0 = arith.constant 0 : i32
    %c0_i32_1 = arith.constant 0 : i32
    return %arg0, %c0_i32, %c0_i32_0 : i32, i32, i32
  }
  func.func @transform_2(%arg0: i32) -> (i32, i32, i32) {
    %c0_i32 = arith.constant 0 : i32
    %c0_i32_0 = arith.constant 0 : i32
    %c0_i32_1 = arith.constant 0 : i32
    return %arg0, %c0_i32, %c0_i32_0 : i32, i32, i32
  }
  func.func @transform_3(%arg0: i32) -> (i32, i32) {
    %c0_i32 = arith.constant 0 : i32
    %c0_i32_0 = arith.constant 0 : i32
    %c0_i32_1 = arith.constant 0 : i32
    return %c0_i32, %c0_i32_0 : i32, i32
  }
  func.func @transform_4(%arg0: i32) -> (i32, i32) {
    %c0_i32 = arith.constant 0 : i32
    %c0_i32_0 = arith.constant 0 : i32
    %c0_i32_1 = arith.constant 0 : i32
    return %c0_i32, %c0_i32_0 : i32, i32
  }
  func.func @transform_5(%arg0: i32) -> (i32, i32) {
    %c0_i32 = arith.constant 0 : i32
    %c0_i32_0 = arith.constant 0 : i32
    %c0_i32_1 = arith.constant 0 : i32
    return %c0_i32, %c0_i32_0 : i32, i32
  }
  func.func @transform_6(%arg0: i32) -> (i32, i32) {
    %c0_i32 = arith.constant 0 : i32
    %c0_i32_0 = arith.constant 0 : i32
    %c0_i32_1 = arith.constant 0 : i32
    return %c0_i32, %c0_i32_0 : i32, i32
  }
  func.func @transform_7(%arg0: i32) -> (i32, i32) {
    %c0_i32 = arith.constant 0 : i32
    %c0_i32_0 = arith.constant 0 : i32
    %c0_i32_1 = arith.constant 0 : i32
    return %c0_i32, %c0_i32_0 : i32, i32
  }
  func.func @transform_8(%arg0: i32) -> (i32, i32) {
    %c0_i32 = arith.constant 0 : i32
    %c0_i32_0 = arith.constant 0 : i32
    %c0_i32_1 = arith.constant 0 : i32
    return %c0_i32, %c0_i32_0 : i32, i32
  }
  func.func @transform_9(%arg0: i32) -> (i32, i32, i32) {
    %c0_i32 = arith.constant 0 : i32
    %c0_i32_0 = arith.constant 0 : i32
    %c0_i32_1 = arith.constant 0 : i32
    %c0_i32_2 = arith.constant 0 : i32
    return %c0_i32, %c0_i32_0, %c0_i32_1 : i32, i32, i32
  }
  func.func @transform_10(%arg0: i32) -> (i32, i32, i32) {
    %c0_i32 = arith.constant 0 : i32
    %c0_i32_0 = arith.constant 0 : i32
    %c0_i32_1 = arith.constant 0 : i32
    %c0_i32_2 = arith.constant 0 : i32
    return %c0_i32, %c0_i32_0, %c0_i32_1 : i32, i32, i32
  }
  func.func @transform_11(%arg0: i32) -> (i32, i32, i32) {
    %c0_i32 = arith.constant 0 : i32
    %c0_i32_0 = arith.constant 0 : i32
    %c0_i32_1 = arith.constant 0 : i32
    %c0_i32_2 = arith.constant 0 : i32
    return %c0_i32, %c0_i32_0, %c0_i32_1 : i32, i32, i32
  }
  func.func @transform_12(%arg0: i32) -> (i32, i32, i32) {
    %c0_i32 = arith.constant 0 : i32
    %c0_i32_0 = arith.constant 0 : i32
    %c0_i32_1 = arith.constant 0 : i32
    %c0_i32_2 = arith.constant 0 : i32
    return %c0_i32, %c0_i32_0, %c0_i32_1 : i32, i32, i32
  }
  func.func @transform_13(%arg0: i32) -> (i32, i32) {
    %c0_i32 = arith.constant 0 : i32
    %c0_i32_0 = arith.constant 0 : i32
    %c0_i32_1 = arith.constant 0 : i32
    return %c0_i32, %c0_i32_0 : i32, i32
  }
  func.func @transform_14(%arg0: i32) -> (i32, i32, i32) {
    %c0_i32 = arith.constant 0 : i32
    %c0_i32_0 = arith.constant 0 : i32
    %c0_i32_1 = arith.constant 0 : i32
    %c0_i32_2 = arith.constant 0 : i32
    return %c0_i32, %c0_i32_0, %c0_i32_1 : i32, i32, i32
  }
  func.func @transform_15(%arg0: i32) -> (i32, i32, i32) {
    %c0_i32 = arith.constant 0 : i32
    %c0_i32_0 = arith.constant 0 : i32
    %c0_i32_1 = arith.constant 0 : i32
    %c0_i32_2 = arith.constant 0 : i32
    return %c0_i32, %c0_i32_0, %c0_i32_1 : i32, i32, i32
  }
  func.func @transform_16(%arg0: i32) -> (i32, i32, i32) {
    %c0_i32 = arith.constant 0 : i32
    %c0_i32_0 = arith.constant 0 : i32
    %c0_i32_1 = arith.constant 0 : i32
    %c0_i32_2 = arith.constant 0 : i32
    return %c0_i32, %c0_i32_0, %c0_i32_1 : i32, i32, i32
  }
  func.func @transform_17(%arg0: i32) -> (i32, i32, i32) {
    %c0_i32 = arith.constant 0 : i32
    %c0_i32_0 = arith.constant 0 : i32
    %c0_i32_1 = arith.constant 0 : i32
    %c0_i32_2 = arith.constant 0 : i32
    return %c0_i32, %c0_i32_0, %c0_i32_1 : i32, i32, i32
  }
  func.func @transform_18(%arg0: i32) -> (i32, i32) {
    %c0_i32 = arith.constant 0 : i32
    %c0_i32_0 = arith.constant 0 : i32
    %c0_i32_1 = arith.constant 0 : i32
    return %c0_i32, %c0_i32_0 : i32, i32
  }
  func.func @transform_19(%arg0: i32) -> (i32, i32) {
    %c0_i32 = arith.constant 0 : i32
    %c0_i32_0 = arith.constant 0 : i32
    %c0_i32_1 = arith.constant 0 : i32
    return %c0_i32, %c0_i32_0 : i32, i32
  }
  func.func @transform_20(%arg0: i32) -> (i32, i32) {
    %c0_i32 = arith.constant 0 : i32
    %c0_i32_0 = arith.constant 0 : i32
    %c0_i32_1 = arith.constant 0 : i32
    return %c0_i32, %c0_i32_0 : i32, i32
  }
  func.func @transform_21(%arg0: i32) -> (i32, i32) {
    %c0_i32 = arith.constant 0 : i32
    %c0_i32_0 = arith.constant 0 : i32
    %c0_i32_1 = arith.constant 0 : i32
    return %c0_i32, %c0_i32_0 : i32, i32
  }
  func.func @transform_22(%arg0: i32) -> (i32, i32) {
    %c0_i32 = arith.constant 0 : i32
    %c0_i32_0 = arith.constant 0 : i32
    %c0_i32_1 = arith.constant 0 : i32
    return %c0_i32, %c0_i32_0 : i32, i32
  }
  func.func @transform_23(%arg0: i32) -> (i32, i32) {
    %c0_i32 = arith.constant 0 : i32
    %c0_i32_0 = arith.constant 0 : i32
    %c0_i32_1 = arith.constant 0 : i32
    return %c0_i32, %c0_i32_0 : i32, i32
  }
  func.func @transform_24(%arg0: i32) -> (i32, i32) {
    %c0_i32 = arith.constant 0 : i32
    %c0_i32_0 = arith.constant 0 : i32
    %c0_i32_1 = arith.constant 0 : i32
    return %c0_i32, %c0_i32_0 : i32, i32
  }
  func.func @transform_25(%arg0: i32) -> (i32, i32, i32) {
    %c0_i32 = arith.constant 0 : i32
    %c0_i32_0 = arith.constant 0 : i32
    %c0_i32_1 = arith.constant 0 : i32
    return %arg0, %c0_i32, %c0_i32_0 : i32, i32, i32
  }
}

</mosaic_0001>

<llo_original>
// kernel: basic_transformer_block.1
$region0: #{basic_transformer_block.1}
  #allocation0 [shape = 'u32[]', space=smem, size = 0x4, offset = 0x4, fixed_abs, tag = 'smem constant byte address 0x4 - core index']
  #allocation1 [shape = 'u32[144,128]{1,0:T(1,128)}', space=vmem, size = 0x12000, scoped, tag = 'internal scratch']
  %s0 = inlined_call_operand.hbm [shape: f32[2,16,32], index: 0, kind: input, shape index: {}]
  %s1 = inlined_call_operand.hbm [shape: f32[2,8,16], index: 1, kind: input, shape index: {}]
  %s2 = inlined_call_operand.hbm [shape: s32[2,1,8], index: 2, kind: input, shape index: {}]
  %s3 = inlined_call_operand.hbm [shape: f32[1,32], index: 3, kind: input, shape index: {}]
  %s4 = inlined_call_operand.hbm [shape: f32[1,32], index: 4, kind: input, shape index: {}]
  %s5 = inlined_call_operand.hbm [shape: f32[1,32], index: 5, kind: input, shape index: {}]
  %s6 = inlined_call_operand.hbm [shape: f32[1,32], index: 6, kind: input, shape index: {}]
  %s7 = inlined_call_operand.hbm [shape: f32[1,32], index: 7, kind: input, shape index: {}]
  %s8 = inlined_call_operand.hbm [shape: f32[1,32], index: 8, kind: input, shape index: {}]
  %s9 = inlined_call_operand.hbm [shape: bf16[4,32,8], index: 9, kind: input, shape index: {}]
  %s10 = inlined_call_operand.hbm [shape: bf16[4,32,8], index: 10, kind: input, shape index: {}]
  %s11 = inlined_call_operand.hbm [shape: bf16[4,32,8], index: 11, kind: input, shape index: {}]
  %s12 = inlined_call_operand.hbm [shape: bf16[4,8,32], index: 12, kind: input, shape index: {}]
  %s13 = inlined_call_operand.hbm [shape: f32[1,32], index: 13, kind: input, shape index: {}]
  %s14 = inlined_call_operand.hbm [shape: bf16[4,32,8], index: 14, kind: input, shape index: {}]
  %s15 = inlined_call_operand.hbm [shape: bf16[4,16,8], index: 15, kind: input, shape index: {}]
  %s16 = inlined_call_operand.hbm [shape: bf16[4,16,8], index: 16, kind: input, shape index: {}]
  %s17 = inlined_call_operand.hbm [shape: bf16[4,8,32], index: 17, kind: input, shape index: {}]
  %s18 = inlined_call_operand.hbm [shape: f32[1,32], index: 18, kind: input, shape index: {}]
  %s19 = inlined_call_operand.hbm [shape: bf16[32,128], index: 19, kind: input, shape index: {}]
  %s20 = inlined_call_operand.hbm [shape: f32[1,128], index: 20, kind: input, shape index: {}]
  %s21 = inlined_call_operand.hbm [shape: bf16[32,128], index: 21, kind: input, shape index: {}]
  %s22 = inlined_call_operand.hbm [shape: f32[1,128], index: 22, kind: input, shape index: {}]
  %s23 = inlined_call_operand.hbm [shape: bf16[128,32], index: 23, kind: input, shape index: {}]
  %s24 = inlined_call_operand.hbm [shape: f32[1,32], index: 24, kind: input, shape index: {}]
  %s25 = inlined_call_operand.hbm [shape: f32[2,16,32], index: 25, kind: output, shape index: {}]
  %s26 = sld [smem:[#allocation0]]
  $region233: #{basic_transformer_block.1} parent=0
    _
  %s28 = ssub.s32 1, %s26
  %s29 = scalar_select 0, %s28, %s26
  $region1: #{basic_transformer_block.1} parent=0
    #allocation2 [shape = 'u8[16384]{0}', space=vmem, size = 0x4000, scoped, tag = 'input window, operand 0']
    #allocation3 [shape = 's32[2]{0}', space=sflag, size = 0x8, scoped, tag = 'scoped memory for basic_transformer_block.1']
    #allocation4 [shape = 's32[2]{0}', space=sflag, size = 0x8, scoped, tag = 'scoped memory for basic_transformer_block.1']
    #allocation5 [shape = 'u8[8192]{0}', space=vmem, size = 0x2000, scoped, tag = 'input window, operand 1']
    #allocation6 [shape = 's32[2]{0}', space=sflag, size = 0x8, scoped, tag = 'scoped memory for basic_transformer_block.1']
    #allocation7 [shape = 'u8[1024]{0}', space=vmem, size = 0x400, scoped, tag = 'input window, operand 2']
    #allocation8 [shape = 'u8[512]{0}', space=vmem, size = 0x400, scoped, tag = 'input window, operand 3, single buffered']
    #allocation9 [shape = 's32[1]{0}', space=sflag, size = 0x4, scoped, tag = 'scoped memory for basic_transformer_block.1']
    #allocation10 [shape = 'u8[512]{0}', space=vmem, size = 0x400, scoped, tag = 'input window, operand 4, single buffered']
    #allocation11 [shape = 'u8[512]{0}', space=vmem, size = 0x400, scoped, tag = 'input window, operand 5, single buffered']
    #allocation12 [shape = 's32[1]{0}', space=sflag, size = 0x4, scoped, tag = 'scoped memory for basic_transformer_block.1']
    #allocation13 [shape = 'u8[512]{0}', space=vmem, size = 0x400, scoped, tag = 'input window, operand 6, single buffered']
    #allocation14 [shape = 'u8[512]{0}', space=vmem, size = 0x400, scoped, tag = 'input window, operand 7, single buffered']
    #allocation15 [shape = 's32[1]{0}', space=sflag, size = 0x4, scoped, tag = 'scoped memory for basic_transformer_block.1']
    #allocation16 [shape = 'u8[512]{0}', space=vmem, size = 0x400, scoped, tag = 'input window, operand 8, single buffered']
    #allocation17 [shape = 'u8[32768]{0}', space=vmem, size = 0x8000, scoped, tag = 'input window, operand 9, single buffered']
    #allocation18 [shape = 's32[1]{0}', space=sflag, size = 0x4, scoped, tag = 'scoped memory for basic_transformer_block.1']
    #allocation19 [shape = 'u8[32768]{0}', space=vmem, size = 0x8000, scoped, tag = 'input window, operand 10, single buffered']
    #allocation20 [shape = 'u8[32768]{0}', space=vmem, size = 0x8000, scoped, tag = 'input window, operand 11, single buffered']
    #allocation21 [shape = 's32[1]{0}', space=sflag, size = 0x4, scoped, tag = 'scoped memory for basic_transformer_block.1']
    #allocation22 [shape = 'u8[8192]{0}', space=vmem, size = 0x2000, scoped, tag = 'input window, operand 12, single buffered']
    #allocation23 [shape = 'u8[512]{0}', space=vmem, size = 0x400, scoped, tag = 'input window, operand 13, single buffered']
    #allocation24 [shape = 's32[1]{0}', space=sflag, size = 0x4, scoped, tag = 'scoped memory for basic_transformer_block.1']
    #allocation25 [shape = 'u8[32768]{0}', space=vmem, size = 0x8000, scoped, tag = 'input window, operand 14, single buffered']
    #allocation26 [shape = 'u8[16384]{0}', space=vmem, size = 0x4000, scoped, tag = 'input window, operand 15, single buffered']
    #allocation27 [shape = 's32[1]{0}', space=sflag, size = 0x4, scoped, tag = 'scoped memory for basic_transformer_block.1']
    #allocation28 [shape = 'u8[16384]{0}', space=vmem, size = 0x4000, scoped, tag = 'input window, operand 16, single buffered']
    #allocation29 [shape = 'u8[8192]{0}', space=vmem, size = 0x2000, scoped, tag = 'input window, operand 17, single buffered']
    #allocation30 [shape = 's32[1]{0}', space=sflag, size = 0x4, scoped, tag = 'scoped memory for basic_transformer_block.1']
    #allocation31 [shape = 'u8[512]{0}', space=vmem, size = 0x400, scoped, tag = 'input window, operand 18, single buffered']
    #allocation32 [shape = 'u8[8192]{0}', space=vmem, size = 0x2000, scoped, tag = 'input window, operand 19, single buffered']
    #allocation33 [shape = 's32[1]{0}', space=sflag, size = 0x4, scoped, tag = 'scoped memory for basic_transformer_block.1']
    #allocation34 [shape = 'u8[512]{0}', space=vmem, size = 0x400, scoped, tag = 'input window, operand 20, single buffered']
    #allocation35 [shape = 'u8[8192]{0}', space=vmem, size = 0x2000, scoped, tag = 'input window, operand 21, single buffered']
    #allocation36 [shape = 's32[1]{0}', space=sflag, size = 0x4, scoped, tag = 'scoped memory for basic_transformer_block.1']
    #allocation37 [shape = 'u8[512]{0}', space=vmem, size = 0x400, scoped, tag = 'input window, operand 22, single buffered']
    #allocation38 [shape = 'u8[32768]{0}', space=vmem, size = 0x8000, scoped, tag = 'input window, operand 23, single buffered']
    #allocation39 [shape = 's32[1]{0}', space=sflag, size = 0x4, scoped, tag = 'scoped memory for basic_transformer_block.1']
    #allocation40 [shape = 'u8[512]{0}', space=vmem, size = 0x400, scoped, tag = 'input window, operand 24, single buffered']
    #allocation41 [shape = 'u8[16384]{0}', space=vmem, size = 0x4000, scoped, tag = 'output window, operand 0']
    %30 = vsyncpa [#allocation3], 0
    %s31 = scalar_lea.sflag [#allocation3], 1
    %32 = vsyncpa %s31, 0
    %33 = vsyncpa [#allocation6], 0
    %s34 = scalar_lea.sflag [#allocation6], 1
    %35 = vsyncpa %s34, 0
    %36 = vsyncpa [#allocation9], 0
    %37 = vsyncpa [#allocation12], 0
    %38 = vsyncpa [#allocation15], 0
    %39 = vsyncpa [#allocation18], 0
    %40 = vsyncpa [#allocation21], 0
    %41 = vsyncpa [#allocation24], 0
    %42 = vsyncpa [#allocation27], 0
    %43 = vsyncpa [#allocation30], 0
    %44 = vsyncpa [#allocation33], 0
    %45 = vsyncpa [#allocation36], 0
    %46 = vsyncpa [#allocation39], 0
    %47 = vsyncpa [#allocation4], 0
    %s48 = scalar_lea.sflag [#allocation4], 1
    %49 = vsyncpa %s48, 0
    loop: start=0, step=1, limit=4
    $region2: #{basic_transformer_block.1} parent=1 // loop_pre_header
      _
    $region3: #{basic_transformer_block.1} parent=1 // loop_header
      %s51 = sphi 0, %s55
      %p52 = scmp.ge.s32.totalorder %s51, 4
      %s61 = sphi 0, %s63
      %s64 = sphi 0, %s61
      %s65 = sphi 0, %s64
      %s81 = sphi 0, %s65
      %s87 = sphi 0, %s89
      %s90 = sphi 0, %s87
      %s91 = sphi 0, %s90
      %s107 = sphi 0, %s91
      %s113 = sphi 0, %s115
      %s116 = sphi 0, %s113
      %s117 = sphi 0, %s116
      %s133 = sphi 0, %s117
      %s137 = sphi 0, %s137
      %s139 = sphi 0, %s137
      %s140 = sphi 0, %s139
      %s154 = sphi 0, %s140
      %s158 = sphi 0, %s158
      %s160 = sphi 0, %s158
      %s161 = sphi 0, %s160
      %s175 = sphi 0, %s161
      %s179 = sphi 0, %s179
      %s181 = sphi 0, %s179
      %s182 = sphi 0, %s181
      %s196 = sphi 0, %s182
      %s200 = sphi 0, %s200
      %s202 = sphi 0, %s200
      %s203 = sphi 0, %s202
      %s217 = sphi 0, %s203
      %s221 = sphi 0, %s221
      %s223 = sphi 0, %s221
      %s224 = sphi 0, %s223
      %s238 = sphi 0, %s224
      %s242 = sphi 0, %s242
      %s244 = sphi 0, %s242
      %s245 = sphi 0, %s244
      %s259 = sphi 0, %s245
      %s263 = sphi 0, %s263
      %s265 = sphi 0, %s263
      %s266 = sphi 0, %s265
      %s280 = sphi 0, %s266
      %s284 = sphi 0, %s284
      %s286 = sphi 0, %s284
      %s287 = sphi 0, %s286
      %s301 = sphi 0, %s287
      %s305 = sphi 0, %s305
      %s307 = sphi 0, %s305
      %s308 = sphi 0, %s307
      %s322 = sphi 0, %s308
      %s326 = sphi 0, %s326
      %s328 = sphi 0, %s326
      %s329 = sphi 0, %s328
      %s343 = sphi 0, %s329
      %s347 = sphi 0, %s347
      %s349 = sphi 0, %s347
      %s350 = sphi 0, %s349
      %s364 = sphi 0, %s350
      %s368 = sphi 0, %s368
      %s370 = sphi 0, %s368
      %s371 = sphi 0, %s370
      %s385 = sphi 0, %s371
      %s389 = sphi 0, %s389
      %s391 = sphi 0, %s389
      %s392 = sphi 0, %s391
      %s406 = sphi 0, %s392
      %s410 = sphi 0, %s410
      %s412 = sphi 0, %s410
      %s413 = sphi 0, %s412
      %s427 = sphi 0, %s413
      %s431 = sphi 0, %s431
      %s433 = sphi 0, %s431
      %s434 = sphi 0, %s433
      %s448 = sphi 0, %s434
      %s452 = sphi 0, %s452
      %s454 = sphi 0, %s452
      %s455 = sphi 0, %s454
      %s469 = sphi 0, %s455
      %s473 = sphi 0, %s473
      %s475 = sphi 0, %s473
      %s476 = sphi 0, %s475
      %s490 = sphi 0, %s476
      %s494 = sphi 0, %s494
      %s496 = sphi 0, %s494
      %s497 = sphi 0, %s496
      %s511 = sphi 0, %s497
      %s515 = sphi 0, %s515
      %s517 = sphi 0, %s515
      %s518 = sphi 0, %s517
      %s532 = sphi 0, %s518
      %s536 = sphi 0, %s536
      %s538 = sphi 0, %s536
      %s539 = sphi 0, %s538
      %s553 = sphi 0, %s539
      %s557 = sphi 0, %s557
      %s559 = sphi 0, %s557
      %s560 = sphi 0, %s559
      %s574 = sphi 0, %s560
      %s578 = sphi 0, %s578
      %s580 = sphi 0, %s578
      %s581 = sphi 0, %s580
      %s595 = sphi 0, %s581
      %s601 = sphi 0, %s603
      %s604 = sphi 0, %s601
      %s605 = sphi 0, %s604
      %s621 = sphi 0, %s605
    $region4: #{basic_transformer_block.1} parent=1 // loop_header_branch
      %54 = sbr.rel (%p52) target = $region8
    $region5: #{basic_transformer_block.1} parent=1 // loop_body
      %s56 = ssub.s32 %s51, 1
      %s57 = ssub.s32 %s51, 2
      %s58 = sadd.s32 %s51, 1
      %s59 = ssub.s32 %s51, %s58
      %p60 = scmp.eq.s32.totalorder %s59, 0
      %s62 = sadd.s32 %s61, 1
      %s63 = scalar_select %p60, %s61, %s62
      %p66 = pneg %p60
      %p67 = scmp.eq.s32.totalorder %s51, 1
      %p68 = por %p66, %p67
      %p69 = scmp.ne.s32.totalorder %s61, %s64
      %p70 = scmp.eq.s32.totalorder %s51, 0
      %p71 = por %p69, %p70
      %p72 = scmp.ne.s32.totalorder %s61, %s64
      %p73 = scmp.eq.s32.totalorder %s56, 1
      %p74 = por %p72, %p73
      %p75 = scmp.ne.s32.totalorder %s64, %s65
      %p76 = scmp.eq.s32.totalorder %s56, 0
      %p77 = por %p75, %p76
      %p78 = scmp.ne.s32.totalorder %s64, %s65
      %p79 = scmp.eq.s32.totalorder %s57, 1
      %p80 = por %p78, %p79
      %p82 = scmp.ne.s32.totalorder %s65, %s81
      %p83 = scmp.eq.s32.totalorder %s57, 0
      %p84 = por %p82, %p83
      %s85 = ssub.s32 %s51, %s58
      %p86 = scmp.eq.s32.totalorder %s85, 0
      %s88 = sadd.s32 %s87, 1
      %s89 = scalar_select %p86, %s87, %s88
      %p92 = pneg %p86
      %p93 = scmp.eq.s32.totalorder %s51, 1
      %p94 = por %p92, %p93
      %p95 = scmp.ne.s32.totalorder %s87, %s90
      %p96 = scmp.eq.s32.totalorder %s51, 0
      %p97 = por %p95, %p96
      %p98 = scmp.ne.s32.totalorder %s87, %s90
      %p99 = scmp.eq.s32.totalorder %s56, 1
      %p100 = por %p98, %p99
      %p101 = scmp.ne.s32.totalorder %s90, %s91
      %p102 = scmp.eq.s32.totalorder %s56, 0
      %p103 = por %p101, %p102
      %p104 = scmp.ne.s32.totalorder %s90, %s91
      %p105 = scmp.eq.s32.totalorder %s57, 1
      %p106 = por %p104, %p105
      %p108 = scmp.ne.s32.totalorder %s91, %s107
      %p109 = scmp.eq.s32.totalorder %s57, 0
      %p110 = por %p108, %p109
      %s111 = ssub.s32 %s51, %s58
      %p112 = scmp.eq.s32.totalorder %s111, 0
      %s114 = sadd.s32 %s113, 1
      %s115 = scalar_select %p112, %s113, %s114
      %p118 = pneg %p112
      %p119 = scmp.eq.s32.totalorder %s51, 1
      %p120 = por %p118, %p119
      %p121 = scmp.ne.s32.totalorder %s113, %s116
      %p122 = scmp.eq.s32.totalorder %s51, 0
      %p123 = por %p121, %p122
      %p124 = scmp.ne.s32.totalorder %s113, %s116
      %p125 = scmp.eq.s32.totalorder %s56, 1
      %p126 = por %p124, %p125
      %p127 = scmp.ne.s32.totalorder %s116, %s117
      %p128 = scmp.eq.s32.totalorder %s56, 0
      %p129 = por %p127, %p128
      %p130 = scmp.ne.s32.totalorder %s116, %s117
      %p131 = scmp.eq.s32.totalorder %s57, 1
      %p132 = por %p130, %p131
      %p134 = scmp.ne.s32.totalorder %s117, %s133
      %p135 = scmp.eq.s32.totalorder %s57, 0
      %p136 = por %p134, %p135
      %s138 = sadd.s32 %s137, 1
      %p141 = scmp.eq.s32.totalorder %s51, 1
      %p142 = scmp.ne.s32.totalorder %s137, %s139
      %p143 = scmp.eq.s32.totalorder %s51, 0
      %p144 = por %p142, %p143
      %p145 = scmp.ne.s32.totalorder %s137, %s139
      %p146 = scmp.eq.s32.totalorder %s56, 1
      %p147 = por %p145, %p146
      %p148 = scmp.ne.s32.totalorder %s139, %s140
      %p149 = scmp.eq.s32.totalorder %s56, 0
      %p150 = por %p148, %p149
      %p151 = scmp.ne.s32.totalorder %s139, %s140
      %p152 = scmp.eq.s32.totalorder %s57, 1
      %p153 = por %p151, %p152
      %p155 = scmp.ne.s32.totalorder %s140, %s154
      %p156 = scmp.eq.s32.totalorder %s57, 0
      %p157 = por %p155, %p156
      %s159 = sadd.s32 %s158, 1
      %p162 = scmp.eq.s32.totalorder %s51, 1
      %p163 = scmp.ne.s32.totalorder %s158, %s160
      %p164 = scmp.eq.s32.totalorder %s51, 0
      %p165 = por %p163, %p164
      %p166 = scmp.ne.s32.totalorder %s158, %s160
      %p167 = scmp.eq.s32.totalorder %s56, 1
      %p168 = por %p166, %p167
      %p169 = scmp.ne.s32.totalorder %s160, %s161
      %p170 = scmp.eq.s32.totalorder %s56, 0
      %p171 = por %p169, %p170
      %p172 = scmp.ne.s32.totalorder %s160, %s161
      %p173 = scmp.eq.s32.totalorder %s57, 1
      %p174 = por %p172, %p173
      %p176 = scmp.ne.s32.totalorder %s161, %s175
      %p177 = scmp.eq.s32.totalorder %s57, 0
      %p178 = por %p176, %p177
      %s180 = sadd.s32 %s179, 1
      %p183 = scmp.eq.s32.totalorder %s51, 1
      %p184 = scmp.ne.s32.totalorder %s179, %s181
      %p185 = scmp.eq.s32.totalorder %s51, 0
      %p186 = por %p184, %p185
      %p187 = scmp.ne.s32.totalorder %s179, %s181
      %p188 = scmp.eq.s32.totalorder %s56, 1
      %p189 = por %p187, %p188
      %p190 = scmp.ne.s32.totalorder %s181, %s182
      %p191 = scmp.eq.s32.totalorder %s56, 0
      %p192 = por %p190, %p191
      %p193 = scmp.ne.s32.totalorder %s181, %s182
      %p194 = scmp.eq.s32.totalorder %s57, 1
      %p195 = por %p193, %p194
      %p197 = scmp.ne.s32.totalorder %s182, %s196
      %p198 = scmp.eq.s32.totalorder %s57, 0
      %p199 = por %p197, %p198
      %s201 = sadd.s32 %s200, 1
      %p204 = scmp.eq.s32.totalorder %s51, 1
      %p205 = scmp.ne.s32.totalorder %s200, %s202
      %p206 = scmp.eq.s32.totalorder %s51, 0
      %p207 = por %p205, %p206
      %p208 = scmp.ne.s32.totalorder %s200, %s202
      %p209 = scmp.eq.s32.totalorder %s56, 1
      %p210 = por %p208, %p209
      %p211 = scmp.ne.s32.totalorder %s202, %s203
      %p212 = scmp.eq.s32.totalorder %s56, 0
      %p213 = por %p211, %p212
      %p214 = scmp.ne.s32.totalorder %s202, %s203
      %p215 = scmp.eq.s32.totalorder %s57, 1
      %p216 = por %p214, %p215
      %p218 = scmp.ne.s32.totalorder %s203, %s217
      %p219 = scmp.eq.s32.totalorder %s57, 0
      %p220 = por %p218, %p219
      %s222 = sadd.s32 %s221, 1
      %p225 = scmp.eq.s32.totalorder %s51, 1
      %p226 = scmp.ne.s32.totalorder %s221, %s223
      %p227 = scmp.eq.s32.totalorder %s51, 0
      %p228 = por %p226, %p227
      %p229 = scmp.ne.s32.totalorder %s221, %s223
      %p230 = scmp.eq.s32.totalorder %s56, 1
      %p231 = por %p229, %p230
      %p232 = scmp.ne.s32.totalorder %s223, %s224
      %p233 = scmp.eq.s32.totalorder %s56, 0
      %p234 = por %p232, %p233
      %p235 = scmp.ne.s32.totalorder %s223, %s224
      %p236 = scmp.eq.s32.totalorder %s57, 1
      %p237 = por %p235, %p236
      %p239 = scmp.ne.s32.totalorder %s224, %s238
      %p240 = scmp.eq.s32.totalorder %s57, 0
      %p241 = por %p239, %p240
      %s243 = sadd.s32 %s242, 1
      %p246 = scmp.eq.s32.totalorder %s51, 1
      %p247 = scmp.ne.s32.totalorder %s242, %s244
      %p248 = scmp.eq.s32.totalorder %s51, 0
      %p249 = por %p247, %p248
      %p250 = scmp.ne.s32.totalorder %s242, %s244
      %p251 = scmp.eq.s32.totalorder %s56, 1
      %p252 = por %p250, %p251
      %p253 = scmp.ne.s32.totalorder %s244, %s245
      %p254 = scmp.eq.s32.totalorder %s56, 0
      %p255 = por %p253, %p254
      %p256 = scmp.ne.s32.totalorder %s244, %s245
      %p257 = scmp.eq.s32.totalorder %s57, 1
      %p258 = por %p256, %p257
      %p260 = scmp.ne.s32.totalorder %s245, %s259
      %p261 = scmp.eq.s32.totalorder %s57, 0
      %p262 = por %p260, %p261
      %s264 = sadd.s32 %s263, 1
      %p267 = scmp.eq.s32.totalorder %s51, 1
      %p268 = scmp.ne.s32.totalorder %s263, %s265
      %p269 = scmp.eq.s32.totalorder %s51, 0
      %p270 = por %p268, %p269
      %p271 = scmp.ne.s32.totalorder %s263, %s265
      %p272 = scmp.eq.s32.totalorder %s56, 1
      %p273 = por %p271, %p272
      %p274 = scmp.ne.s32.totalorder %s265, %s266
      %p275 = scmp.eq.s32.totalorder %s56, 0
      %p276 = por %p274, %p275
      %p277 = scmp.ne.s32.totalorder %s265, %s266
      %p278 = scmp.eq.s32.totalorder %s57, 1
      %p279 = por %p277, %p278
      %p281 = scmp.ne.s32.totalorder %s266, %s280
      %p282 = scmp.eq.s32.totalorder %s57, 0
      %p283 = por %p281, %p282
      %s285 = sadd.s32 %s284, 1
      %p288 = scmp.eq.s32.totalorder %s51, 1
      %p289 = scmp.ne.s32.totalorder %s284, %s286
      %p290 = scmp.eq.s32.totalorder %s51, 0
      %p291 = por %p289, %p290
      %p292 = scmp.ne.s32.totalorder %s284, %s286
      %p293 = scmp.eq.s32.totalorder %s56, 1
      %p294 = por %p292, %p293
      %p295 = scmp.ne.s32.totalorder %s286, %s287
      %p296 = scmp.eq.s32.totalorder %s56, 0
      %p297 = por %p295, %p296
      %p298 = scmp.ne.s32.totalorder %s286, %s287
      %p299 = scmp.eq.s32.totalorder %s57, 1
      %p300 = por %p298, %p299
      %p302 = scmp.ne.s32.totalorder %s287, %s301
      %p303 = scmp.eq.s32.totalorder %s57, 0
      %p304 = por %p302, %p303
      %s306 = sadd.s32 %s305, 1
      %p309 = scmp.eq.s32.totalorder %s51, 1
      %p310 = scmp.ne.s32.totalorder %s305, %s307
      %p311 = scmp.eq.s32.totalorder %s51, 0
      %p312 = por %p310, %p311
      %p313 = scmp.ne.s32.totalorder %s305, %s307
      %p314 = scmp.eq.s32.totalorder %s56, 1
      %p315 = por %p313, %p314
      %p316 = scmp.ne.s32.totalorder %s307, %s308
      %p317 = scmp.eq.s32.totalorder %s56, 0
      %p318 = por %p316, %p317
      %p319 = scmp.ne.s32.totalorder %s307, %s308
      %p320 = scmp.eq.s32.totalorder %s57, 1
      %p321 = por %p319, %p320
      %p323 = scmp.ne.s32.totalorder %s308, %s322
      %p324 = scmp.eq.s32.totalorder %s57, 0
      %p325 = por %p323, %p324
      %s327 = sadd.s32 %s326, 1
      %p330 = scmp.eq.s32.totalorder %s51, 1
      %p331 = scmp.ne.s32.totalorder %s326, %s328
      %p332 = scmp.eq.s32.totalorder %s51, 0
      %p333 = por %p331, %p332
      %p334 = scmp.ne.s32.totalorder %s326, %s328
      %p335 = scmp.eq.s32.totalorder %s56, 1
      %p336 = por %p334, %p335
      %p337 = scmp.ne.s32.totalorder %s328, %s329
      %p338 = scmp.eq.s32.totalorder %s56, 0
      %p339 = por %p337, %p338
      %p340 = scmp.ne.s32.totalorder %s328, %s329
      %p341 = scmp.eq.s32.totalorder %s57, 1
      %p342 = por %p340, %p341
      %p344 = scmp.ne.s32.totalorder %s329, %s343
      %p345 = scmp.eq.s32.totalorder %s57, 0
      %p346 = por %p344, %p345
      %s348 = sadd.s32 %s347, 1
      %p351 = scmp.eq.s32.totalorder %s51, 1
      %p352 = scmp.ne.s32.totalorder %s347, %s349
      %p353 = scmp.eq.s32.totalorder %s51, 0
      %p354 = por %p352, %p353
      %p355 = scmp.ne.s32.totalorder %s347, %s349
      %p356 = scmp.eq.s32.totalorder %s56, 1
      %p357 = por %p355, %p356
      %p358 = scmp.ne.s32.totalorder %s349, %s350
      %p359 = scmp.eq.s32.totalorder %s56, 0
      %p360 = por %p358, %p359
      %p361 = scmp.ne.s32.totalorder %s349, %s350
      %p362 = scmp.eq.s32.totalorder %s57, 1
      %p363 = por %p361, %p362
      %p365 = scmp.ne.s32.totalorder %s350, %s364
      %p366 = scmp.eq.s32.totalorder %s57, 0
      %p367 = por %p365, %p366
      %s369 = sadd.s32 %s368, 1
      %p372 = scmp.eq.s32.totalorder %s51, 1
      %p373 = scmp.ne.s32.totalorder %s368, %s370
      %p374 = scmp.eq.s32.totalorder %s51, 0
      %p375 = por %p373, %p374
      %p376 = scmp.ne.s32.totalorder %s368, %s370
      %p377 = scmp.eq.s32.totalorder %s56, 1
      %p378 = por %p376, %p377
      %p379 = scmp.ne.s32.totalorder %s370, %s371
      %p380 = scmp.eq.s32.totalorder %s56, 0
      %p381 = por %p379, %p380
      %p382 = scmp.ne.s32.totalorder %s370, %s371
      %p383 = scmp.eq.s32.totalorder %s57, 1
      %p384 = por %p382, %p383
      %p386 = scmp.ne.s32.totalorder %s371, %s385
      %p387 = scmp.eq.s32.totalorder %s57, 0
      %p388 = por %p386, %p387
      %s390 = sadd.s32 %s389, 1
      %p393 = scmp.eq.s32.totalorder %s51, 1
      %p394 = scmp.ne.s32.totalorder %s389, %s391
      %p395 = scmp.eq.s32.totalorder %s51, 0
      %p396 = por %p394, %p395
      %p397 = scmp.ne.s32.totalorder %s389, %s391
      %p398 = scmp.eq.s32.totalorder %s56, 1
      %p399 = por %p397, %p398
      %p400 = scmp.ne.s32.totalorder %s391, %s392
      %p401 = scmp.eq.s32.totalorder %s56, 0
      %p402 = por %p400, %p401
      %p403 = scmp.ne.s32.totalorder %s391, %s392
      %p404 = scmp.eq.s32.totalorder %s57, 1
      %p405 = por %p403, %p404
      %p407 = scmp.ne.s32.totalorder %s392, %s406
      %p408 = scmp.eq.s32.totalorder %s57, 0
      %p409 = por %p407, %p408
      %s411 = sadd.s32 %s410, 1
      %p414 = scmp.eq.s32.totalorder %s51, 1
      %p415 = scmp.ne.s32.totalorder %s410, %s412
      %p416 = scmp.eq.s32.totalorder %s51, 0
      %p417 = por %p415, %p416
      %p418 = scmp.ne.s32.totalorder %s410, %s412
      %p419 = scmp.eq.s32.totalorder %s56, 1
      %p420 = por %p418, %p419
      %p421 = scmp.ne.s32.totalorder %s412, %s413
      %p422 = scmp.eq.s32.totalorder %s56, 0
      %p423 = por %p421, %p422
      %p424 = scmp.ne.s32.totalorder %s412, %s413
      %p425 = scmp.eq.s32.totalorder %s57, 1
      %p426 = por %p424, %p425
      %p428 = scmp.ne.s32.totalorder %s413, %s427
      %p429 = scmp.eq.s32.totalorder %s57, 0
      %p430 = por %p428, %p429
      %s432 = sadd.s32 %s431, 1
      %p435 = scmp.eq.s32.totalorder %s51, 1
      %p436 = scmp.ne.s32.totalorder %s431, %s433
      %p437 = scmp.eq.s32.totalorder %s51, 0
      %p438 = por %p436, %p437
      %p439 = scmp.ne.s32.totalorder %s431, %s433
      %p440 = scmp.eq.s32.totalorder %s56, 1
      %p441 = por %p439, %p440
      %p442 = scmp.ne.s32.totalorder %s433, %s434
      %p443 = scmp.eq.s32.totalorder %s56, 0
      %p444 = por %p442, %p443
      %p445 = scmp.ne.s32.totalorder %s433, %s434
      %p446 = scmp.eq.s32.totalorder %s57, 1
      %p447 = por %p445, %p446
      %p449 = scmp.ne.s32.totalorder %s434, %s448
      %p450 = scmp.eq.s32.totalorder %s57, 0
      %p451 = por %p449, %p450
      %s453 = sadd.s32 %s452, 1
      %p456 = scmp.eq.s32.totalorder %s51, 1
      %p457 = scmp.ne.s32.totalorder %s452, %s454
      %p458 = scmp.eq.s32.totalorder %s51, 0
      %p459 = por %p457, %p458
      %p460 = scmp.ne.s32.totalorder %s452, %s454
      %p461 = scmp.eq.s32.totalorder %s56, 1
      %p462 = por %p460, %p461
      %p463 = scmp.ne.s32.totalorder %s454, %s455
      %p464 = scmp.eq.s32.totalorder %s56, 0
      %p465 = por %p463, %p464
      %p466 = scmp.ne.s32.totalorder %s454, %s455
      %p467 = scmp.eq.s32.totalorder %s57, 1
      %p468 = por %p466, %p467
      %p470 = scmp.ne.s32.totalorder %s455, %s469
      %p471 = scmp.eq.s32.totalorder %s57, 0
      %p472 = por %p470, %p471
      %s474 = sadd.s32 %s473, 1
      %p477 = scmp.eq.s32.totalorder %s51, 1
      %p478 = scmp.ne.s32.totalorder %s473, %s475
      %p479 = scmp.eq.s32.totalorder %s51, 0
      %p480 = por %p478, %p479
      %p481 = scmp.ne.s32.totalorder %s473, %s475
      %p482 = scmp.eq.s32.totalorder %s56, 1
      %p483 = por %p481, %p482
      %p484 = scmp.ne.s32.totalorder %s475, %s476
      %p485 = scmp.eq.s32.totalorder %s56, 0
      %p486 = por %p484, %p485
      %p487 = scmp.ne.s32.totalorder %s475, %s476
      %p488 = scmp.eq.s32.totalorder %s57, 1
      %p489 = por %p487, %p488
      %p491 = scmp.ne.s32.totalorder %s476, %s490
      %p492 = scmp.eq.s32.totalorder %s57, 0
      %p493 = por %p491, %p492
      %s495 = sadd.s32 %s494, 1
      %p498 = scmp.eq.s32.totalorder %s51, 1
      %p499 = scmp.ne.s32.totalorder %s494, %s496
      %p500 = scmp.eq.s32.totalorder %s51, 0
      %p501 = por %p499, %p500
      %p502 = scmp.ne.s32.totalorder %s494, %s496
      %p503 = scmp.eq.s32.totalorder %s56, 1
      %p504 = por %p502, %p503
      %p505 = scmp.ne.s32.totalorder %s496, %s497
      %p506 = scmp.eq.s32.totalorder %s56, 0
      %p507 = por %p505, %p506
      %p508 = scmp.ne.s32.totalorder %s496, %s497
      %p509 = scmp.eq.s32.totalorder %s57, 1
      %p510 = por %p508, %p509
      %p512 = scmp.ne.s32.totalorder %s497, %s511
      %p513 = scmp.eq.s32.totalorder %s57, 0
      %p514 = por %p512, %p513
      %s516 = sadd.s32 %s515, 1
      %p519 = scmp.eq.s32.totalorder %s51, 1
      %p520 = scmp.ne.s32.totalorder %s515, %s517
      %p521 = scmp.eq.s32.totalorder %s51, 0
      %p522 = por %p520, %p521
      %p523 = scmp.ne.s32.totalorder %s515, %s517
      %p524 = scmp.eq.s32.totalorder %s56, 1
      %p525 = por %p523, %p524
      %p526 = scmp.ne.s32.totalorder %s517, %s518
      %p527 = scmp.eq.s32.totalorder %s56, 0
      %p528 = por %p526, %p527
      %p529 = scmp.ne.s32.totalorder %s517, %s518
      %p530 = scmp.eq.s32.totalorder %s57, 1
      %p531 = por %p529, %p530
      %p533 = scmp.ne.s32.totalorder %s518, %s532
      %p534 = scmp.eq.s32.totalorder %s57, 0
      %p535 = por %p533, %p534
      %s537 = sadd.s32 %s536, 1
      %p540 = scmp.eq.s32.totalorder %s51, 1
      %p541 = scmp.ne.s32.totalorder %s536, %s538
      %p542 = scmp.eq.s32.totalorder %s51, 0
      %p543 = por %p541, %p542
      %p544 = scmp.ne.s32.totalorder %s536, %s538
      %p545 = scmp.eq.s32.totalorder %s56, 1
      %p546 = por %p544, %p545
      %p547 = scmp.ne.s32.totalorder %s538, %s539
      %p548 = scmp.eq.s32.totalorder %s56, 0
      %p549 = por %p547, %p548
      %p550 = scmp.ne.s32.totalorder %s538, %s539
      %p551 = scmp.eq.s32.totalorder %s57, 1
      %p552 = por %p550, %p551
      %p554 = scmp.ne.s32.totalorder %s539, %s553
      %p555 = scmp.eq.s32.totalorder %s57, 0
      %p556 = por %p554, %p555
      %s558 = sadd.s32 %s557, 1
      %p561 = scmp.eq.s32.totalorder %s51, 1
      %p562 = scmp.ne.s32.totalorder %s557, %s559
      %p563 = scmp.eq.s32.totalorder %s51, 0
      %p564 = por %p562, %p563
      %p565 = scmp.ne.s32.totalorder %s557, %s559
      %p566 = scmp.eq.s32.totalorder %s56, 1
      %p567 = por %p565, %p566
      %p568 = scmp.ne.s32.totalorder %s559, %s560
      %p569 = scmp.eq.s32.totalorder %s56, 0
      %p570 = por %p568, %p569
      %p571 = scmp.ne.s32.totalorder %s559, %s560
      %p572 = scmp.eq.s32.totalorder %s57, 1
      %p573 = por %p571, %p572
      %p575 = scmp.ne.s32.totalorder %s560, %s574
      %p576 = scmp.eq.s32.totalorder %s57, 0
      %p577 = por %p575, %p576
      %s579 = sadd.s32 %s578, 1
      %p582 = scmp.eq.s32.totalorder %s51, 1
      %p583 = scmp.ne.s32.totalorder %s578, %s580
      %p584 = scmp.eq.s32.totalorder %s51, 0
      %p585 = por %p583, %p584
      %p586 = scmp.ne.s32.totalorder %s578, %s580
      %p587 = scmp.eq.s32.totalorder %s56, 1
      %p588 = por %p586, %p587
      %p589 = scmp.ne.s32.totalorder %s580, %s581
      %p590 = scmp.eq.s32.totalorder %s56, 0
      %p591 = por %p589, %p590
      %p592 = scmp.ne.s32.totalorder %s580, %s581
      %p593 = scmp.eq.s32.totalorder %s57, 1
      %p594 = por %p592, %p593
      %p596 = scmp.ne.s32.totalorder %s581, %s595
      %p597 = scmp.eq.s32.totalorder %s57, 0
      %p598 = por %p596, %p597
      %s599 = ssub.s32 %s51, %s58
      %p600 = scmp.eq.s32.totalorder %s599, 0
      %s602 = sadd.s32 %s601, 1
      %s603 = scalar_select %p600, %s601, %s602
      %p606 = pneg %p600
      %p607 = scmp.eq.s32.totalorder %s51, 1
      %p608 = por %p606, %p607
      %p609 = scmp.ne.s32.totalorder %s601, %s604
      %p610 = scmp.eq.s32.totalorder %s51, 0
      %p611 = por %p609, %p610
      %p612 = scmp.ne.s32.totalorder %s601, %s604
      %p613 = scmp.eq.s32.totalorder %s56, 1
      %p614 = por %p612, %p613
      %p615 = scmp.ne.s32.totalorder %s604, %s605
      %p616 = scmp.eq.s32.totalorder %s56, 0
      %p617 = por %p615, %p616
      %p618 = scmp.ne.s32.totalorder %s604, %s605
      %p619 = scmp.eq.s32.totalorder %s57, 1
      %p620 = por %p618, %p619
      %p622 = scmp.ne.s32.totalorder %s605, %s621
      %p623 = scmp.eq.s32.totalorder %s57, 0
      %p624 = por %p622, %p623
      %p625 = scmp.le.s32.totalorder 1, %s51
      %p626 = scmp.lt.s32.totalorder %s51, 3
      %p627 = pnand %p625, %p626
      %p628 = pneg %p627
      // Predicated region
      $region9: #{basic_transformer_block.1} parent=5 // pred_check
        _
      $region10: #{basic_transformer_block.1} parent=5 // pred_check_branch
        %630 = sbr.rel (%p627) target = $region12
      $region11: #{basic_transformer_block.1} parent=5 // pred_region
        %s631 = ssub.s32 %s51, 1
        // Predicated region
        $region13: #{basic_transformer_block.1} parent=11 // pred_check
          %p632 = pneg %p150
        $region14: #{basic_transformer_block.1} parent=11 // pred_check_branch
          %634 = sbr.rel (%p632) target = $region16
        $region15: #{basic_transformer_block.1} parent=11 // pred_region
          %s636 = ssub.s32 16, 16
          %637 = vsyncadd [#allocation9], %s636
          %s639 = sshll.u32 [#allocation8], 4
          %s640 = int_to_ptr.vmem [resolvable:$true] %s639
          %642 = dma.hbm_to_vmem [thread:$0]  %s3, 16, %s640, [#allocation9]
        $region16: #{basic_transformer_block.1} parent=11 // pred_fallthru
          _
        // Predicated region
        $region17: #{basic_transformer_block.1} parent=11 // pred_check
          %p643 = pneg %p171
        $region18: #{basic_transformer_block.1} parent=11 // pred_check_branch
          %645 = sbr.rel (%p643) target = $region20
        $region19: #{basic_transformer_block.1} parent=11 // pred_region
          %s647 = ssub.s32 16, 16
          %648 = vsyncadd [#allocation9], %s647
          %s650 = sshll.u32 [#allocation10], 4
          %s651 = int_to_ptr.vmem [resolvable:$true] %s650
          %653 = dma.hbm_to_vmem [thread:$0]  %s4, 16, %s651, [#allocation9]
        $region20: #{basic_transformer_block.1} parent=11 // pred_fallthru
          _
        // Predicated region
        $region21: #{basic_transformer_block.1} parent=11 // pred_check
          %p654 = pneg %p192
        $region22: #{basic_transformer_block.1} parent=11 // pred_check_branch
          %656 = sbr.rel (%p654) target = $region24
        $region23: #{basic_transformer_block.1} parent=11 // pred_region
          %s658 = ssub.s32 16, 16
          %659 = vsyncadd [#allocation12], %s658
          %s661 = sshll.u32 [#allocation11], 4
          %s662 = int_to_ptr.vmem [resolvable:$true] %s661
          %664 = dma.hbm_to_vmem [thread:$0]  %s5, 16, %s662, [#allocation12]
        $region24: #{basic_transformer_block.1} parent=11 // pred_fallthru
          _
        // Predicated region
        $region25: #{basic_transformer_block.1} parent=11 // pred_check
          %p665 = pneg %p213
        $region26: #{basic_transformer_block.1} parent=11 // pred_check_branch
          %667 = sbr.rel (%p665) target = $region28
        $region27: #{basic_transformer_block.1} parent=11 // pred_region
          %s669 = ssub.s32 16, 16
          %670 = vsyncadd [#allocation12], %s669
          %s672 = sshll.u32 [#allocation13], 4
          %s673 = int_to_ptr.vmem [resolvable:$true] %s672
          %675 = dma.hbm_to_vmem [thread:$0]  %s6, 16, %s673, [#allocation12]
        $region28: #{basic_transformer_block.1} parent=11 // pred_fallthru
          _
        // Predicated region
        $region29: #{basic_transformer_block.1} parent=11 // pred_check
          %p676 = pneg %p234
        $region30: #{basic_transformer_block.1} parent=11 // pred_check_branch
          %678 = sbr.rel (%p676) target = $region32
        $region31: #{basic_transformer_block.1} parent=11 // pred_region
          %s680 = ssub.s32 16, 16
          %681 = vsyncadd [#allocation15], %s680
          %s683 = sshll.u32 [#allocation14], 4
          %s684 = int_to_ptr.vmem [resolvable:$true] %s683
          %686 = dma.hbm_to_vmem [thread:$0]  %s7, 16, %s684, [#allocation15]
        $region32: #{basic_transformer_block.1} parent=11 // pred_fallthru
          _
        // Predicated region
        $region33: #{basic_transformer_block.1} parent=11 // pred_check
          %p687 = pneg %p255
        $region34: #{basic_transformer_block.1} parent=11 // pred_check_branch
          %689 = sbr.rel (%p687) target = $region36
        $region35: #{basic_transformer_block.1} parent=11 // pred_region
          %s691 = ssub.s32 16, 16
          %692 = vsyncadd [#allocation15], %s691
          %s694 = sshll.u32 [#allocation16], 4
          %s695 = int_to_ptr.vmem [resolvable:$true] %s694
          %697 = dma.hbm_to_vmem [thread:$0]  %s8, 16, %s695, [#allocation15]
        $region36: #{basic_transformer_block.1} parent=11 // pred_fallthru
          _
        // Predicated region
        $region37: #{basic_transformer_block.1} parent=11 // pred_check
          %p698 = pneg %p276
        $region38: #{basic_transformer_block.1} parent=11 // pred_check_branch
          %700 = sbr.rel (%p698) target = $region40
        $region39: #{basic_transformer_block.1} parent=11 // pred_region
          %s702 = ssub.s32 1024, 1024
          %703 = vsyncadd [#allocation18], %s702
          %s704 = sshll.u32 [#allocation17], 4
          %s705 = int_to_ptr.vmem [resolvable:$true] %s704
          %710 = dma.hbm_to_vmem [thread:$0]  %s9, 1024, %s705, [#allocation18], 64, 64, 4
        $region40: #{basic_transformer_block.1} parent=11 // pred_fallthru
          _
        // Predicated region
        $region41: #{basic_transformer_block.1} parent=11 // pred_check
          %p711 = pneg %p297
        $region42: #{basic_transformer_block.1} parent=11 // pred_check_branch
          %713 = sbr.rel (%p711) target = $region44
        $region43: #{basic_transformer_block.1} parent=11 // pred_region
          %s715 = ssub.s32 1024, 1024
          %716 = vsyncadd [#allocation18], %s715
          %s717 = sshll.u32 [#allocation19], 4
          %s718 = int_to_ptr.vmem [resolvable:$true] %s717
          %723 = dma.hbm_to_vmem [thread:$0]  %s10, 1024, %s718, [#allocation18], 64, 64, 4
        $region44: #{basic_transformer_block.1} parent=11 // pred_fallthru
          _
        // Predicated region
        $region45: #{basic_transformer_block.1} parent=11 // pred_check
          %p724 = pneg %p318
        $region46: #{basic_transformer_block.1} parent=11 // pred_check_branch
          %726 = sbr.rel (%p724) target = $region48
        $region47: #{basic_transformer_block.1} parent=11 // pred_region
          %s728 = ssub.s32 1024, 1024
          %729 = vsyncadd [#allocation21], %s728
          %s730 = sshll.u32 [#allocation20], 4
          %s731 = int_to_ptr.vmem [resolvable:$true] %s730
          %736 = dma.hbm_to_vmem [thread:$0]  %s11, 1024, %s731, [#allocation21], 64, 64, 4
        $region48: #{basic_transformer_block.1} parent=11 // pred_fallthru
          _
        // Predicated region
        $region49: #{basic_transformer_block.1} parent=11 // pred_check
          %p737 = pneg %p339
        $region50: #{basic_transformer_block.1} parent=11 // pred_check_branch
          %739 = sbr.rel (%p737) target = $region52
        $region51: #{basic_transformer_block.1} parent=11 // pred_region
          %s741 = ssub.s32 256, 256
          %742 = vsyncadd [#allocation21], %s741
          %s743 = sshll.u32 [#allocation22], 4
          %s744 = int_to_ptr.vmem [resolvable:$true] %s743
          %749 = dma.hbm_to_vmem [thread:$0]  %s12, 256, %s744, [#allocation21], 64, 64, 4
        $region52: #{basic_transformer_block.1} parent=11 // pred_fallthru
          _
        // Predicated region
        $region53: #{basic_transformer_block.1} parent=11 // pred_check
          %p750 = pneg %p360
        $region54: #{basic_transformer_block.1} parent=11 // pred_check_branch
          %752 = sbr.rel (%p750) target = $region56
        $region55: #{basic_transformer_block.1} parent=11 // pred_region
          %s754 = ssub.s32 16, 16
          %755 = vsyncadd [#allocation24], %s754
          %s757 = sshll.u32 [#allocation23], 4
          %s758 = int_to_ptr.vmem [resolvable:$true] %s757
          %760 = dma.hbm_to_vmem [thread:$0]  %s13, 16, %s758, [#allocation24]
        $region56: #{basic_transformer_block.1} parent=11 // pred_fallthru
          _
        // Predicated region
        $region57: #{basic_transformer_block.1} parent=11 // pred_check
          %p761 = pneg %p381
        $region58: #{basic_transformer_block.1} parent=11 // pred_check_branch
          %763 = sbr.rel (%p761) target = $region60
        $region59: #{basic_transformer_block.1} parent=11 // pred_region
          %s765 = ssub.s32 1024, 1024
          %766 = vsyncadd [#allocation24], %s765
          %s767 = sshll.u32 [#allocation25], 4
          %s768 = int_to_ptr.vmem [resolvable:$true] %s767
          %773 = dma.hbm_to_vmem [thread:$0]  %s14, 1024, %s768, [#allocation24], 64, 64, 4
        $region60: #{basic_transformer_block.1} parent=11 // pred_fallthru
          _
        // Predicated region
        $region61: #{basic_transformer_block.1} parent=11 // pred_check
          %p774 = pneg %p402
        $region62: #{basic_transformer_block.1} parent=11 // pred_check_branch
          %776 = sbr.rel (%p774) target = $region64
        $region63: #{basic_transformer_block.1} parent=11 // pred_region
          %s778 = ssub.s32 512, 512
          %779 = vsyncadd [#allocation27], %s778
          %s780 = sshll.u32 [#allocation26], 4
          %s781 = int_to_ptr.vmem [resolvable:$true] %s780
          %786 = dma.hbm_to_vmem [thread:$0]  %s15, 512, %s781, [#allocation27], 64, 64, 4
        $region64: #{basic_transformer_block.1} parent=11 // pred_fallthru
          _
        // Predicated region
        $region65: #{basic_transformer_block.1} parent=11 // pred_check
          %p787 = pneg %p423
        $region66: #{basic_transformer_block.1} parent=11 // pred_check_branch
          %789 = sbr.rel (%p787) target = $region68
        $region67: #{basic_transformer_block.1} parent=11 // pred_region
          %s791 = ssub.s32 512, 512
          %792 = vsyncadd [#allocation27], %s791
          %s793 = sshll.u32 [#allocation28], 4
          %s794 = int_to_ptr.vmem [resolvable:$true] %s793
          %799 = dma.hbm_to_vmem [thread:$0]  %s16, 512, %s794, [#allocation27], 64, 64, 4
        $region68: #{basic_transformer_block.1} parent=11 // pred_fallthru
          _
        // Predicated region
        $region69: #{basic_transformer_block.1} parent=11 // pred_check
          %p800 = pneg %p444
        $region70: #{basic_transformer_block.1} parent=11 // pred_check_branch
          %802 = sbr.rel (%p800) target = $region72
        $region71: #{basic_transformer_block.1} parent=11 // pred_region
          %s804 = ssub.s32 256, 256
          %805 = vsyncadd [#allocation30], %s804
          %s806 = sshll.u32 [#allocation29], 4
          %s807 = int_to_ptr.vmem [resolvable:$true] %s806
          %812 = dma.hbm_to_vmem [thread:$0]  %s17, 256, %s807, [#allocation30], 64, 64, 4
        $region72: #{basic_transformer_block.1} parent=11 // pred_fallthru
          _
        // Predicated region
        $region73: #{basic_transformer_block.1} parent=11 // pred_check
          %p813 = pneg %p465
        $region74: #{basic_transformer_block.1} parent=11 // pred_check_branch
          %815 = sbr.rel (%p813) target = $region76
        $region75: #{basic_transformer_block.1} parent=11 // pred_region
          %s817 = ssub.s32 16, 16
          %818 = vsyncadd [#allocation30], %s817
          %s820 = sshll.u32 [#allocation31], 4
          %s821 = int_to_ptr.vmem [resolvable:$true] %s820
          %823 = dma.hbm_to_vmem [thread:$0]  %s18, 16, %s821, [#allocation30]
        $region76: #{basic_transformer_block.1} parent=11 // pred_fallthru
          _
        // Predicated region
        $region77: #{basic_transformer_block.1} parent=11 // pred_check
          %p824 = pneg %p486
        $region78: #{basic_transformer_block.1} parent=11 // pred_check_branch
          %826 = sbr.rel (%p824) target = $region80
        $region79: #{basic_transformer_block.1} parent=11 // pred_region
          %s828 = ssub.s32 256, 256
          %829 = vsyncadd [#allocation33], %s828
          %s830 = sshll.u32 [#allocation32], 4
          %s831 = int_to_ptr.vmem [resolvable:$true] %s830
          %836 = dma.hbm_to_vmem [thread:$0]  %s19, 256, %s831, [#allocation33], 64, 64, 4
        $region80: #{basic_transformer_block.1} parent=11 // pred_fallthru
          _
        // Predicated region
        $region81: #{basic_transformer_block.1} parent=11 // pred_check
          %p837 = pneg %p507
        $region82: #{basic_transformer_block.1} parent=11 // pred_check_branch
          %839 = sbr.rel (%p837) target = $region84
        $region83: #{basic_transformer_block.1} parent=11 // pred_region
          %s841 = ssub.s32 16, 16
          %842 = vsyncadd [#allocation33], %s841
          %s844 = sshll.u32 [#allocation34], 4
          %s845 = int_to_ptr.vmem [resolvable:$true] %s844
          %847 = dma.hbm_to_vmem [thread:$0]  %s20, 16, %s845, [#allocation33]
        $region84: #{basic_transformer_block.1} parent=11 // pred_fallthru
          _
        // Predicated region
        $region85: #{basic_transformer_block.1} parent=11 // pred_check
          %p848 = pneg %p528
        $region86: #{basic_transformer_block.1} parent=11 // pred_check_branch
          %850 = sbr.rel (%p848) target = $region88
        $region87: #{basic_transformer_block.1} parent=11 // pred_region
          %s852 = ssub.s32 256, 256
          %853 = vsyncadd [#allocation36], %s852
          %s854 = sshll.u32 [#allocation35], 4
          %s855 = int_to_ptr.vmem [resolvable:$true] %s854
          %860 = dma.hbm_to_vmem [thread:$0]  %s21, 256, %s855, [#allocation36], 64, 64, 4
        $region88: #{basic_transformer_block.1} parent=11 // pred_fallthru
          _
        // Predicated region
        $region89: #{basic_transformer_block.1} parent=11 // pred_check
          %p861 = pneg %p549
        $region90: #{basic_transformer_block.1} parent=11 // pred_check_branch
          %863 = sbr.rel (%p861) target = $region92
        $region91: #{basic_transformer_block.1} parent=11 // pred_region
          %s865 = ssub.s32 16, 16
          %866 = vsyncadd [#allocation36], %s865
          %s868 = sshll.u32 [#allocation37], 4
          %s869 = int_to_ptr.vmem [resolvable:$true] %s868
          %871 = dma.hbm_to_vmem [thread:$0]  %s22, 16, %s869, [#allocation36]
        $region92: #{basic_transformer_block.1} parent=11 // pred_fallthru
          _
        // Predicated region
        $region93: #{basic_transformer_block.1} parent=11 // pred_check
          %p872 = pneg %p570
        $region94: #{basic_transformer_block.1} parent=11 // pred_check_branch
          %874 = sbr.rel (%p872) target = $region96
        $region95: #{basic_transformer_block.1} parent=11 // pred_region
          %s876 = ssub.s32 1024, 1024
          %877 = vsyncadd [#allocation39], %s876
          %s878 = sshll.u32 [#allocation38], 4
          %s879 = int_to_ptr.vmem [resolvable:$true] %s878
          %884 = dma.hbm_to_vmem [thread:$0]  %s23, 1024, %s879, [#allocation39], 64, 64, 4
        $region96: #{basic_transformer_block.1} parent=11 // pred_fallthru
          _
        // Predicated region
        $region97: #{basic_transformer_block.1} parent=11 // pred_check
          %p885 = pneg %p591
        $region98: #{basic_transformer_block.1} parent=11 // pred_check_branch
          %887 = sbr.rel (%p885) target = $region100
        $region99: #{basic_transformer_block.1} parent=11 // pred_region
          %s889 = ssub.s32 16, 16
          %890 = vsyncadd [#allocation39], %s889
          %s892 = sshll.u32 [#allocation40], 4
          %s893 = int_to_ptr.vmem [resolvable:$true] %s892
          %895 = dma.hbm_to_vmem [thread:$0]  %s24, 16, %s893, [#allocation39]
        $region100: #{basic_transformer_block.1} parent=11 // pred_fallthru
          _
      $region12: #{basic_transformer_block.1} parent=5 // pred_fallthru
        _
      %p896 = scmp.lt.s32.totalorder %s51, 2
      // Predicated region
      $region101: #{basic_transformer_block.1} parent=5 // pred_check
        %p897 = pneg %p896
      $region102: #{basic_transformer_block.1} parent=5 // pred_check_branch
        %899 = sbr.rel (%p897) target = $region104
      $region103: #{basic_transformer_block.1} parent=5 // pred_region
        // Predicated region
        $region105: #{basic_transformer_block.1} parent=103 // pred_check
          %p900 = pneg %p71
        $region106: #{basic_transformer_block.1} parent=103 // pred_check_branch
          %902 = sbr.rel (%p900) target = $region108
        $region107: #{basic_transformer_block.1} parent=103 // pred_region
          %s903 = sand.u32 %s61, 1
          %s904 = scalar_lea.sflag [#allocation3], %s903
          %s905 = sand.u32 %s61, 1
          %s906 = smul.addr %s905, 16
          %s907 = scalar_lea.vmem [#allocation2], %s906
          %s909 = ssub.s32 256, 256
          %910 = vsyncadd %s904, %s909
          %s911 = smul.addr %s51, 2
          %s912 = smul.addr %s911, 128
          %s913 = scalar_lea.hbm %s0, %s912
          %s914 = sshll.u32 %s907, 4
          %s915 = int_to_ptr.vmem [resolvable:$true] %s914
          %920 = dma.hbm_to_vmem [thread:$0]  %s913, 256, %s915, %s904, 128, 128, 8
        $region108: #{basic_transformer_block.1} parent=103 // pred_fallthru
          _
        // Predicated region
        $region109: #{basic_transformer_block.1} parent=103 // pred_check
          %p921 = pneg %p97
        $region110: #{basic_transformer_block.1} parent=103 // pred_check_branch
          %923 = sbr.rel (%p921) target = $region112
        $region111: #{basic_transformer_block.1} parent=103 // pred_region
          %s924 = sand.u32 %s51, 1
          %s925 = scalar_lea.sflag [#allocation6], %s924
          %s926 = sand.u32 %s87, 1
          %s927 = smul.addr %s926, 8
          %s928 = scalar_lea.vmem [#allocation5], %s927
          %s930 = ssub.s32 128, 128
          %931 = vsyncadd %s925, %s930
          %s932 = smul.addr %s51, 128
          %s933 = scalar_lea.hbm %s1, %s932
          %s935 = sshll.u32 %s928, 4
          %s936 = int_to_ptr.vmem [resolvable:$true] %s935
          %938 = dma.hbm_to_vmem [thread:$0]  %s933, 128, %s936, %s925
        $region112: #{basic_transformer_block.1} parent=103 // pred_fallthru
          _
        // Predicated region
        $region113: #{basic_transformer_block.1} parent=103 // pred_check
          %p939 = pneg %p123
        $region114: #{basic_transformer_block.1} parent=103 // pred_check_branch
          %941 = sbr.rel (%p939) target = $region116
        $region115: #{basic_transformer_block.1} parent=103 // pred_region
          %s942 = sand.u32 %s51, 1
          %s943 = scalar_lea.sflag [#allocation6], %s942
          %s944 = sand.u32 %s113, 1
          %s945 = scalar_lea.vmem [#allocation7], %s944
          %s947 = ssub.s32 16, 16
          %948 = vsyncadd %s943, %s947
          %s949 = smul.addr %s51, 16
          %s950 = scalar_lea.hbm %s2, %s949
          %s952 = sshll.u32 %s945, 4
          %s953 = int_to_ptr.vmem [resolvable:$true] %s952
          %955 = dma.hbm_to_vmem [thread:$0]  %s950, 16, %s953, %s943
        $region116: #{basic_transformer_block.1} parent=103 // pred_fallthru
          _
      $region104: #{basic_transformer_block.1} parent=5 // pred_fallthru
        _
      %p956 = scmp.le.s32.totalorder 1, %s51
      %p957 = scmp.lt.s32.totalorder %s51, 3
      %p958 = pnand %p956, %p957
      %p959 = pneg %p958
      // Predicated region
      $region117: #{basic_transformer_block.1} parent=5 // pred_check
        _
      $region118: #{basic_transformer_block.1} parent=5 // pred_check_branch
        %961 = sbr.rel (%p958) target = $region120
      $region119: #{basic_transformer_block.1} parent=5 // pred_region
        %s962 = ssub.s32 %s51, 1
        %s963 = sand.u32 %s64, 1
        %s964 = scalar_lea.sflag [#allocation3], %s963
        %s965 = sand.u32 %s64, 1
        %s966 = smul.addr %s965, 16
        %s967 = scalar_lea.vmem [#allocation2], %s966
        // Predicated region
        $region121: #{basic_transformer_block.1} parent=119 // pred_check
          %p968 = pneg %p77
        $region122: #{basic_transformer_block.1} parent=119 // pred_check_branch
          %970 = sbr.rel (%p968) target = $region124
        $region123: #{basic_transformer_block.1} parent=119 // pred_region
          %971 = dma.done %s964, 256
        $region124: #{basic_transformer_block.1} parent=119 // pred_fallthru
          _
        %s972 = sand.u32 %s56, 1
        %s973 = scalar_lea.sflag [#allocation6], %s972
        %s974 = sand.u32 %s90, 1
        %s975 = smul.addr %s974, 8
        %s976 = scalar_lea.vmem [#allocation5], %s975
        // Predicated region
        $region125: #{basic_transformer_block.1} parent=119 // pred_check
          %p977 = pneg %p103
        $region126: #{basic_transformer_block.1} parent=119 // pred_check_branch
          %979 = sbr.rel (%p977) target = $region128
        $region127: #{basic_transformer_block.1} parent=119 // pred_region
          %980 = dma.done %s973, 128
        $region128: #{basic_transformer_block.1} parent=119 // pred_fallthru
          _
        %s981 = sand.u32 %s56, 1
        %s982 = scalar_lea.sflag [#allocation6], %s981
        %s983 = sand.u32 %s116, 1
        %s984 = scalar_lea.vmem [#allocation7], %s983
        // Predicated region
        $region129: #{basic_transformer_block.1} parent=119 // pred_check
          %p985 = pneg %p129
        $region130: #{basic_transformer_block.1} parent=119 // pred_check_branch
          %987 = sbr.rel (%p985) target = $region132
        $region131: #{basic_transformer_block.1} parent=119 // pred_region
          %988 = dma.done %s982, 16
        $region132: #{basic_transformer_block.1} parent=119 // pred_fallthru
          _
        // Predicated region
        $region133: #{basic_transformer_block.1} parent=119 // pred_check
          %p989 = pneg %p150
        $region134: #{basic_transformer_block.1} parent=119 // pred_check_branch
          %991 = sbr.rel (%p989) target = $region136
        $region135: #{basic_transformer_block.1} parent=119 // pred_region
          %992 = dma.done [#allocation9], 16
        $region136: #{basic_transformer_block.1} parent=119 // pred_fallthru
          _
        // Predicated region
        $region137: #{basic_transformer_block.1} parent=119 // pred_check
          %p993 = pneg %p171
        $region138: #{basic_transformer_block.1} parent=119 // pred_check_branch
          %995 = sbr.rel (%p993) target = $region140
        $region139: #{basic_transformer_block.1} parent=119 // pred_region
          %996 = dma.done [#allocation9], 16
        $region140: #{basic_transformer_block.1} parent=119 // pred_fallthru
          _
        // Predicated region
        $region141: #{basic_transformer_block.1} parent=119 // pred_check
          %p997 = pneg %p192
        $region142: #{basic_transformer_block.1} parent=119 // pred_check_branch
          %999 = sbr.rel (%p997) target = $region144
        $region143: #{basic_transformer_block.1} parent=119 // pred_region
          %1000 = dma.done [#allocation12], 16
        $region144: #{basic_transformer_block.1} parent=119 // pred_fallthru
          _
        // Predicated region
        $region145: #{basic_transformer_block.1} parent=119 // pred_check
          %p1001 = pneg %p213
        $region146: #{basic_transformer_block.1} parent=119 // pred_check_branch
          %1003 = sbr.rel (%p1001) target = $region148
        $region147: #{basic_transformer_block.1} parent=119 // pred_region
          %1004 = dma.done [#allocation12], 16
        $region148: #{basic_transformer_block.1} parent=119 // pred_fallthru
          _
        // Predicated region
        $region149: #{basic_transformer_block.1} parent=119 // pred_check
          %p1005 = pneg %p234
        $region150: #{basic_transformer_block.1} parent=119 // pred_check_branch
          %1007 = sbr.rel (%p1005) target = $region152
        $region151: #{basic_transformer_block.1} parent=119 // pred_region
          %1008 = dma.done [#allocation15], 16
        $region152: #{basic_transformer_block.1} parent=119 // pred_fallthru
          _
        // Predicated region
        $region153: #{basic_transformer_block.1} parent=119 // pred_check
          %p1009 = pneg %p255
        $region154: #{basic_transformer_block.1} parent=119 // pred_check_branch
          %1011 = sbr.rel (%p1009) target = $region156
        $region155: #{basic_transformer_block.1} parent=119 // pred_region
          %1012 = dma.done [#allocation15], 16
        $region156: #{basic_transformer_block.1} parent=119 // pred_fallthru
          _
        // Predicated region
        $region157: #{basic_transformer_block.1} parent=119 // pred_check
          %p1013 = pneg %p276
        $region158: #{basic_transformer_block.1} parent=119 // pred_check_branch
          %1015 = sbr.rel (%p1013) target = $region160
        $region159: #{basic_transformer_block.1} parent=119 // pred_region
          %1016 = dma.done [#allocation18], 1024
        $region160: #{basic_transformer_block.1} parent=119 // pred_fallthru
          _
        // Predicated region
        $region161: #{basic_transformer_block.1} parent=119 // pred_check
          %p1017 = pneg %p297
        $region162: #{basic_transformer_block.1} parent=119 // pred_check_branch
          %1019 = sbr.rel (%p1017) target = $region164
        $region163: #{basic_transformer_block.1} parent=119 // pred_region
          %1020 = dma.done [#allocation18], 1024
        $region164: #{basic_transformer_block.1} parent=119 // pred_fallthru
          _
        // Predicated region
        $region165: #{basic_transformer_block.1} parent=119 // pred_check
          %p1021 = pneg %p318
        $region166: #{basic_transformer_block.1} parent=119 // pred_check_branch
          %1023 = sbr.rel (%p1021) target = $region168
        $region167: #{basic_transformer_block.1} parent=119 // pred_region
          %1024 = dma.done [#allocation21], 1024
        $region168: #{basic_transformer_block.1} parent=119 // pred_fallthru
          _
        // Predicated region
        $region169: #{basic_transformer_block.1} parent=119 // pred_check
          %p1025 = pneg %p339
        $region170: #{basic_transformer_block.1} parent=119 // pred_check_branch
          %1027 = sbr.rel (%p1025) target = $region172
        $region171: #{basic_transformer_block.1} parent=119 // pred_region
          %1028 = dma.done [#allocation21], 256
        $region172: #{basic_transformer_block.1} parent=119 // pred_fallthru
          _
        // Predicated region
        $region173: #{basic_transformer_block.1} parent=119 // pred_check
          %p1029 = pneg %p360
        $region174: #{basic_transformer_block.1} parent=119 // pred_check_branch
          %1031 = sbr.rel (%p1029) target = $region176
        $region175: #{basic_transformer_block.1} parent=119 // pred_region
          %1032 = dma.done [#allocation24], 16
        $region176: #{basic_transformer_block.1} parent=119 // pred_fallthru
          _
        // Predicated region
        $region177: #{basic_transformer_block.1} parent=119 // pred_check
          %p1033 = pneg %p381
        $region178: #{basic_transformer_block.1} parent=119 // pred_check_branch
          %1035 = sbr.rel (%p1033) target = $region180
        $region179: #{basic_transformer_block.1} parent=119 // pred_region
          %1036 = dma.done [#allocation24], 1024
        $region180: #{basic_transformer_block.1} parent=119 // pred_fallthru
          _
        // Predicated region
        $region181: #{basic_transformer_block.1} parent=119 // pred_check
          %p1037 = pneg %p402
        $region182: #{basic_transformer_block.1} parent=119 // pred_check_branch
          %1039 = sbr.rel (%p1037) target = $region184
        $region183: #{basic_transformer_block.1} parent=119 // pred_region
          %1040 = dma.done [#allocation27], 512
        $region184: #{basic_transformer_block.1} parent=119 // pred_fallthru
          _
        // Predicated region
        $region185: #{basic_transformer_block.1} parent=119 // pred_check
          %p1041 = pneg %p423
        $region186: #{basic_transformer_block.1} parent=119 // pred_check_branch
          %1043 = sbr.rel (%p1041) target = $region188
        $region187: #{basic_transformer_block.1} parent=119 // pred_region
          %1044 = dma.done [#allocation27], 512
        $region188: #{basic_transformer_block.1} parent=119 // pred_fallthru
          _
        // Predicated region
        $region189: #{basic_transformer_block.1} parent=119 // pred_check
          %p1045 = pneg %p444
        $region190: #{basic_transformer_block.1} parent=119 // pred_check_branch
          %1047 = sbr.rel (%p1045) target = $region192
        $region191: #{basic_transformer_block.1} parent=119 // pred_region
          %1048 = dma.done [#allocation30], 256
        $region192: #{basic_transformer_block.1} parent=119 // pred_fallthru
          _
        // Predicated region
        $region193: #{basic_transformer_block.1} parent=119 // pred_check
          %p1049 = pneg %p465
        $region194: #{basic_transformer_block.1} parent=119 // pred_check_branch
          %1051 = sbr.rel (%p1049) target = $region196
        $region195: #{basic_transformer_block.1} parent=119 // pred_region
          %1052 = dma.done [#allocation30], 16
        $region196: #{basic_transformer_block.1} parent=119 // pred_fallthru
          _
        // Predicated region
        $region197: #{basic_transformer_block.1} parent=119 // pred_check
          %p1053 = pneg %p486
        $region198: #{basic_transformer_block.1} parent=119 // pred_check_branch
          %1055 = sbr.rel (%p1053) target = $region200
        $region199: #{basic_transformer_block.1} parent=119 // pred_region
          %1056 = dma.done [#allocation33], 256
        $region200: #{basic_transformer_block.1} parent=119 // pred_fallthru
          _
        // Predicated region
        $region201: #{basic_transformer_block.1} parent=119 // pred_check
          %p1057 = pneg %p507
        $region202: #{basic_transformer_block.1} parent=119 // pred_check_branch
          %1059 = sbr.rel (%p1057) target = $region204
        $region203: #{basic_transformer_block.1} parent=119 // pred_region
          %1060 = dma.done [#allocation33], 16
        $region204: #{basic_transformer_block.1} parent=119 // pred_fallthru
          _
        // Predicated region
        $region205: #{basic_transformer_block.1} parent=119 // pred_check
          %p1061 = pneg %p528
        $region206: #{basic_transformer_block.1} parent=119 // pred_check_branch
          %1063 = sbr.rel (%p1061) target = $region208
        $region207: #{basic_transformer_block.1} parent=119 // pred_region
          %1064 = dma.done [#allocation36], 256
        $region208: #{basic_transformer_block.1} parent=119 // pred_fallthru
          _
        // Predicated region
        $region209: #{basic_transformer_block.1} parent=119 // pred_check
          %p1065 = pneg %p549
        $region210: #{basic_transformer_block.1} parent=119 // pred_check_branch
          %1067 = sbr.rel (%p1065) target = $region212
        $region211: #{basic_transformer_block.1} parent=119 // pred_region
          %1068 = dma.done [#allocation36], 16
        $region212: #{basic_transformer_block.1} parent=119 // pred_fallthru
          _
        // Predicated region
        $region213: #{basic_transformer_block.1} parent=119 // pred_check
          %p1069 = pneg %p570
        $region214: #{basic_transformer_block.1} parent=119 // pred_check_branch
          %1071 = sbr.rel (%p1069) target = $region216
        $region215: #{basic_transformer_block.1} parent=119 // pred_region
          %1072 = dma.done [#allocation39], 1024
        $region216: #{basic_transformer_block.1} parent=119 // pred_fallthru
          _
        // Predicated region
        $region217: #{basic_transformer_block.1} parent=119 // pred_check
          %p1073 = pneg %p591
        $region218: #{basic_transformer_block.1} parent=119 // pred_check_branch
          %1075 = sbr.rel (%p1073) target = $region220
        $region219: #{basic_transformer_block.1} parent=119 // pred_region
          %1076 = dma.done [#allocation39], 16
        $region220: #{basic_transformer_block.1} parent=119 // pred_fallthru
          _
        %s1077 = sand.u32 %s64, 1
        %s1078 = scalar_lea.sflag [#allocation3], %s1077
        %s1079 = sand.u32 %s64, 1
        %s1080 = smul.addr %s1079, 16
        %s1081 = scalar_lea.vmem [#allocation2], %s1080
        %p1082 = pneg %p77
        %p1083 = pneg %p74
        %s1084 = sand.u32 %s56, 1
        %s1085 = scalar_lea.sflag [#allocation6], %s1084
        %s1086 = sand.u32 %s90, 1
        %s1087 = smul.addr %s1086, 8
        %s1088 = scalar_lea.vmem [#allocation5], %s1087
        %p1089 = pneg %p103
        %p1090 = pneg %p100
        %s1091 = sand.u32 %s56, 1
        %s1092 = scalar_lea.sflag [#allocation6], %s1091
        %s1093 = sand.u32 %s116, 1
        %s1094 = scalar_lea.vmem [#allocation7], %s1093
        %p1095 = pneg %p129
        %p1096 = pneg %p126
        %p1097 = pneg %p150
        %p1098 = pneg %p147
        %p1099 = pneg %p171
        %p1100 = pneg %p168
        %p1101 = pneg %p192
        %p1102 = pneg %p189
        %p1103 = pneg %p213
        %p1104 = pneg %p210
        %p1105 = pneg %p234
        %p1106 = pneg %p231
        %p1107 = pneg %p255
        %p1108 = pneg %p252
        %p1109 = pneg %p276
        %p1110 = pneg %p273
        %p1111 = pneg %p297
        %p1112 = pneg %p294
        %p1113 = pneg %p318
        %p1114 = pneg %p315
        %p1115 = pneg %p339
        %p1116 = pneg %p336
        %p1117 = pneg %p360
        %p1118 = pneg %p357
        %p1119 = pneg %p381
        %p1120 = pneg %p378
        %p1121 = pneg %p402
        %p1122 = pneg %p399
        %p1123 = pneg %p423
        %p1124 = pneg %p420
        %p1125 = pneg %p444
        %p1126 = pneg %p441
        %p1127 = pneg %p465
        %p1128 = pneg %p462
        %p1129 = pneg %p486
        %p1130 = pneg %p483
        %p1131 = pneg %p507
        %p1132 = pneg %p504
        %p1133 = pneg %p528
        %p1134 = pneg %p525
        %p1135 = pneg %p549
        %p1136 = pneg %p546
        %p1137 = pneg %p570
        %p1138 = pneg %p567
        %p1139 = pneg %p591
        %p1140 = pneg %p588
        %p1141 = pneg %p617
        %p1142 = pneg %p614
        %s1143 = sand.u32 %s604, 1
        %s1144 = scalar_lea.sflag [#allocation4], %s1143
        %s1145 = sand.u32 %s604, 1
        %s1146 = smul.addr %s1145, 16
        %s1147 = scalar_lea.vmem [#allocation41], %s1146
        %v1149 = vld [vmem:[%s967] sm:$0xff]
        %v1150 = vld [vmem:[%s967 + $0x8] sm:$0xff]
        %vm1151 = vcmask 261120
        %v1152 = vsel %vm1151, %v1149, 0.0
        %1153 = vadd.xlane.f32.xlu0 %v1152
        %v1154 = vpop.xlane.xlu0 %1153
        %v1155 = vsel %vm1151, %v1150, 0.0
        %1156 = vadd.xlane.f32.xlu0 %v1155
        %v1157 = vpop.xlane.xlu0 %1156
        %v1158 = vrcp.pop 32.0
        %v1159 = vmul.f32 %v1154, %v1158
        %v1160 = vmul.f32 %v1157, %v1158
        %v1161 = vsub.f32 %v1149, %v1159
        %v1162 = vsub.f32 %v1150, %v1160
        %v1163 = vmul.f32 %v1161, %v1161
        %v1164 = vmul.f32 %v1162, %v1162
        %v1165 = vsel %vm1151, %v1163, 0.0
        %1166 = vadd.xlane.f32.xlu0 %v1165
        %v1167 = vpop.xlane.xlu0 %1166
        %v1168 = vsel %vm1151, %v1164, 0.0
        %1169 = vadd.xlane.f32.xlu0 %v1168
        %v1170 = vpop.xlane.xlu0 %1169
        %v1171 = vmul.f32 %v1167, %v1158
        %v1172 = vmul.f32 %v1170, %v1158
        %v1173 = vadd.f32 %v1171, 1e-05
        %v1174 = vadd.f32 %v1172, 1e-05
        %v1175 = vrsqrt.pop %v1173
        %v1176 = vrsqrt.pop %v1174
        %v1177 = vmul.f32 %v1161, %v1175
        %v1178 = vmul.f32 %v1162, %v1176
        %v1179 = vld [vmem:[#allocation8] sm:$0x1]
        %v1181 = vlaneseq
        %v1182 = vshrl.u32 %v1181, 7
        %v1183 = vsub.s32 0, %v1182
        %v1184 = vrot.slane %v1179, %v1183
        %v1186 = vmul.f32 %v1177, %v1184
        %v1187 = vmul.f32 %v1178, %v1184
        %v1188 = vld [vmem:[#allocation10] sm:$0x1]
        %v1190 = vlaneseq
        %v1191 = vshrl.u32 %v1190, 7
        %v1192 = vsub.s32 0, %v1191
        %v1193 = vrot.slane %v1188, %v1192
        %v1195 = vadd.f32 %v1186, %v1193
        %v1196 = vadd.f32 %v1187, %v1193
        %v1197 = vpack.c.bf16 %v1196, %v1195
        %v1198 = vld [vmem:[#allocation17] sm:$0xf]
        %v1199 = vld [vmem:[#allocation17 + $0x4] sm:$0xf]
        %v1200 = vld [vmem:[#allocation17 + $0x8] sm:$0xf]
        %v1201 = vld [vmem:[#allocation17 + $0xc] sm:$0xf]
        %v1202 = vld [vmem:[#allocation17 + $0x10] sm:$0xf]
        %v1203 = vld [vmem:[#allocation17 + $0x14] sm:$0xf]
        %v1204 = vld [vmem:[#allocation17 + $0x18] sm:$0xf]
        %v1205 = vld [vmem:[#allocation17 + $0x1c] sm:$0xf]
        %v1206 = vld [vmem:[#allocation17 + $0x20] sm:$0xf]
        %v1207 = vld [vmem:[#allocation17 + $0x24] sm:$0xf]
        %v1208 = vld [vmem:[#allocation17 + $0x28] sm:$0xf]
        %v1209 = vld [vmem:[#allocation17 + $0x2c] sm:$0xf]
        %v1210 = vld [vmem:[#allocation17 + $0x30] sm:$0xf]
        %v1211 = vld [vmem:[#allocation17 + $0x34] sm:$0xf]
        %v1212 = vld [vmem:[#allocation17 + $0x38] sm:$0xf]
        %v1213 = vld [vmem:[#allocation17 + $0x3c] sm:$0xf]
        %v1218 = vunpack.c.l.b16 %v1198
        %v1219 = vunpack.c.l.b16 %v1199
        %v1220 = vunpack.c.l.b16 %v1200
        %v1221 = vunpack.c.l.b16 %v1201
        %v1222 = vpack.c.b16 %v1219, %v1218
        %v1223 = vpack.c.b16 %v1221, %v1220
        %v1227 = vsel %vm1151, %v1197, 0
        %1229 = vmatprep.subr.bf16.mxu0 0
        %1230 = vmatpush1.bf16.msra.mxu0 %v1222
        %1231 = vmatprep.subr.bf16.mxu0 0
        %1232 = vmatpush1.bf16.msra.mxu0 %v1223
        %1233 = vmatprep.subr.bf16.mxu0 0
        %1234 = vmatpush1.bf16.msra.mxu0 0
        %1235 = vmatprep.subr.bf16.mxu0 0
        %1236 = vmatpush1.bf16.msra.mxu0 0
        %1237 = vmatprep.subr.bf16.mxu0 0
        %1238 = vmatpush1.bf16.msra.mxu0 0
        %1239 = vmatprep.subr.bf16.mxu0 0
        %1240 = vmatpush1.bf16.msra.mxu0 0
        %1241 = vmatprep.subr.bf16.mxu0 0
        %1242 = vmatpush1.bf16.msra.mxu0 0
        %1243 = vmatprep.subr.bf16.mxu0 0
        %1244 = vmatpush1.bf16.msra.mxu0 0
        %1245 = vmatprep.subr.bf16.mxu0 0
        %1246 = vmatpush1.bf16.msra.mxu0 0
        %1247 = vmatprep.subr.bf16.mxu0 0
        %1248 = vmatpush1.bf16.msra.mxu0 0
        %1249 = vmatprep.subr.bf16.mxu0 0
        %1250 = vmatpush1.bf16.msra.mxu0 0
        %1251 = vmatprep.subr.bf16.mxu0 0
        %1252 = vmatpush1.bf16.msra.mxu0 0
        %1253 = vmatprep.subr.bf16.mxu0 0
        %1254 = vmatpush1.bf16.msra.mxu0 0
        %1255 = vmatprep.subr.bf16.mxu0 0
        %1256 = vmatpush1.bf16.msra.mxu0 0
        %1257 = vmatprep.subr.bf16.mxu0 0
        %1258 = vmatpush1.bf16.msra.mxu0 0
        %1259 = vmatprep.subr.bf16.mxu0 0
        %1260 = vmatpush1.bf16.msra.mxu0 0
        %1261 = vmatprep.mubr.bf16.mxu0 0
        %1262 = vmatmul.mubr.bf16.gmra.mrb[0].mxu0 %v1227
        %v1263 = vpop.f32.mrb[0].mxu0
        %v1264 = vadd.f32 0.0, %v1263
        %v1265 = vpop.f32.mrb[0].mxu0
        %v1266 = vpop.f32.mrb[0].mxu0
        %v1267 = vadd.f32 0.0, %v1266
        %v1268 = vpop.f32.mrb[0].mxu0
        %1269 = vdwg.mxu0
        %v1274 = vunpack.c.l.b16 %v1202
        %v1275 = vunpack.c.l.b16 %v1203
        %v1276 = vunpack.c.l.b16 %v1204
        %v1277 = vunpack.c.l.b16 %v1205
        %v1278 = vpack.c.b16 %v1275, %v1274
        %v1279 = vpack.c.b16 %v1277, %v1276
        %1282 = vmatprep.subr.bf16.mxu0 0
        %1283 = vmatpush1.bf16.msra.mxu0 %v1278
        %1284 = vmatprep.subr.bf16.mxu0 0
        %1285 = vmatpush1.bf16.msra.mxu0 %v1279
        %1286 = vmatprep.subr.bf16.mxu0 0
        %1287 = vmatpush1.bf16.msra.mxu0 0
        %1288 = vmatprep.subr.bf16.mxu0 0
        %1289 = vmatpush1.bf16.msra.mxu0 0
        %1290 = vmatprep.subr.bf16.mxu0 0
        %1291 = vmatpush1.bf16.msra.mxu0 0
        %1292 = vmatprep.subr.bf16.mxu0 0
        %1293 = vmatpush1.bf16.msra.mxu0 0
        %1294 = vmatprep.subr.bf16.mxu0 0
        %1295 = vmatpush1.bf16.msra.mxu0 0
        %1296 = vmatprep.subr.bf16.mxu0 0
        %1297 = vmatpush1.bf16.msra.mxu0 0
        %1298 = vmatprep.subr.bf16.mxu0 0
        %1299 = vmatpush1.bf16.msra.mxu0 0
        %1300 = vmatprep.subr.bf16.mxu0 0
        %1301 = vmatpush1.bf16.msra.mxu0 0
        %1302 = vmatprep.subr.bf16.mxu0 0
        %1303 = vmatpush1.bf16.msra.mxu0 0
        %1304 = vmatprep.subr.bf16.mxu0 0
        %1305 = vmatpush1.bf16.msra.mxu0 0
        %1306 = vmatprep.subr.bf16.mxu0 0
        %1307 = vmatpush1.bf16.msra.mxu0 0
        %1308 = vmatprep.subr.bf16.mxu0 0
        %1309 = vmatpush1.bf16.msra.mxu0 0
        %1310 = vmatprep.subr.bf16.mxu0 0
        %1311 = vmatpush1.bf16.msra.mxu0 0
        %1312 = vmatprep.subr.bf16.mxu0 0
        %1313 = vmatpush1.bf16.msra.mxu0 0
        %1314 = vmatprep.mubr.bf16.mxu0 0
        %1315 = vmatmul.mubr.bf16.gmra.mrb[0].mxu0 %v1227
        %v1316 = vpop.f32.mrb[0].mxu0
        %v1317 = vadd.f32 0.0, %v1316
        %v1318 = vpop.f32.mrb[0].mxu0
        %v1319 = vpop.f32.mrb[0].mxu0
        %v1320 = vadd.f32 0.0, %v1319
        %v1321 = vpop.f32.mrb[0].mxu0
        %1322 = vdwg.mxu0
        %v1327 = vunpack.c.l.b16 %v1206
        %v1328 = vunpack.c.l.b16 %v1207
        %v1329 = vunpack.c.l.b16 %v1208
        %v1330 = vunpack.c.l.b16 %v1209
        %v1331 = vpack.c.b16 %v1328, %v1327
        %v1332 = vpack.c.b16 %v1330, %v1329
        %1335 = vmatprep.subr.bf16.mxu0 0
        %1336 = vmatpush1.bf16.msra.mxu0 %v1331
        %1337 = vmatprep.subr.bf16.mxu0 0
        %1338 = vmatpush1.bf16.msra.mxu0 %v1332
        %1339 = vmatprep.subr.bf16.mxu0 0
        %1340 = vmatpush1.bf16.msra.mxu0 0
        %1341 = vmatprep.subr.bf16.mxu0 0
        %1342 = vmatpush1.bf16.msra.mxu0 0
        %1343 = vmatprep.subr.bf16.mxu0 0
        %1344 = vmatpush1.bf16.msra.mxu0 0
        %1345 = vmatprep.subr.bf16.mxu0 0
        %1346 = vmatpush1.bf16.msra.mxu0 0
        %1347 = vmatprep.subr.bf16.mxu0 0
        %1348 = vmatpush1.bf16.msra.mxu0 0
        %1349 = vmatprep.subr.bf16.mxu0 0
        %1350 = vmatpush1.bf16.msra.mxu0 0
        %1351 = vmatprep.subr.bf16.mxu0 0
        %1352 = vmatpush1.bf16.msra.mxu0 0
        %1353 = vmatprep.subr.bf16.mxu0 0
        %1354 = vmatpush1.bf16.msra.mxu0 0
        %1355 = vmatprep.subr.bf16.mxu0 0
        %1356 = vmatpush1.bf16.msra.mxu0 0
        %1357 = vmatprep.subr.bf16.mxu0 0
        %1358 = vmatpush1.bf16.msra.mxu0 0
        %1359 = vmatprep.subr.bf16.mxu0 0
        %1360 = vmatpush1.bf16.msra.mxu0 0
        %1361 = vmatprep.subr.bf16.mxu0 0
        %1362 = vmatpush1.bf16.msra.mxu0 0
        %1363 = vmatprep.subr.bf16.mxu0 0
        %1364 = vmatpush1.bf16.msra.mxu0 0
        %1365 = vmatprep.subr.bf16.mxu0 0
        %1366 = vmatpush1.bf16.msra.mxu0 0
        %1367 = vmatprep.mubr.bf16.mxu0 0
        %1368 = vmatmul.mubr.bf16.gmra.mrb[0].mxu0 %v1227
        %v1369 = vpop.f32.mrb[0].mxu0
        %v1370 = vadd.f32 0.0, %v1369
        %v1371 = vpop.f32.mrb[0].mxu0
        %v1372 = vpop.f32.mrb[0].mxu0
        %v1373 = vadd.f32 0.0, %v1372
        %v1374 = vpop.f32.mrb[0].mxu0
        %1375 = vdwg.mxu0
        %v1380 = vunpack.c.l.b16 %v1210
        %v1381 = vunpack.c.l.b16 %v1211
        %v1382 = vunpack.c.l.b16 %v1212
        %v1383 = vunpack.c.l.b16 %v1213
        %v1384 = vpack.c.b16 %v1381, %v1380
        %v1385 = vpack.c.b16 %v1383, %v1382
        %1388 = vmatprep.subr.bf16.mxu0 0
        %1389 = vmatpush1.bf16.msra.mxu0 %v1384
        %1390 = vmatprep.subr.bf16.mxu0 0
        %1391 = vmatpush1.bf16.msra.mxu0 %v1385
        %1392 = vmatprep.subr.bf16.mxu0 0
        %1393 = vmatpush1.bf16.msra.mxu0 0
        %1394 = vmatprep.subr.bf16.mxu0 0
        %1395 = vmatpush1.bf16.msra.mxu0 0
        %1396 = vmatprep.subr.bf16.mxu0 0
        %1397 = vmatpush1.bf16.msra.mxu0 0
        %1398 = vmatprep.subr.bf16.mxu0 0
        %1399 = vmatpush1.bf16.msra.mxu0 0
        %1400 = vmatprep.subr.bf16.mxu0 0
        %1401 = vmatpush1.bf16.msra.mxu0 0
        %1402 = vmatprep.subr.bf16.mxu0 0
        %1403 = vmatpush1.bf16.msra.mxu0 0
        %1404 = vmatprep.subr.bf16.mxu0 0
        %1405 = vmatpush1.bf16.msra.mxu0 0
        %1406 = vmatprep.subr.bf16.mxu0 0
        %1407 = vmatpush1.bf16.msra.mxu0 0
        %1408 = vmatprep.subr.bf16.mxu0 0
        %1409 = vmatpush1.bf16.msra.mxu0 0
        %1410 = vmatprep.subr.bf16.mxu0 0
        %1411 = vmatpush1.bf16.msra.mxu0 0
        %1412 = vmatprep.subr.bf16.mxu0 0
        %1413 = vmatpush1.bf16.msra.mxu0 0
        %1414 = vmatprep.subr.bf16.mxu0 0
        %1415 = vmatpush1.bf16.msra.mxu0 0
        %1416 = vmatprep.subr.bf16.mxu0 0
        %1417 = vmatpush1.bf16.msra.mxu0 0
        %1418 = vmatprep.subr.bf16.mxu0 0
        %1419 = vmatpush1.bf16.msra.mxu0 0
        %1420 = vmatprep.mubr.bf16.mxu0 0
        %1421 = vmatmul.mubr.bf16.gmra.mrb[0].mxu0 %v1227
        %v1422 = vpop.f32.mrb[0].mxu0
        %v1423 = vadd.f32 0.0, %v1422
        %v1424 = vpop.f32.mrb[0].mxu0
        %v1425 = vpop.f32.mrb[0].mxu0
        %v1426 = vadd.f32 0.0, %v1425
        %v1427 = vpop.f32.mrb[0].mxu0
        %1428 = vdwg.mxu0
        %v1429 = vld [vmem:[#allocation19] sm:$0xf]
        %v1430 = vld [vmem:[#allocation19 + $0x4] sm:$0xf]
        %v1431 = vld [vmem:[#allocation19 + $0x8] sm:$0xf]
        %v1432 = vld [vmem:[#allocation19 + $0xc] sm:$0xf]
        %v1433 = vld [vmem:[#allocation19 + $0x10] sm:$0xf]
        %v1434 = vld [vmem:[#allocation19 + $0x14] sm:$0xf]
        %v1435 = vld [vmem:[#allocation19 + $0x18] sm:$0xf]
        %v1436 = vld [vmem:[#allocation19 + $0x1c] sm:$0xf]
        %v1437 = vld [vmem:[#allocation19 + $0x20] sm:$0xf]
        %v1438 = vld [vmem:[#allocation19 + $0x24] sm:$0xf]
        %v1439 = vld [vmem:[#allocation19 + $0x28] sm:$0xf]
        %v1440 = vld [vmem:[#allocation19 + $0x2c] sm:$0xf]
        %v1441 = vld [vmem:[#allocation19 + $0x30] sm:$0xf]
        %v1442 = vld [vmem:[#allocation19 + $0x34] sm:$0xf]
        %v1443 = vld [vmem:[#allocation19 + $0x38] sm:$0xf]
        %v1444 = vld [vmem:[#allocation19 + $0x3c] sm:$0xf]
        %v1449 = vunpack.c.l.b16 %v1429
        %v1450 = vunpack.c.l.b16 %v1430
        %v1451 = vunpack.c.l.b16 %v1431
        %v1452 = vunpack.c.l.b16 %v1432
        %v1453 = vpack.c.b16 %v1450, %v1449
        %v1454 = vpack.c.b16 %v1452, %v1451
        %1457 = vmatprep.subr.bf16.mxu0 0
        %1458 = vmatpush1.bf16.msra.mxu0 %v1453
        %1459 = vmatprep.subr.bf16.mxu0 0
        %1460 = vmatpush1.bf16.msra.mxu0 %v1454
        %1461 = vmatprep.subr.bf16.mxu0 0
        %1462 = vmatpush1.bf16.msra.mxu0 0
        %1463 = vmatprep.subr.bf16.mxu0 0
        %1464 = vmatpush1.bf16.msra.mxu0 0
        %1465 = vmatprep.subr.bf16.mxu0 0
        %1466 = vmatpush1.bf16.msra.mxu0 0
        %1467 = vmatprep.subr.bf16.mxu0 0
        %1468 = vmatpush1.bf16.msra.mxu0 0
        %1469 = vmatprep.subr.bf16.mxu0 0
        %1470 = vmatpush1.bf16.msra.mxu0 0
        %1471 = vmatprep.subr.bf16.mxu0 0
        %1472 = vmatpush1.bf16.msra.mxu0 0
        %1473 = vmatprep.subr.bf16.mxu0 0
        %1474 = vmatpush1.bf16.msra.mxu0 0
        %1475 = vmatprep.subr.bf16.mxu0 0
        %1476 = vmatpush1.bf16.msra.mxu0 0
        %1477 = vmatprep.subr.bf16.mxu0 0
        %1478 = vmatpush1.bf16.msra.mxu0 0
        %1479 = vmatprep.subr.bf16.mxu0 0
        %1480 = vmatpush1.bf16.msra.mxu0 0
        %1481 = vmatprep.subr.bf16.mxu0 0
        %1482 = vmatpush1.bf16.msra.mxu0 0
        %1483 = vmatprep.subr.bf16.mxu0 0
        %1484 = vmatpush1.bf16.msra.mxu0 0
        %1485 = vmatprep.subr.bf16.mxu0 0
        %1486 = vmatpush1.bf16.msra.mxu0 0
        %1487 = vmatprep.subr.bf16.mxu0 0
        %1488 = vmatpush1.bf16.msra.mxu0 0
        %1489 = vmatprep.mubr.bf16.mxu0 0
        %1490 = vmatmul.mubr.bf16.gmra.mrb[0].mxu0 %v1227
        %v1491 = vpop.f32.mrb[0].mxu0
        %v1492 = vadd.f32 0.0, %v1491
        %v1493 = vpop.f32.mrb[0].mxu0
        %v1494 = vpop.f32.mrb[0].mxu0
        %v1495 = vadd.f32 0.0, %v1494
        %v1496 = vpop.f32.mrb[0].mxu0
        %1497 = vdwg.mxu0
        %v1502 = vunpack.c.l.b16 %v1433
        %v1503 = vunpack.c.l.b16 %v1434
        %v1504 = vunpack.c.l.b16 %v1435
        %v1505 = vunpack.c.l.b16 %v1436
        %v1506 = vpack.c.b16 %v1503, %v1502
        %v1507 = vpack.c.b16 %v1505, %v1504
        %1510 = vmatprep.subr.bf16.mxu0 0
        %1511 = vmatpush1.bf16.msra.mxu0 %v1506
        %1512 = vmatprep.subr.bf16.mxu0 0
        %1513 = vmatpush1.bf16.msra.mxu0 %v1507
        %1514 = vmatprep.subr.bf16.mxu0 0
        %1515 = vmatpush1.bf16.msra.mxu0 0
        %1516 = vmatprep.subr.bf16.mxu0 0
        %1517 = vmatpush1.bf16.msra.mxu0 0
        %1518 = vmatprep.subr.bf16.mxu0 0
        %1519 = vmatpush1.bf16.msra.mxu0 0
        %1520 = vmatprep.subr.bf16.mxu0 0
        %1521 = vmatpush1.bf16.msra.mxu0 0
        %1522 = vmatprep.subr.bf16.mxu0 0
        %1523 = vmatpush1.bf16.msra.mxu0 0
        %1524 = vmatprep.subr.bf16.mxu0 0
        %1525 = vmatpush1.bf16.msra.mxu0 0
        %1526 = vmatprep.subr.bf16.mxu0 0
        %1527 = vmatpush1.bf16.msra.mxu0 0
        %1528 = vmatprep.subr.bf16.mxu0 0
        %1529 = vmatpush1.bf16.msra.mxu0 0
        %1530 = vmatprep.subr.bf16.mxu0 0
        %1531 = vmatpush1.bf16.msra.mxu0 0
        %1532 = vmatprep.subr.bf16.mxu0 0
        %1533 = vmatpush1.bf16.msra.mxu0 0
        %1534 = vmatprep.subr.bf16.mxu0 0
        %1535 = vmatpush1.bf16.msra.mxu0 0
        %1536 = vmatprep.subr.bf16.mxu0 0
        %1537 = vmatpush1.bf16.msra.mxu0 0
        %1538 = vmatprep.subr.bf16.mxu0 0
        %1539 = vmatpush1.bf16.msra.mxu0 0
        %1540 = vmatprep.subr.bf16.mxu0 0
        %1541 = vmatpush1.bf16.msra.mxu0 0
        %1542 = vmatprep.mubr.bf16.mxu0 0
        %1543 = vmatmul.mubr.bf16.gmra.mrb[0].mxu0 %v1227
        %v1544 = vpop.f32.mrb[0].mxu0
        %v1545 = vadd.f32 0.0, %v1544
        %v1546 = vpop.f32.mrb[0].mxu0
        %v1547 = vpop.f32.mrb[0].mxu0
        %v1548 = vadd.f32 0.0, %v1547
        %v1549 = vpop.f32.mrb[0].mxu0
        %1550 = vdwg.mxu0
        %v1555 = vunpack.c.l.b16 %v1437
        %v1556 = vunpack.c.l.b16 %v1438
        %v1557 = vunpack.c.l.b16 %v1439
        %v1558 = vunpack.c.l.b16 %v1440
        %v1559 = vpack.c.b16 %v1556, %v1555
        %v1560 = vpack.c.b16 %v1558, %v1557
        %1563 = vmatprep.subr.bf16.mxu0 0
        %1564 = vmatpush1.bf16.msra.mxu0 %v1559
        %1565 = vmatprep.subr.bf16.mxu0 0
        %1566 = vmatpush1.bf16.msra.mxu0 %v1560
        %1567 = vmatprep.subr.bf16.mxu0 0
        %1568 = vmatpush1.bf16.msra.mxu0 0
        %1569 = vmatprep.subr.bf16.mxu0 0
        %1570 = vmatpush1.bf16.msra.mxu0 0
        %1571 = vmatprep.subr.bf16.mxu0 0
        %1572 = vmatpush1.bf16.msra.mxu0 0
        %1573 = vmatprep.subr.bf16.mxu0 0
        %1574 = vmatpush1.bf16.msra.mxu0 0
        %1575 = vmatprep.subr.bf16.mxu0 0
        %1576 = vmatpush1.bf16.msra.mxu0 0
        %1577 = vmatprep.subr.bf16.mxu0 0
        %1578 = vmatpush1.bf16.msra.mxu0 0
        %1579 = vmatprep.subr.bf16.mxu0 0
        %1580 = vmatpush1.bf16.msra.mxu0 0
        %1581 = vmatprep.subr.bf16.mxu0 0
        %1582 = vmatpush1.bf16.msra.mxu0 0
        %1583 = vmatprep.subr.bf16.mxu0 0
        %1584 = vmatpush1.bf16.msra.mxu0 0
        %1585 = vmatprep.subr.bf16.mxu0 0
        %1586 = vmatpush1.bf16.msra.mxu0 0
        %1587 = vmatprep.subr.bf16.mxu0 0
        %1588 = vmatpush1.bf16.msra.mxu0 0
        %1589 = vmatprep.subr.bf16.mxu0 0
        %1590 = vmatpush1.bf16.msra.mxu0 0
        %1591 = vmatprep.subr.bf16.mxu0 0
        %1592 = vmatpush1.bf16.msra.mxu0 0
        %1593 = vmatprep.subr.bf16.mxu0 0
        %1594 = vmatpush1.bf16.msra.mxu0 0
        %1595 = vmatprep.mubr.bf16.mxu0 0
        %1596 = vmatmul.mubr.bf16.gmra.mrb[0].mxu0 %v1227
        %v1597 = vpop.f32.mrb[0].mxu0
        %v1598 = vadd.f32 0.0, %v1597
        %v1599 = vpop.f32.mrb[0].mxu0
        %v1600 = vpop.f32.mrb[0].mxu0
        %v1601 = vadd.f32 0.0, %v1600
        %v1602 = vpop.f32.mrb[0].mxu0
        %1603 = vdwg.mxu0
        %v1608 = vunpack.c.l.b16 %v1441
        %v1609 = vunpack.c.l.b16 %v1442
        %v1610 = vunpack.c.l.b16 %v1443
        %v1611 = vunpack.c.l.b16 %v1444
        %v1612 = vpack.c.b16 %v1609, %v1608
        %v1613 = vpack.c.b16 %v1611, %v1610
        %1616 = vmatprep.subr.bf16.mxu0 0
        %1617 = vmatpush1.bf16.msra.mxu0 %v1612
        %1618 = vmatprep.subr.bf16.mxu0 0
        %1619 = vmatpush1.bf16.msra.mxu0 %v1613
        %1620 = vmatprep.subr.bf16.mxu0 0
        %1621 = vmatpush1.bf16.msra.mxu0 0
        %1622 = vmatprep.subr.bf16.mxu0 0
        %1623 = vmatpush1.bf16.msra.mxu0 0
        %1624 = vmatprep.subr.bf16.mxu0 0
        %1625 = vmatpush1.bf16.msra.mxu0 0
        %1626 = vmatprep.subr.bf16.mxu0 0
        %1627 = vmatpush1.bf16.msra.mxu0 0
        %1628 = vmatprep.subr.bf16.mxu0 0
        %1629 = vmatpush1.bf16.msra.mxu0 0
        %1630 = vmatprep.subr.bf16.mxu0 0
        %1631 = vmatpush1.bf16.msra.mxu0 0
        %1632 = vmatprep.subr.bf16.mxu0 0
        %1633 = vmatpush1.bf16.msra.mxu0 0
        %1634 = vmatprep.subr.bf16.mxu0 0
        %1635 = vmatpush1.bf16.msra.mxu0 0
        %1636 = vmatprep.subr.bf16.mxu0 0
        %1637 = vmatpush1.bf16.msra.mxu0 0
        %1638 = vmatprep.subr.bf16.mxu0 0
        %1639 = vmatpush1.bf16.msra.mxu0 0
        %1640 = vmatprep.subr.bf16.mxu0 0
        %1641 = vmatpush1.bf16.msra.mxu0 0
        %1642 = vmatprep.subr.bf16.mxu0 0
        %1643 = vmatpush1.bf16.msra.mxu0 0
        %1644 = vmatprep.subr.bf16.mxu0 0
        %1645 = vmatpush1.bf16.msra.mxu0 0
        %1646 = vmatprep.subr.bf16.mxu0 0
        %1647 = vmatpush1.bf16.msra.mxu0 0
        %1648 = vmatprep.mubr.bf16.mxu0 0
        %1649 = vmatmul.mubr.bf16.gmra.mrb[0].mxu0 %v1227
        %v1650 = vpop.f32.mrb[0].mxu0
        %v1651 = vadd.f32 0.0, %v1650
        %v1652 = vpop.f32.mrb[0].mxu0
        %v1653 = vpop.f32.mrb[0].mxu0
        %v1654 = vadd.f32 0.0, %v1653
        %v1655 = vpop.f32.mrb[0].mxu0
        %1656 = vdwg.mxu0
        %v1657 = vld [vmem:[#allocation20] sm:$0xf]
        %v1658 = vld [vmem:[#allocation20 + $0x4] sm:$0xf]
        %v1659 = vld [vmem:[#allocation20 + $0x8] sm:$0xf]
        %v1660 = vld [vmem:[#allocation20 + $0xc] sm:$0xf]
        %v1661 = vld [vmem:[#allocation20 + $0x10] sm:$0xf]
        %v1662 = vld [vmem:[#allocation20 + $0x14] sm:$0xf]
        %v1663 = vld [vmem:[#allocation20 + $0x18] sm:$0xf]
        %v1664 = vld [vmem:[#allocation20 + $0x1c] sm:$0xf]
        %v1665 = vld [vmem:[#allocation20 + $0x20] sm:$0xf]
        %v1666 = vld [vmem:[#allocation20 + $0x24] sm:$0xf]
        %v1667 = vld [vmem:[#allocation20 + $0x28] sm:$0xf]
        %v1668 = vld [vmem:[#allocation20 + $0x2c] sm:$0xf]
        %v1669 = vld [vmem:[#allocation20 + $0x30] sm:$0xf]
        %v1670 = vld [vmem:[#allocation20 + $0x34] sm:$0xf]
        %v1671 = vld [vmem:[#allocation20 + $0x38] sm:$0xf]
        %v1672 = vld [vmem:[#allocation20 + $0x3c] sm:$0xf]
        %v1677 = vunpack.c.l.b16 %v1657
        %v1678 = vunpack.c.l.b16 %v1658
        %v1679 = vunpack.c.l.b16 %v1659
        %v1680 = vunpack.c.l.b16 %v1660
        %v1681 = vpack.c.b16 %v1678, %v1677
        %v1682 = vpack.c.b16 %v1680, %v1679
        %1685 = vmatprep.subr.bf16.mxu0 0
        %1686 = vmatpush1.bf16.msra.mxu0 %v1681
        %1687 = vmatprep.subr.bf16.mxu0 0
        %1688 = vmatpush1.bf16.msra.mxu0 %v1682
        %1689 = vmatprep.subr.bf16.mxu0 0
        %1690 = vmatpush1.bf16.msra.mxu0 0
        %1691 = vmatprep.subr.bf16.mxu0 0
        %1692 = vmatpush1.bf16.msra.mxu0 0
        %1693 = vmatprep.subr.bf16.mxu0 0
        %1694 = vmatpush1.bf16.msra.mxu0 0
        %1695 = vmatprep.subr.bf16.mxu0 0
        %1696 = vmatpush1.bf16.msra.mxu0 0
        %1697 = vmatprep.subr.bf16.mxu0 0
        %1698 = vmatpush1.bf16.msra.mxu0 0
        %1699 = vmatprep.subr.bf16.mxu0 0
        %1700 = vmatpush1.bf16.msra.mxu0 0
        %1701 = vmatprep.subr.bf16.mxu0 0
        %1702 = vmatpush1.bf16.msra.mxu0 0
        %1703 = vmatprep.subr.bf16.mxu0 0
        %1704 = vmatpush1.bf16.msra.mxu0 0
        %1705 = vmatprep.subr.bf16.mxu0 0
        %1706 = vmatpush1.bf16.msra.mxu0 0
        %1707 = vmatprep.subr.bf16.mxu0 0
        %1708 = vmatpush1.bf16.msra.mxu0 0
        %1709 = vmatprep.subr.bf16.mxu0 0
        %1710 = vmatpush1.bf16.msra.mxu0 0
        %1711 = vmatprep.subr.bf16.mxu0 0
        %1712 = vmatpush1.bf16.msra.mxu0 0
        %1713 = vmatprep.subr.bf16.mxu0 0
        %1714 = vmatpush1.bf16.msra.mxu0 0
        %1715 = vmatprep.subr.bf16.mxu0 0
        %1716 = vmatpush1.bf16.msra.mxu0 0
        %1717 = vmatprep.mubr.bf16.mxu0 0
        %1718 = vmatmul.mubr.bf16.gmra.mrb[0].mxu0 %v1227
        %v1719 = vpop.f32.mrb[0].mxu0
        %v1720 = vadd.f32 0.0, %v1719
        %v1721 = vpop.f32.mrb[0].mxu0
        %v1722 = vpop.f32.mrb[0].mxu0
        %v1723 = vadd.f32 0.0, %v1722
        %v1724 = vpop.f32.mrb[0].mxu0
        %1725 = vdwg.mxu0
        %v1730 = vunpack.c.l.b16 %v1661
        %v1731 = vunpack.c.l.b16 %v1662
        %v1732 = vunpack.c.l.b16 %v1663
        %v1733 = vunpack.c.l.b16 %v1664
        %v1734 = vpack.c.b16 %v1731, %v1730
        %v1735 = vpack.c.b16 %v1733, %v1732
        %1738 = vmatprep.subr.bf16.mxu0 0
        %1739 = vmatpush1.bf16.msra.mxu0 %v1734
        %1740 = vmatprep.subr.bf16.mxu0 0
        %1741 = vmatpush1.bf16.msra.mxu0 %v1735
        %1742 = vmatprep.subr.bf16.mxu0 0
        %1743 = vmatpush1.bf16.msra.mxu0 0
        %1744 = vmatprep.subr.bf16.mxu0 0
        %1745 = vmatpush1.bf16.msra.mxu0 0
        %1746 = vmatprep.subr.bf16.mxu0 0
        %1747 = vmatpush1.bf16.msra.mxu0 0
        %1748 = vmatprep.subr.bf16.mxu0 0
        %1749 = vmatpush1.bf16.msra.mxu0 0
        %1750 = vmatprep.subr.bf16.mxu0 0
        %1751 = vmatpush1.bf16.msra.mxu0 0
        %1752 = vmatprep.subr.bf16.mxu0 0
        %1753 = vmatpush1.bf16.msra.mxu0 0
        %1754 = vmatprep.subr.bf16.mxu0 0
        %1755 = vmatpush1.bf16.msra.mxu0 0
        %1756 = vmatprep.subr.bf16.mxu0 0
        %1757 = vmatpush1.bf16.msra.mxu0 0
        %1758 = vmatprep.subr.bf16.mxu0 0
        %1759 = vmatpush1.bf16.msra.mxu0 0
        %1760 = vmatprep.subr.bf16.mxu0 0
        %1761 = vmatpush1.bf16.msra.mxu0 0
        %1762 = vmatprep.subr.bf16.mxu0 0
        %1763 = vmatpush1.bf16.msra.mxu0 0
        %1764 = vmatprep.subr.bf16.mxu0 0
        %1765 = vmatpush1.bf16.msra.mxu0 0
        %1766 = vmatprep.subr.bf16.mxu0 0
        %1767 = vmatpush1.bf16.msra.mxu0 0
        %1768 = vmatprep.subr.bf16.mxu0 0
        %1769 = vmatpush1.bf16.msra.mxu0 0
        %1770 = vmatprep.mubr.bf16.mxu0 0
        %1771 = vmatmul.mubr.bf16.gmra.mrb[0].mxu0 %v1227
        %v1772 = vpop.f32.mrb[0].mxu0
        %v1773 = vadd.f32 0.0, %v1772
        %v1774 = vpop.f32.mrb[0].mxu0
        %v1775 = vpop.f32.mrb[0].mxu0
        %v1776 = vadd.f32 0.0, %v1775
        %v1777 = vpop.f32.mrb[0].mxu0
        %1778 = vdwg.mxu0
        %v1783 = vunpack.c.l.b16 %v1665
        %v1784 = vunpack.c.l.b16 %v1666
        %v1785 = vunpack.c.l.b16 %v1667
        %v1786 = vunpack.c.l.b16 %v1668
        %v1787 = vpack.c.b16 %v1784, %v1783
        %v1788 = vpack.c.b16 %v1786, %v1785
        %1791 = vmatprep.subr.bf16.mxu0 0
        %1792 = vmatpush1.bf16.msra.mxu0 %v1787
        %1793 = vmatprep.subr.bf16.mxu0 0
        %1794 = vmatpush1.bf16.msra.mxu0 %v1788
        %1795 = vmatprep.subr.bf16.mxu0 0
        %1796 = vmatpush1.bf16.msra.mxu0 0
        %1797 = vmatprep.subr.bf16.mxu0 0
        %1798 = vmatpush1.bf16.msra.mxu0 0
        %1799 = vmatprep.subr.bf16.mxu0 0
        %1800 = vmatpush1.bf16.msra.mxu0 0
        %1801 = vmatprep.subr.bf16.mxu0 0
        %1802 = vmatpush1.bf16.msra.mxu0 0
        %1803 = vmatprep.subr.bf16.mxu0 0
        %1804 = vmatpush1.bf16.msra.mxu0 0
        %1805 = vmatprep.subr.bf16.mxu0 0
        %1806 = vmatpush1.bf16.msra.mxu0 0
        %1807 = vmatprep.subr.bf16.mxu0 0
        %1808 = vmatpush1.bf16.msra.mxu0 0
        %1809 = vmatprep.subr.bf16.mxu0 0
        %1810 = vmatpush1.bf16.msra.mxu0 0
        %1811 = vmatprep.subr.bf16.mxu0 0
        %1812 = vmatpush1.bf16.msra.mxu0 0
        %1813 = vmatprep.subr.bf16.mxu0 0
        %1814 = vmatpush1.bf16.msra.mxu0 0
        %1815 = vmatprep.subr.bf16.mxu0 0
        %1816 = vmatpush1.bf16.msra.mxu0 0
        %1817 = vmatprep.subr.bf16.mxu0 0
        %1818 = vmatpush1.bf16.msra.mxu0 0
        %1819 = vmatprep.subr.bf16.mxu0 0
        %1820 = vmatpush1.bf16.msra.mxu0 0
        %1821 = vmatprep.subr.bf16.mxu0 0
        %1822 = vmatpush1.bf16.msra.mxu0 0
        %1823 = vmatprep.mubr.bf16.mxu0 0
        %1824 = vmatmul.mubr.bf16.gmra.mrb[0].mxu0 %v1227
        %v1825 = vpop.f32.mrb[0].mxu0
        %v1826 = vadd.f32 0.0, %v1825
        %v1827 = vpop.f32.mrb[0].mxu0
        %v1828 = vpop.f32.mrb[0].mxu0
        %v1829 = vadd.f32 0.0, %v1828
        %v1830 = vpop.f32.mrb[0].mxu0
        %1831 = vdwg.mxu0
        %v1836 = vunpack.c.l.b16 %v1669
        %v1837 = vunpack.c.l.b16 %v1670
        %v1838 = vunpack.c.l.b16 %v1671
        %v1839 = vunpack.c.l.b16 %v1672
        %v1840 = vpack.c.b16 %v1837, %v1836
        %v1841 = vpack.c.b16 %v1839, %v1838
        %1844 = vmatprep.subr.bf16.mxu0 0
        %1845 = vmatpush1.bf16.msra.mxu0 %v1840
        %1846 = vmatprep.subr.bf16.mxu0 0
        %1847 = vmatpush1.bf16.msra.mxu0 %v1841
        %1848 = vmatprep.subr.bf16.mxu0 0
        %1849 = vmatpush1.bf16.msra.mxu0 0
        %1850 = vmatprep.subr.bf16.mxu0 0
        %1851 = vmatpush1.bf16.msra.mxu0 0
        %1852 = vmatprep.subr.bf16.mxu0 0
        %1853 = vmatpush1.bf16.msra.mxu0 0
        %1854 = vmatprep.subr.bf16.mxu0 0
        %1855 = vmatpush1.bf16.msra.mxu0 0
        %1856 = vmatprep.subr.bf16.mxu0 0
        %1857 = vmatpush1.bf16.msra.mxu0 0
        %1858 = vmatprep.subr.bf16.mxu0 0
        %1859 = vmatpush1.bf16.msra.mxu0 0
        %1860 = vmatprep.subr.bf16.mxu0 0
        %1861 = vmatpush1.bf16.msra.mxu0 0
        %1862 = vmatprep.subr.bf16.mxu0 0
        %1863 = vmatpush1.bf16.msra.mxu0 0
        %1864 = vmatprep.subr.bf16.mxu0 0
        %1865 = vmatpush1.bf16.msra.mxu0 0
        %1866 = vmatprep.subr.bf16.mxu0 0
        %1867 = vmatpush1.bf16.msra.mxu0 0
        %1868 = vmatprep.subr.bf16.mxu0 0
        %1869 = vmatpush1.bf16.msra.mxu0 0
        %1870 = vmatprep.subr.bf16.mxu0 0
        %1871 = vmatpush1.bf16.msra.mxu0 0
        %1872 = vmatprep.subr.bf16.mxu0 0
        %1873 = vmatpush1.bf16.msra.mxu0 0
        %1874 = vmatprep.subr.bf16.mxu0 0
        %1875 = vmatpush1.bf16.msra.mxu0 0
        %1876 = vmatprep.mubr.bf16.mxu0 0
        %1877 = vmatmul.mubr.bf16.gmra.mrb[0].mxu0 %v1227
        %v1878 = vpop.f32.mrb[0].mxu0
        %v1879 = vadd.f32 0.0, %v1878
        %v1880 = vpop.f32.mrb[0].mxu0
        %v1881 = vpop.f32.mrb[0].mxu0
        %v1882 = vadd.f32 0.0, %v1881
        %v1883 = vpop.f32.mrb[0].mxu0
        %1884 = vdwg.mxu0
        %v1885 = vpack.c.bf16 %v1267, %v1264
        %v1886 = vpack.c.bf16 %v1320, %v1317
        %v1887 = vpack.c.bf16 %v1373, %v1370
        %v1888 = vpack.c.bf16 %v1426, %v1423
        %v1889 = vpack.c.bf16 %v1495, %v1492
        %v1890 = vpack.c.bf16 %v1548, %v1545
        %v1891 = vpack.c.bf16 %v1601, %v1598
        %v1892 = vpack.c.bf16 %v1654, %v1651
        %vm1893 = vcmask 64512
        %v1895 = vsel %vm1893, %v1885, 0
        %v1898 = vsel %vm1893, %v1889, 0
        %1900 = vmatprep.subr.bf16.mxu0 0
        %1901 = vmatpush1.bf16.xpose.msra.mxu0 %v1898
        %1902 = vmatprep.subr.bf16.mxu0 0
        %1903 = vmatpush1.bf16.xpose.msra.mxu0 0
        %1904 = vmatprep.subr.bf16.mxu0 0
        %1905 = vmatpush1.bf16.xpose.msra.mxu0 0
        %1906 = vmatprep.subr.bf16.mxu0 0
        %1907 = vmatpush1.bf16.xpose.msra.mxu0 0
        %1908 = vmatprep.subr.bf16.mxu0 0
        %1909 = vmatpush1.bf16.xpose.msra.mxu0 0
        %1910 = vmatprep.subr.bf16.mxu0 0
        %1911 = vmatpush1.bf16.xpose.msra.mxu0 0
        %1912 = vmatprep.subr.bf16.mxu0 0
        %1913 = vmatpush1.bf16.xpose.msra.mxu0 0
        %1914 = vmatprep.subr.bf16.mxu0 0
        %1915 = vmatpush1.bf16.xpose.msra.mxu0 0
        %1916 = vmatprep.subr.bf16.mxu0 0
        %1917 = vmatpush1.bf16.xpose.msra.mxu0 0
        %1918 = vmatprep.subr.bf16.mxu0 0
        %1919 = vmatpush1.bf16.xpose.msra.mxu0 0
        %1920 = vmatprep.subr.bf16.mxu0 0
        %1921 = vmatpush1.bf16.xpose.msra.mxu0 0
        %1922 = vmatprep.subr.bf16.mxu0 0
        %1923 = vmatpush1.bf16.xpose.msra.mxu0 0
        %1924 = vmatprep.subr.bf16.mxu0 0
        %1925 = vmatpush1.bf16.xpose.msra.mxu0 0
        %1926 = vmatprep.subr.bf16.mxu0 0
        %1927 = vmatpush1.bf16.xpose.msra.mxu0 0
        %1928 = vmatprep.subr.bf16.mxu0 0
        %1929 = vmatpush1.bf16.xpose.msra.mxu0 0
        %1930 = vmatprep.subr.bf16.mxu0 0
        %1931 = vmatpush1.bf16.xpose.msra.mxu0 0
        %1932 = vmatprep.mubr.bf16.mxu0 0
        %1933 = vmatmul.mubr.bf16.gmra.mrb[0].mxu0 %v1895
        %v1934 = vpop.f32.mrb[0].mxu0
        %v1935 = vadd.f32 0.0, %v1934
        %v1936 = vpop.f32.mrb[0].mxu0
        %v1937 = vpop.f32.mrb[0].mxu0
        %v1938 = vadd.f32 0.0, %v1937
        %v1939 = vpop.f32.mrb[0].mxu0
        %1940 = vdwg.mxu0
        %v1942 = vsel %vm1893, %v1886, 0
        %v1945 = vsel %vm1893, %v1890, 0
        %1947 = vmatprep.subr.bf16.mxu0 0
        %1948 = vmatpush1.bf16.xpose.msra.mxu0 %v1945
        %1949 = vmatprep.subr.bf16.mxu0 0
        %1950 = vmatpush1.bf16.xpose.msra.mxu0 0
        %1951 = vmatprep.subr.bf16.mxu0 0
        %1952 = vmatpush1.bf16.xpose.msra.mxu0 0
        %1953 = vmatprep.subr.bf16.mxu0 0
        %1954 = vmatpush1.bf16.xpose.msra.mxu0 0
        %1955 = vmatprep.subr.bf16.mxu0 0
        %1956 = vmatpush1.bf16.xpose.msra.mxu0 0
        %1957 = vmatprep.subr.bf16.mxu0 0
        %1958 = vmatpush1.bf16.xpose.msra.mxu0 0
        %1959 = vmatprep.subr.bf16.mxu0 0
        %1960 = vmatpush1.bf16.xpose.msra.mxu0 0
        %1961 = vmatprep.subr.bf16.mxu0 0
        %1962 = vmatpush1.bf16.xpose.msra.mxu0 0
        %1963 = vmatprep.subr.bf16.mxu0 0
        %1964 = vmatpush1.bf16.xpose.msra.mxu0 0
        %1965 = vmatprep.subr.bf16.mxu0 0
        %1966 = vmatpush1.bf16.xpose.msra.mxu0 0
        %1967 = vmatprep.subr.bf16.mxu0 0
        %1968 = vmatpush1.bf16.xpose.msra.mxu0 0
        %1969 = vmatprep.subr.bf16.mxu0 0
        %1970 = vmatpush1.bf16.xpose.msra.mxu0 0
        %1971 = vmatprep.subr.bf16.mxu0 0
        %1972 = vmatpush1.bf16.xpose.msra.mxu0 0
        %1973 = vmatprep.subr.bf16.mxu0 0
        %1974 = vmatpush1.bf16.xpose.msra.mxu0 0
        %1975 = vmatprep.subr.bf16.mxu0 0
        %1976 = vmatpush1.bf16.xpose.msra.mxu0 0
        %1977 = vmatprep.subr.bf16.mxu0 0
        %1978 = vmatpush1.bf16.xpose.msra.mxu0 0
        %1979 = vmatprep.mubr.bf16.mxu0 0
        %1980 = vmatmul.mubr.bf16.gmra.mrb[0].mxu0 %v1942
        %v1981 = vpop.f32.mrb[0].mxu0
        %v1982 = vadd.f32 0.0, %v1981
        %v1983 = vpop.f32.mrb[0].mxu0
        %v1984 = vpop.f32.mrb[0].mxu0
        %v1985 = vadd.f32 0.0, %v1984
        %v1986 = vpop.f32.mrb[0].mxu0
        %1987 = vdwg.mxu0
        %v1989 = vsel %vm1893, %v1887, 0
        %v1992 = vsel %vm1893, %v1891, 0
        %1994 = vmatprep.subr.bf16.mxu0 0
        %1995 = vmatpush1.bf16.xpose.msra.mxu0 %v1992
        %1996 = vmatprep.subr.bf16.mxu0 0
        %1997 = vmatpush1.bf16.xpose.msra.mxu0 0
        %1998 = vmatprep.subr.bf16.mxu0 0
        %1999 = vmatpush1.bf16.xpose.msra.mxu0 0
        %2000 = vmatprep.subr.bf16.mxu0 0
        %2001 = vmatpush1.bf16.xpose.msra.mxu0 0
        %2002 = vmatprep.subr.bf16.mxu0 0
        %2003 = vmatpush1.bf16.xpose.msra.mxu0 0
        %2004 = vmatprep.subr.bf16.mxu0 0
        %2005 = vmatpush1.bf16.xpose.msra.mxu0 0
        %2006 = vmatprep.subr.bf16.mxu0 0
        %2007 = vmatpush1.bf16.xpose.msra.mxu0 0
        %2008 = vmatprep.subr.bf16.mxu0 0
        %2009 = vmatpush1.bf16.xpose.msra.mxu0 0
        %2010 = vmatprep.subr.bf16.mxu0 0
        %2011 = vmatpush1.bf16.xpose.msra.mxu0 0
        %2012 = vmatprep.subr.bf16.mxu0 0
        %2013 = vmatpush1.bf16.xpose.msra.mxu0 0
        %2014 = vmatprep.subr.bf16.mxu0 0
        %2015 = vmatpush1.bf16.xpose.msra.mxu0 0
        %2016 = vmatprep.subr.bf16.mxu0 0
        %2017 = vmatpush1.bf16.xpose.msra.mxu0 0
        %2018 = vmatprep.subr.bf16.mxu0 0
        %2019 = vmatpush1.bf16.xpose.msra.mxu0 0
        %2020 = vmatprep.subr.bf16.mxu0 0
        %2021 = vmatpush1.bf16.xpose.msra.mxu0 0
        %2022 = vmatprep.subr.bf16.mxu0 0
        %2023 = vmatpush1.bf16.xpose.msra.mxu0 0
        %2024 = vmatprep.subr.bf16.mxu0 0
        %2025 = vmatpush1.bf16.xpose.msra.mxu0 0
        %2026 = vmatprep.mubr.bf16.mxu0 0
        %2027 = vmatmul.mubr.bf16.gmra.mrb[0].mxu0 %v1989
        %v2028 = vpop.f32.mrb[0].mxu0
        %v2029 = vadd.f32 0.0, %v2028
        %v2030 = vpop.f32.mrb[0].mxu0
        %v2031 = vpop.f32.mrb[0].mxu0
        %v2032 = vadd.f32 0.0, %v2031
        %v2033 = vpop.f32.mrb[0].mxu0
        %2034 = vdwg.mxu0
        %v2036 = vsel %vm1893, %v1888, 0
        %v2039 = vsel %vm1893, %v1892, 0
        %2041 = vmatprep.subr.bf16.mxu0 0
        %2042 = vmatpush1.bf16.xpose.msra.mxu0 %v2039
        %2043 = vmatprep.subr.bf16.mxu0 0
        %2044 = vmatpush1.bf16.xpose.msra.mxu0 0
        %2045 = vmatprep.subr.bf16.mxu0 0
        %2046 = vmatpush1.bf16.xpose.msra.mxu0 0
        %2047 = vmatprep.subr.bf16.mxu0 0
        %2048 = vmatpush1.bf16.xpose.msra.mxu0 0
        %2049 = vmatprep.subr.bf16.mxu0 0
        %2050 = vmatpush1.bf16.xpose.msra.mxu0 0
        %2051 = vmatprep.subr.bf16.mxu0 0
        %2052 = vmatpush1.bf16.xpose.msra.mxu0 0
        %2053 = vmatprep.subr.bf16.mxu0 0
        %2054 = vmatpush1.bf16.xpose.msra.mxu0 0
        %2055 = vmatprep.subr.bf16.mxu0 0
        %2056 = vmatpush1.bf16.xpose.msra.mxu0 0
        %2057 = vmatprep.subr.bf16.mxu0 0
        %2058 = vmatpush1.bf16.xpose.msra.mxu0 0
        %2059 = vmatprep.subr.bf16.mxu0 0
        %2060 = vmatpush1.bf16.xpose.msra.mxu0 0
        %2061 = vmatprep.subr.bf16.mxu0 0
        %2062 = vmatpush1.bf16.xpose.msra.mxu0 0
        %2063 = vmatprep.subr.bf16.mxu0 0
        %2064 = vmatpush1.bf16.xpose.msra.mxu0 0
        %2065 = vmatprep.subr.bf16.mxu0 0
        %2066 = vmatpush1.bf16.xpose.msra.mxu0 0
        %2067 = vmatprep.subr.bf16.mxu0 0
        %2068 = vmatpush1.bf16.xpose.msra.mxu0 0
        %2069 = vmatprep.subr.bf16.mxu0 0
        %2070 = vmatpush1.bf16.xpose.msra.mxu0 0
        %2071 = vmatprep.subr.bf16.mxu0 0
        %2072 = vmatpush1.bf16.xpose.msra.mxu0 0
        %2073 = vmatprep.mubr.bf16.mxu0 0
        %2074 = vmatmul.mubr.bf16.gmra.mrb[0].mxu0 %v2036
        %v2075 = vpop.f32.mrb[0].mxu0
        %v2076 = vadd.f32 0.0, %v2075
        %v2077 = vpop.f32.mrb[0].mxu0
        %v2078 = vpop.f32.mrb[0].mxu0
        %v2079 = vadd.f32 0.0, %v2078
        %v2080 = vpop.f32.mrb[0].mxu0
        %2081 = vdwg.mxu0
        %v2082 = vmul.f32 %v1935, 0.35355338
        %v2083 = vmul.f32 %v1938, 0.35355338
        %v2084 = vmul.f32 %v1982, 0.35355338
        %v2085 = vmul.f32 %v1985, 0.35355338
        %v2086 = vmul.f32 %v2029, 0.35355338
        %v2087 = vmul.f32 %v2032, 0.35355338
        %v2088 = vmul.f32 %v2076, 0.35355338
        %v2089 = vmul.f32 %v2079, 0.35355338
        %vm2090 = vcmask 130048
        %v2091 = vsel %vm2090, %v2082, -inf
        %2092 = vmax.xlane.f32.xlu0 %v2091
        %v2093 = vpop.xlane.xlu0 %2092
        %v2094 = vsel %vm2090, %v2083, -inf
        %2095 = vmax.xlane.f32.xlu0 %v2094
        %v2096 = vpop.xlane.xlu0 %2095
        %v2097 = vsel %vm2090, %v2084, -inf
        %2098 = vmax.xlane.f32.xlu0 %v2097
        %v2099 = vpop.xlane.xlu0 %2098
        %v2100 = vsel %vm2090, %v2085, -inf
        %2101 = vmax.xlane.f32.xlu0 %v2100
        %v2102 = vpop.xlane.xlu0 %2101
        %v2103 = vsel %vm2090, %v2086, -inf
        %2104 = vmax.xlane.f32.xlu0 %v2103
        %v2105 = vpop.xlane.xlu0 %2104
        %v2106 = vsel %vm2090, %v2087, -inf
        %2107 = vmax.xlane.f32.xlu0 %v2106
        %v2108 = vpop.xlane.xlu0 %2107
        %v2109 = vsel %vm2090, %v2088, -inf
        %2110 = vmax.xlane.f32.xlu0 %v2109
        %v2111 = vpop.xlane.xlu0 %2110
        %v2112 = vsel %vm2090, %v2089, -inf
        %2113 = vmax.xlane.f32.xlu0 %v2112
        %v2114 = vpop.xlane.xlu0 %2113
        %v2115 = vsub.f32 %v2082, %v2093
        %v2116 = vsub.f32 %v2083, %v2096
        %v2117 = vsub.f32 %v2084, %v2099
        %v2118 = vsub.f32 %v2085, %v2102
        %v2119 = vsub.f32 %v2086, %v2105
        %v2120 = vsub.f32 %v2087, %v2108
        %v2121 = vsub.f32 %v2088, %v2111
        %v2122 = vsub.f32 %v2089, %v2114
        %v2123 = vmul.f32 %v2115, 1.442695
        %v2124 = vpow.pop %v2123
        %v2125 = vmul.f32 %v2116, 1.442695
        %v2126 = vpow.pop %v2125
        %v2127 = vmul.f32 %v2117, 1.442695
        %v2128 = vpow.pop %v2127
        %v2129 = vmul.f32 %v2118, 1.442695
        %v2130 = vpow.pop %v2129
        %v2131 = vmul.f32 %v2119, 1.442695
        %v2132 = vpow.pop %v2131
        %v2133 = vmul.f32 %v2120, 1.442695
        %v2134 = vpow.pop %v2133
        %v2135 = vmul.f32 %v2121, 1.442695
        %v2136 = vpow.pop %v2135
        %v2137 = vmul.f32 %v2122, 1.442695
        %v2138 = vpow.pop %v2137
        %v2139 = vsel %vm2090, %v2124, 0.0
        %2140 = vadd.xlane.f32.xlu0 %v2139
        %v2141 = vpop.xlane.xlu0 %2140
        %v2142 = vsel %vm2090, %v2126, 0.0
        %2143 = vadd.xlane.f32.xlu0 %v2142
        %v2144 = vpop.xlane.xlu0 %2143
        %v2145 = vsel %vm2090, %v2128, 0.0
        %2146 = vadd.xlane.f32.xlu0 %v2145
        %v2147 = vpop.xlane.xlu0 %2146
        %v2148 = vsel %vm2090, %v2130, 0.0
        %2149 = vadd.xlane.f32.xlu0 %v2148
        %v2150 = vpop.xlane.xlu0 %2149
        %v2151 = vsel %vm2090, %v2132, 0.0
        %2152 = vadd.xlane.f32.xlu0 %v2151
        %v2153 = vpop.xlane.xlu0 %2152
        %v2154 = vsel %vm2090, %v2134, 0.0
        %2155 = vadd.xlane.f32.xlu0 %v2154
        %v2156 = vpop.xlane.xlu0 %2155
        %v2157 = vsel %vm2090, %v2136, 0.0
        %2158 = vadd.xlane.f32.xlu0 %v2157
        %v2159 = vpop.xlane.xlu0 %2158
        %v2160 = vsel %vm2090, %v2138, 0.0
        %2161 = vadd.xlane.f32.xlu0 %v2160
        %v2162 = vpop.xlane.xlu0 %2161
        %v2163 = vrcp.pop %v2141
        %v2164 = vrcp.pop %v2144
        %v2165 = vrcp.pop %v2147
        %v2166 = vrcp.pop %v2150
        %v2167 = vrcp.pop %v2153
        %v2168 = vrcp.pop %v2156
        %v2169 = vrcp.pop %v2159
        %v2170 = vrcp.pop %v2162
        %v2171 = vmul.f32 %v2124, %v2163
        %v2172 = vmul.f32 %v2126, %v2164
        %v2173 = vmul.f32 %v2128, %v2165
        %v2174 = vmul.f32 %v2130, %v2166
        %v2175 = vmul.f32 %v2132, %v2167
        %v2176 = vmul.f32 %v2134, %v2168
        %v2177 = vmul.f32 %v2136, %v2169
        %v2178 = vmul.f32 %v2138, %v2170
        %v2179 = vpack.c.bf16 %v2172, %v2171
        %v2180 = vpack.c.bf16 %v2174, %v2173
        %v2181 = vpack.c.bf16 %v2176, %v2175
        %v2182 = vpack.c.bf16 %v2178, %v2177
        %v2183 = vpack.c.bf16 %v1723, %v1720
        %v2184 = vpack.c.bf16 %v1776, %v1773
        %v2185 = vpack.c.bf16 %v1829, %v1826
        %v2186 = vpack.c.bf16 %v1882, %v1879
        %v2188 = vsel %vm2090, %v2179, 0
        %2190 = vmatprep.subr.bf16.mxu0 0
        %2191 = vmatpush1.bf16.msra.mxu0 %v2183
        %2192 = vmatprep.subr.bf16.mxu0 0
        %2193 = vmatpush1.bf16.msra.mxu0 0
        %2194 = vmatprep.subr.bf16.mxu0 0
        %2195 = vmatpush1.bf16.msra.mxu0 0
        %2196 = vmatprep.subr.bf16.mxu0 0
        %2197 = vmatpush1.bf16.msra.mxu0 0
        %2198 = vmatprep.subr.bf16.mxu0 0
        %2199 = vmatpush1.bf16.msra.mxu0 0
        %2200 = vmatprep.subr.bf16.mxu0 0
        %2201 = vmatpush1.bf16.msra.mxu0 0
        %2202 = vmatprep.subr.bf16.mxu0 0
        %2203 = vmatpush1.bf16.msra.mxu0 0
        %2204 = vmatprep.subr.bf16.mxu0 0
        %2205 = vmatpush1.bf16.msra.mxu0 0
        %2206 = vmatprep.subr.bf16.mxu0 0
        %2207 = vmatpush1.bf16.msra.mxu0 0
        %2208 = vmatprep.subr.bf16.mxu0 0
        %2209 = vmatpush1.bf16.msra.mxu0 0
        %2210 = vmatprep.subr.bf16.mxu0 0
        %2211 = vmatpush1.bf16.msra.mxu0 0
        %2212 = vmatprep.subr.bf16.mxu0 0
        %2213 = vmatpush1.bf16.msra.mxu0 0
        %2214 = vmatprep.subr.bf16.mxu0 0
        %2215 = vmatpush1.bf16.msra.mxu0 0
        %2216 = vmatprep.subr.bf16.mxu0 0
        %2217 = vmatpush1.bf16.msra.mxu0 0
        %2218 = vmatprep.subr.bf16.mxu0 0
        %2219 = vmatpush1.bf16.msra.mxu0 0
        %2220 = vmatprep.subr.bf16.mxu0 0
        %2221 = vmatpush1.bf16.msra.mxu0 0
        %2222 = vmatprep.mubr.bf16.mxu0 0
        %2223 = vmatmul.mubr.bf16.gmra.mrb[0].mxu0 %v2188
        %v2224 = vpop.f32.mrb[0].mxu0
        %v2225 = vadd.f32 0.0, %v2224
        %v2226 = vpop.f32.mrb[0].mxu0
        %v2227 = vpop.f32.mrb[0].mxu0
        %v2228 = vadd.f32 0.0, %v2227
        %v2229 = vpop.f32.mrb[0].mxu0
        %2230 = vdwg.mxu0
        %v2232 = vsel %vm2090, %v2180, 0
        %2234 = vmatprep.subr.bf16.mxu0 0
        %2235 = vmatpush1.bf16.msra.mxu0 %v2184
        %2236 = vmatprep.subr.bf16.mxu0 0
        %2237 = vmatpush1.bf16.msra.mxu0 0
        %2238 = vmatprep.subr.bf16.mxu0 0
        %2239 = vmatpush1.bf16.msra.mxu0 0
        %2240 = vmatprep.subr.bf16.mxu0 0
        %2241 = vmatpush1.bf16.msra.mxu0 0
        %2242 = vmatprep.subr.bf16.mxu0 0
        %2243 = vmatpush1.bf16.msra.mxu0 0
        %2244 = vmatprep.subr.bf16.mxu0 0
        %2245 = vmatpush1.bf16.msra.mxu0 0
        %2246 = vmatprep.subr.bf16.mxu0 0
        %2247 = vmatpush1.bf16.msra.mxu0 0
        %2248 = vmatprep.subr.bf16.mxu0 0
        %2249 = vmatpush1.bf16.msra.mxu0 0
        %2250 = vmatprep.subr.bf16.mxu0 0
        %2251 = vmatpush1.bf16.msra.mxu0 0
        %2252 = vmatprep.subr.bf16.mxu0 0
        %2253 = vmatpush1.bf16.msra.mxu0 0
        %2254 = vmatprep.subr.bf16.mxu0 0
        %2255 = vmatpush1.bf16.msra.mxu0 0
        %2256 = vmatprep.subr.bf16.mxu0 0
        %2257 = vmatpush1.bf16.msra.mxu0 0
        %2258 = vmatprep.subr.bf16.mxu0 0
        %2259 = vmatpush1.bf16.msra.mxu0 0
        %2260 = vmatprep.subr.bf16.mxu0 0
        %2261 = vmatpush1.bf16.msra.mxu0 0
        %2262 = vmatprep.subr.bf16.mxu0 0
        %2263 = vmatpush1.bf16.msra.mxu0 0
        %2264 = vmatprep.subr.bf16.mxu0 0
        %2265 = vmatpush1.bf16.msra.mxu0 0
        %2266 = vmatprep.mubr.bf16.mxu0 0
        %2267 = vmatmul.mubr.bf16.gmra.mrb[0].mxu0 %v2232
        %v2268 = vpop.f32.mrb[0].mxu0
        %v2269 = vadd.f32 0.0, %v2268
        %v2270 = vpop.f32.mrb[0].mxu0
        %v2271 = vpop.f32.mrb[0].mxu0
        %v2272 = vadd.f32 0.0, %v2271
        %v2273 = vpop.f32.mrb[0].mxu0
        %2274 = vdwg.mxu0
        %v2276 = vsel %vm2090, %v2181, 0
        %2278 = vmatprep.subr.bf16.mxu0 0
        %2279 = vmatpush1.bf16.msra.mxu0 %v2185
        %2280 = vmatprep.subr.bf16.mxu0 0
        %2281 = vmatpush1.bf16.msra.mxu0 0
        %2282 = vmatprep.subr.bf16.mxu0 0
        %2283 = vmatpush1.bf16.msra.mxu0 0
        %2284 = vmatprep.subr.bf16.mxu0 0
        %2285 = vmatpush1.bf16.msra.mxu0 0
        %2286 = vmatprep.subr.bf16.mxu0 0
        %2287 = vmatpush1.bf16.msra.mxu0 0
        %2288 = vmatprep.subr.bf16.mxu0 0
        %2289 = vmatpush1.bf16.msra.mxu0 0
        %2290 = vmatprep.subr.bf16.mxu0 0
        %2291 = vmatpush1.bf16.msra.mxu0 0
        %2292 = vmatprep.subr.bf16.mxu0 0
        %2293 = vmatpush1.bf16.msra.mxu0 0
        %2294 = vmatprep.subr.bf16.mxu0 0
        %2295 = vmatpush1.bf16.msra.mxu0 0
        %2296 = vmatprep.subr.bf16.mxu0 0
        %2297 = vmatpush1.bf16.msra.mxu0 0
        %2298 = vmatprep.subr.bf16.mxu0 0
        %2299 = vmatpush1.bf16.msra.mxu0 0
        %2300 = vmatprep.subr.bf16.mxu0 0
        %2301 = vmatpush1.bf16.msra.mxu0 0
        %2302 = vmatprep.subr.bf16.mxu0 0
        %2303 = vmatpush1.bf16.msra.mxu0 0
        %2304 = vmatprep.subr.bf16.mxu0 0
        %2305 = vmatpush1.bf16.msra.mxu0 0
        %2306 = vmatprep.subr.bf16.mxu0 0
        %2307 = vmatpush1.bf16.msra.mxu0 0
        %2308 = vmatprep.subr.bf16.mxu0 0
        %2309 = vmatpush1.bf16.msra.mxu0 0
        %2310 = vmatprep.mubr.bf16.mxu0 0
        %2311 = vmatmul.mubr.bf16.gmra.mrb[0].mxu0 %v2276
        %v2312 = vpop.f32.mrb[0].mxu0
        %v2313 = vadd.f32 0.0, %v2312
        %v2314 = vpop.f32.mrb[0].mxu0
        %v2315 = vpop.f32.mrb[0].mxu0
        %v2316 = vadd.f32 0.0, %v2315
        %v2317 = vpop.f32.mrb[0].mxu0
        %2318 = vdwg.mxu0
        %v2320 = vsel %vm2090, %v2182, 0
        %2322 = vmatprep.subr.bf16.mxu0 0
        %2323 = vmatpush1.bf16.msra.mxu0 %v2186
        %2324 = vmatprep.subr.bf16.mxu0 0
        %2325 = vmatpush1.bf16.msra.mxu0 0
        %2326 = vmatprep.subr.bf16.mxu0 0
        %2327 = vmatpush1.bf16.msra.mxu0 0
        %2328 = vmatprep.subr.bf16.mxu0 0
        %2329 = vmatpush1.bf16.msra.mxu0 0
        %2330 = vmatprep.subr.bf16.mxu0 0
        %2331 = vmatpush1.bf16.msra.mxu0 0
        %2332 = vmatprep.subr.bf16.mxu0 0
        %2333 = vmatpush1.bf16.msra.mxu0 0
        %2334 = vmatprep.subr.bf16.mxu0 0
        %2335 = vmatpush1.bf16.msra.mxu0 0
        %2336 = vmatprep.subr.bf16.mxu0 0
        %2337 = vmatpush1.bf16.msra.mxu0 0
        %2338 = vmatprep.subr.bf16.mxu0 0
        %2339 = vmatpush1.bf16.msra.mxu0 0
        %2340 = vmatprep.subr.bf16.mxu0 0
        %2341 = vmatpush1.bf16.msra.mxu0 0
        %2342 = vmatprep.subr.bf16.mxu0 0
        %2343 = vmatpush1.bf16.msra.mxu0 0
        %2344 = vmatprep.subr.bf16.mxu0 0
        %2345 = vmatpush1.bf16.msra.mxu0 0
        %2346 = vmatprep.subr.bf16.mxu0 0
        %2347 = vmatpush1.bf16.msra.mxu0 0
        %2348 = vmatprep.subr.bf16.mxu0 0
        %2349 = vmatpush1.bf16.msra.mxu0 0
        %2350 = vmatprep.subr.bf16.mxu0 0
        %2351 = vmatpush1.bf16.msra.mxu0 0
        %2352 = vmatprep.subr.bf16.mxu0 0
        %2353 = vmatpush1.bf16.msra.mxu0 0
        %2354 = vmatprep.mubr.bf16.mxu0 0
        %2355 = vmatmul.mubr.bf16.gmra.mrb[0].mxu0 %v2320
        %v2356 = vpop.f32.mrb[0].mxu0
        %v2357 = vadd.f32 0.0, %v2356
        %v2358 = vpop.f32.mrb[0].mxu0
        %v2359 = vpop.f32.mrb[0].mxu0
        %v2360 = vadd.f32 0.0, %v2359
        %v2361 = vpop.f32.mrb[0].mxu0
        %2362 = vdwg.mxu0
        %v2363 = vpack.c.bf16 %v2228, %v2225
        %v2364 = vpack.c.bf16 %v2272, %v2269
        %v2365 = vpack.c.bf16 %v2316, %v2313
        %v2366 = vpack.c.bf16 %v2360, %v2357
        %v2367 = vld [vmem:[#allocation22] sm:$0xf]
        %v2368 = vld [vmem:[#allocation22 + $0x4] sm:$0xf]
        %v2369 = vld [vmem:[#allocation22 + $0x8] sm:$0xf]
        %v2370 = vld [vmem:[#allocation22 + $0xc] sm:$0xf]
        %v2372 = vsel %vm1893, %v2363, 0
        %vm2374 = vcmask 1043456
        %v2376 = vsel %vm2374, %v2367, 0
        %2378 = vmatprep.subr.bf16.mxu0 0
        %2379 = vmatpush1.bf16.msra.mxu0 %v2376
        %2380 = vmatprep.subr.bf16.mxu0 0
        %2381 = vmatpush1.bf16.msra.mxu0 0
        %2382 = vmatprep.subr.bf16.mxu0 0
        %2383 = vmatpush1.bf16.msra.mxu0 0
        %2384 = vmatprep.subr.bf16.mxu0 0
        %2385 = vmatpush1.bf16.msra.mxu0 0
        %2386 = vmatprep.subr.bf16.mxu0 0
        %2387 = vmatpush1.bf16.msra.mxu0 0
        %2388 = vmatprep.subr.bf16.mxu0 0
        %2389 = vmatpush1.bf16.msra.mxu0 0
        %2390 = vmatprep.subr.bf16.mxu0 0
        %2391 = vmatpush1.bf16.msra.mxu0 0
        %2392 = vmatprep.subr.bf16.mxu0 0
        %2393 = vmatpush1.bf16.msra.mxu0 0
        %2394 = vmatprep.subr.bf16.mxu0 0
        %2395 = vmatpush1.bf16.msra.mxu0 0
        %2396 = vmatprep.subr.bf16.mxu0 0
        %2397 = vmatpush1.bf16.msra.mxu0 0
        %2398 = vmatprep.subr.bf16.mxu0 0
        %2399 = vmatpush1.bf16.msra.mxu0 0
        %2400 = vmatprep.subr.bf16.mxu0 0
        %2401 = vmatpush1.bf16.msra.mxu0 0
        %2402 = vmatprep.subr.bf16.mxu0 0
        %2403 = vmatpush1.bf16.msra.mxu0 0
        %2404 = vmatprep.subr.bf16.mxu0 0
        %2405 = vmatpush1.bf16.msra.mxu0 0
        %2406 = vmatprep.subr.bf16.mxu0 0
        %2407 = vmatpush1.bf16.msra.mxu0 0
        %2408 = vmatprep.subr.bf16.mxu0 0
        %2409 = vmatpush1.bf16.msra.mxu0 0
        %2410 = vmatprep.mubr.bf16.mxu0 0
        %2411 = vmatmul.mubr.bf16.gmra.mrb[0].mxu0 %v2372
        %v2412 = vpop.f32.mrb[0].mxu0
        %v2413 = vadd.f32 0.0, %v2412
        %v2414 = vpop.f32.mrb[0].mxu0
        %v2415 = vpop.f32.mrb[0].mxu0
        %v2416 = vadd.f32 0.0, %v2415
        %v2417 = vpop.f32.mrb[0].mxu0
        %2418 = vdwg.mxu0
        %v2420 = vsel %vm1893, %v2364, 0
        %v2423 = vsel %vm2374, %v2368, 0
        %2425 = vmatprep.subr.bf16.mxu0 0
        %2426 = vmatpush1.bf16.msra.mxu0 %v2423
        %2427 = vmatprep.subr.bf16.mxu0 0
        %2428 = vmatpush1.bf16.msra.mxu0 0
        %2429 = vmatprep.subr.bf16.mxu0 0
        %2430 = vmatpush1.bf16.msra.mxu0 0
        %2431 = vmatprep.subr.bf16.mxu0 0
        %2432 = vmatpush1.bf16.msra.mxu0 0
        %2433 = vmatprep.subr.bf16.mxu0 0
        %2434 = vmatpush1.bf16.msra.mxu0 0
        %2435 = vmatprep.subr.bf16.mxu0 0
        %2436 = vmatpush1.bf16.msra.mxu0 0
        %2437 = vmatprep.subr.bf16.mxu0 0
        %2438 = vmatpush1.bf16.msra.mxu0 0
        %2439 = vmatprep.subr.bf16.mxu0 0
        %2440 = vmatpush1.bf16.msra.mxu0 0
        %2441 = vmatprep.subr.bf16.mxu0 0
        %2442 = vmatpush1.bf16.msra.mxu0 0
        %2443 = vmatprep.subr.bf16.mxu0 0
        %2444 = vmatpush1.bf16.msra.mxu0 0
        %2445 = vmatprep.subr.bf16.mxu0 0
        %2446 = vmatpush1.bf16.msra.mxu0 0
        %2447 = vmatprep.subr.bf16.mxu0 0
        %2448 = vmatpush1.bf16.msra.mxu0 0
        %2449 = vmatprep.subr.bf16.mxu0 0
        %2450 = vmatpush1.bf16.msra.mxu0 0
        %2451 = vmatprep.subr.bf16.mxu0 0
        %2452 = vmatpush1.bf16.msra.mxu0 0
        %2453 = vmatprep.subr.bf16.mxu0 0
        %2454 = vmatpush1.bf16.msra.mxu0 0
        %2455 = vmatprep.subr.bf16.mxu0 0
        %2456 = vmatpush1.bf16.msra.mxu0 0
        %2457 = vmatprep.mubr.bf16.mxu0 0
        %2458 = vmatmul.mubr.bf16.gmra.mrb[0].mxu0 %v2420
        %v2459 = vpop.f32.mrb[0].mxu0
        %v2460 = vadd.f32 0.0, %v2459
        %v2461 = vpop.f32.mrb[0].mxu0
        %v2462 = vpop.f32.mrb[0].mxu0
        %v2463 = vadd.f32 0.0, %v2462
        %v2464 = vpop.f32.mrb[0].mxu0
        %2465 = vdwg.mxu0
        %v2467 = vsel %vm1893, %v2365, 0
        %v2470 = vsel %vm2374, %v2369, 0
        %2472 = vmatprep.subr.bf16.mxu0 0
        %2473 = vmatpush1.bf16.msra.mxu0 %v2470
        %2474 = vmatprep.subr.bf16.mxu0 0
        %2475 = vmatpush1.bf16.msra.mxu0 0
        %2476 = vmatprep.subr.bf16.mxu0 0
        %2477 = vmatpush1.bf16.msra.mxu0 0
        %2478 = vmatprep.subr.bf16.mxu0 0
        %2479 = vmatpush1.bf16.msra.mxu0 0
        %2480 = vmatprep.subr.bf16.mxu0 0
        %2481 = vmatpush1.bf16.msra.mxu0 0
        %2482 = vmatprep.subr.bf16.mxu0 0
        %2483 = vmatpush1.bf16.msra.mxu0 0
        %2484 = vmatprep.subr.bf16.mxu0 0
        %2485 = vmatpush1.bf16.msra.mxu0 0
        %2486 = vmatprep.subr.bf16.mxu0 0
        %2487 = vmatpush1.bf16.msra.mxu0 0
        %2488 = vmatprep.subr.bf16.mxu0 0
        %2489 = vmatpush1.bf16.msra.mxu0 0
        %2490 = vmatprep.subr.bf16.mxu0 0
        %2491 = vmatpush1.bf16.msra.mxu0 0
        %2492 = vmatprep.subr.bf16.mxu0 0
        %2493 = vmatpush1.bf16.msra.mxu0 0
        %2494 = vmatprep.subr.bf16.mxu0 0
        %2495 = vmatpush1.bf16.msra.mxu0 0
        %2496 = vmatprep.subr.bf16.mxu0 0
        %2497 = vmatpush1.bf16.msra.mxu0 0
        %2498 = vmatprep.subr.bf16.mxu0 0
        %2499 = vmatpush1.bf16.msra.mxu0 0
        %2500 = vmatprep.subr.bf16.mxu0 0
        %2501 = vmatpush1.bf16.msra.mxu0 0
        %2502 = vmatprep.subr.bf16.mxu0 0
        %2503 = vmatpush1.bf16.msra.mxu0 0
        %2504 = vmatprep.mubr.bf16.mxu0 0
        %2505 = vmatmul.mubr.bf16.gmra.mrb[0].mxu0 %v2467
        %v2506 = vpop.f32.mrb[0].mxu0
        %v2507 = vadd.f32 0.0, %v2506
        %v2508 = vpop.f32.mrb[0].mxu0
        %v2509 = vpop.f32.mrb[0].mxu0
        %v2510 = vadd.f32 0.0, %v2509
        %v2511 = vpop.f32.mrb[0].mxu0
        %2512 = vdwg.mxu0
        %v2514 = vsel %vm1893, %v2366, 0
        %v2517 = vsel %vm2374, %v2370, 0
        %2519 = vmatprep.subr.bf16.mxu0 0
        %2520 = vmatpush1.bf16.msra.mxu0 %v2517
        %2521 = vmatprep.subr.bf16.mxu0 0
        %2522 = vmatpush1.bf16.msra.mxu0 0
        %2523 = vmatprep.subr.bf16.mxu0 0
        %2524 = vmatpush1.bf16.msra.mxu0 0
        %2525 = vmatprep.subr.bf16.mxu0 0
        %2526 = vmatpush1.bf16.msra.mxu0 0
        %2527 = vmatprep.subr.bf16.mxu0 0
        %2528 = vmatpush1.bf16.msra.mxu0 0
        %2529 = vmatprep.subr.bf16.mxu0 0
        %2530 = vmatpush1.bf16.msra.mxu0 0
        %2531 = vmatprep.subr.bf16.mxu0 0
        %2532 = vmatpush1.bf16.msra.mxu0 0
        %2533 = vmatprep.subr.bf16.mxu0 0
        %2534 = vmatpush1.bf16.msra.mxu0 0
        %2535 = vmatprep.subr.bf16.mxu0 0
        %2536 = vmatpush1.bf16.msra.mxu0 0
        %2537 = vmatprep.subr.bf16.mxu0 0
        %2538 = vmatpush1.bf16.msra.mxu0 0
        %2539 = vmatprep.subr.bf16.mxu0 0
        %2540 = vmatpush1.bf16.msra.mxu0 0
        %2541 = vmatprep.subr.bf16.mxu0 0
        %2542 = vmatpush1.bf16.msra.mxu0 0
        %2543 = vmatprep.subr.bf16.mxu0 0
        %2544 = vmatpush1.bf16.msra.mxu0 0
        %2545 = vmatprep.subr.bf16.mxu0 0
        %2546 = vmatpush1.bf16.msra.mxu0 0
        %2547 = vmatprep.subr.bf16.mxu0 0
        %2548 = vmatpush1.bf16.msra.mxu0 0
        %2549 = vmatprep.subr.bf16.mxu0 0
        %2550 = vmatpush1.bf16.msra.mxu0 0
        %2551 = vmatprep.mubr.bf16.mxu0 0
        %2552 = vmatmul.mubr.bf16.gmra.mrb[0].mxu0 %v2514
        %v2553 = vpop.f32.mrb[0].mxu0
        %v2554 = vadd.f32 0.0, %v2553
        %v2555 = vpop.f32.mrb[0].mxu0
        %v2556 = vpop.f32.mrb[0].mxu0
        %v2557 = vadd.f32 0.0, %v2556
        %v2558 = vpop.f32.mrb[0].mxu0
        %2559 = vdwg.mxu0
        %v2560 = vsel %vm1151, %v2413, 0.0
        %v2561 = vsel %vm1151, %v2460, 0.0
        %v2562 = vadd.f32 %v2560, %v2561
        %v2563 = vsel %vm1151, %v2507, 0.0
        %v2564 = vadd.f32 %v2562, %v2563
        %v2565 = vsel %vm1151, %v2554, 0.0
        %v2566 = vadd.f32 %v2564, %v2565
        %v2567 = vsel %vm1151, %v2416, 0.0
        %v2568 = vsel %vm1151, %v2463, 0.0
        %v2569 = vadd.f32 %v2567, %v2568
        %v2570 = vsel %vm1151, %v2510, 0.0
        %v2571 = vadd.f32 %v2569, %v2570
        %v2572 = vsel %vm1151, %v2557, 0.0
        %v2573 = vadd.f32 %v2571, %v2572
        %v2574 = vld [vmem:[#allocation23] sm:$0x1]
        %v2576 = vlaneseq
        %v2577 = vshrl.u32 %v2576, 7
        %v2578 = vsub.s32 0, %v2577
        %v2579 = vrot.slane %v2574, %v2578
        %v2581 = vadd.f32 %v2566, %v2579
        %v2582 = vadd.f32 %v2573, %v2579
        %v2583 = vadd.f32 %v1149, %v2581
        %v2584 = vadd.f32 %v1150, %v2582
        %v2585 = vsel %vm1151, %v2583, 0.0
        %2586 = vadd.xlane.f32.xlu0 %v2585
        %v2587 = vpop.xlane.xlu0 %2586
        %v2588 = vsel %vm1151, %v2584, 0.0
        %2589 = vadd.xlane.f32.xlu0 %v2588
        %v2590 = vpop.xlane.xlu0 %2589
        %v2591 = vmul.f32 %v2587, %v1158
        %v2592 = vmul.f32 %v2590, %v1158
        %v2593 = vsub.f32 %v2583, %v2591
        %v2594 = vsub.f32 %v2584, %v2592
        %v2595 = vmul.f32 %v2593, %v2593
        %v2596 = vmul.f32 %v2594, %v2594
        %v2597 = vsel %vm1151, %v2595, 0.0
        %2598 = vadd.xlane.f32.xlu0 %v2597
        %v2599 = vpop.xlane.xlu0 %2598
        %v2600 = vsel %vm1151, %v2596, 0.0
        %2601 = vadd.xlane.f32.xlu0 %v2600
        %v2602 = vpop.xlane.xlu0 %2601
        %v2603 = vmul.f32 %v2599, %v1158
        %v2604 = vmul.f32 %v2602, %v1158
        %v2605 = vadd.f32 %v2603, 1e-05
        %v2606 = vadd.f32 %v2604, 1e-05
        %v2607 = vrsqrt.pop %v2605
        %v2608 = vrsqrt.pop %v2606
        %v2609 = vmul.f32 %v2593, %v2607
        %v2610 = vmul.f32 %v2594, %v2608
        %v2611 = vld [vmem:[#allocation11] sm:$0x1]
        %v2613 = vlaneseq
        %v2614 = vshrl.u32 %v2613, 7
        %v2615 = vsub.s32 0, %v2614
        %v2616 = vrot.slane %v2611, %v2615
        %v2618 = vmul.f32 %v2609, %v2616
        %v2619 = vmul.f32 %v2610, %v2616
        %v2620 = vld [vmem:[#allocation13] sm:$0x1]
        %v2622 = vlaneseq
        %v2623 = vshrl.u32 %v2622, 7
        %v2624 = vsub.s32 0, %v2623
        %v2625 = vrot.slane %v2620, %v2624
        %v2627 = vadd.f32 %v2618, %v2625
        %v2628 = vadd.f32 %v2619, %v2625
        %v2629 = vld [vmem:[%s976] sm:$0xff]
        %v2630 = vld [vmem:[%s984] sm:$0x1]
        %vm2631 = vcmp.ne.s32.totalorder %v2630, 0
        %v2632 = vpack.c.bf16 %v2628, %v2627
        %v2633 = vpack.c.bf16 %v2629, %v2629
        %v2634 = vld [vmem:[#allocation25] sm:$0xf]
        %v2635 = vld [vmem:[#allocation25 + $0x4] sm:$0xf]
        %v2636 = vld [vmem:[#allocation25 + $0x8] sm:$0xf]
        %v2637 = vld [vmem:[#allocation25 + $0xc] sm:$0xf]
        %v2638 = vld [vmem:[#allocation25 + $0x10] sm:$0xf]
        %v2639 = vld [vmem:[#allocation25 + $0x14] sm:$0xf]
        %v2640 = vld [vmem:[#allocation25 + $0x18] sm:$0xf]
        %v2641 = vld [vmem:[#allocation25 + $0x1c] sm:$0xf]
        %v2642 = vld [vmem:[#allocation25 + $0x20] sm:$0xf]
        %v2643 = vld [vmem:[#allocation25 + $0x24] sm:$0xf]
        %v2644 = vld [vmem:[#allocation25 + $0x28] sm:$0xf]
        %v2645 = vld [vmem:[#allocation25 + $0x2c] sm:$0xf]
        %v2646 = vld [vmem:[#allocation25 + $0x30] sm:$0xf]
        %v2647 = vld [vmem:[#allocation25 + $0x34] sm:$0xf]
        %v2648 = vld [vmem:[#allocation25 + $0x38] sm:$0xf]
        %v2649 = vld [vmem:[#allocation25 + $0x3c] sm:$0xf]
        %v2654 = vunpack.c.l.b16 %v2634
        %v2655 = vunpack.c.l.b16 %v2635
        %v2656 = vunpack.c.l.b16 %v2636
        %v2657 = vunpack.c.l.b16 %v2637
        %v2658 = vpack.c.b16 %v2655, %v2654
        %v2659 = vpack.c.b16 %v2657, %v2656
        %v2663 = vsel %vm1151, %v2632, 0
        %2665 = vmatprep.subr.bf16.mxu0 0
        %2666 = vmatpush1.bf16.msra.mxu0 %v2658
        %2667 = vmatprep.subr.bf16.mxu0 0
        %2668 = vmatpush1.bf16.msra.mxu0 %v2659
        %2669 = vmatprep.subr.bf16.mxu0 0
        %2670 = vmatpush1.bf16.msra.mxu0 0
        %2671 = vmatprep.subr.bf16.mxu0 0
        %2672 = vmatpush1.bf16.msra.mxu0 0
        %2673 = vmatprep.subr.bf16.mxu0 0
        %2674 = vmatpush1.bf16.msra.mxu0 0
        %2675 = vmatprep.subr.bf16.mxu0 0
        %2676 = vmatpush1.bf16.msra.mxu0 0
        %2677 = vmatprep.subr.bf16.mxu0 0
        %2678 = vmatpush1.bf16.msra.mxu0 0
        %2679 = vmatprep.subr.bf16.mxu0 0
        %2680 = vmatpush1.bf16.msra.mxu0 0
        %2681 = vmatprep.subr.bf16.mxu0 0
        %2682 = vmatpush1.bf16.msra.mxu0 0
        %2683 = vmatprep.subr.bf16.mxu0 0
        %2684 = vmatpush1.bf16.msra.mxu0 0
        %2685 = vmatprep.subr.bf16.mxu0 0
        %2686 = vmatpush1.bf16.msra.mxu0 0
        %2687 = vmatprep.subr.bf16.mxu0 0
        %2688 = vmatpush1.bf16.msra.mxu0 0
        %2689 = vmatprep.subr.bf16.mxu0 0
        %2690 = vmatpush1.bf16.msra.mxu0 0
        %2691 = vmatprep.subr.bf16.mxu0 0
        %2692 = vmatpush1.bf16.msra.mxu0 0
        %2693 = vmatprep.subr.bf16.mxu0 0
        %2694 = vmatpush1.bf16.msra.mxu0 0
        %2695 = vmatprep.subr.bf16.mxu0 0
        %2696 = vmatpush1.bf16.msra.mxu0 0
        %2697 = vmatprep.mubr.bf16.mxu0 0
        %2698 = vmatmul.mubr.bf16.gmra.mrb[0].mxu0 %v2663
        %v2699 = vpop.f32.mrb[0].mxu0
        %v2700 = vadd.f32 0.0, %v2699
        %v2701 = vpop.f32.mrb[0].mxu0
        %v2702 = vpop.f32.mrb[0].mxu0
        %v2703 = vadd.f32 0.0, %v2702
        %v2704 = vpop.f32.mrb[0].mxu0
        %2705 = vdwg.mxu0
        %v2710 = vunpack.c.l.b16 %v2638
        %v2711 = vunpack.c.l.b16 %v2639
        %v2712 = vunpack.c.l.b16 %v2640
        %v2713 = vunpack.c.l.b16 %v2641
        %v2714 = vpack.c.b16 %v2711, %v2710
        %v2715 = vpack.c.b16 %v2713, %v2712
        %2718 = vmatprep.subr.bf16.mxu0 0
        %2719 = vmatpush1.bf16.msra.mxu0 %v2714
        %2720 = vmatprep.subr.bf16.mxu0 0
        %2721 = vmatpush1.bf16.msra.mxu0 %v2715
        %2722 = vmatprep.subr.bf16.mxu0 0
        %2723 = vmatpush1.bf16.msra.mxu0 0
        %2724 = vmatprep.subr.bf16.mxu0 0
        %2725 = vmatpush1.bf16.msra.mxu0 0
        %2726 = vmatprep.subr.bf16.mxu0 0
        %2727 = vmatpush1.bf16.msra.mxu0 0
        %2728 = vmatprep.subr.bf16.mxu0 0
        %2729 = vmatpush1.bf16.msra.mxu0 0
        %2730 = vmatprep.subr.bf16.mxu0 0
        %2731 = vmatpush1.bf16.msra.mxu0 0
        %2732 = vmatprep.subr.bf16.mxu0 0
        %2733 = vmatpush1.bf16.msra.mxu0 0
        %2734 = vmatprep.subr.bf16.mxu0 0
        %2735 = vmatpush1.bf16.msra.mxu0 0
        %2736 = vmatprep.subr.bf16.mxu0 0
        %2737 = vmatpush1.bf16.msra.mxu0 0
        %2738 = vmatprep.subr.bf16.mxu0 0
        %2739 = vmatpush1.bf16.msra.mxu0 0
        %2740 = vmatprep.subr.bf16.mxu0 0
        %2741 = vmatpush1.bf16.msra.mxu0 0
        %2742 = vmatprep.subr.bf16.mxu0 0
        %2743 = vmatpush1.bf16.msra.mxu0 0
        %2744 = vmatprep.subr.bf16.mxu0 0
        %2745 = vmatpush1.bf16.msra.mxu0 0
        %2746 = vmatprep.subr.bf16.mxu0 0
        %2747 = vmatpush1.bf16.msra.mxu0 0
        %2748 = vmatprep.subr.bf16.mxu0 0
        %2749 = vmatpush1.bf16.msra.mxu0 0
        %2750 = vmatprep.mubr.bf16.mxu0 0
        %2751 = vmatmul.mubr.bf16.gmra.mrb[0].mxu0 %v2663
        %v2752 = vpop.f32.mrb[0].mxu0
        %v2753 = vadd.f32 0.0, %v2752
        %v2754 = vpop.f32.mrb[0].mxu0
        %v2755 = vpop.f32.mrb[0].mxu0
        %v2756 = vadd.f32 0.0, %v2755
        %v2757 = vpop.f32.mrb[0].mxu0
        %2758 = vdwg.mxu0
        %v2763 = vunpack.c.l.b16 %v2642
        %v2764 = vunpack.c.l.b16 %v2643
        %v2765 = vunpack.c.l.b16 %v2644
        %v2766 = vunpack.c.l.b16 %v2645
        %v2767 = vpack.c.b16 %v2764, %v2763
        %v2768 = vpack.c.b16 %v2766, %v2765
        %2771 = vmatprep.subr.bf16.mxu0 0
        %2772 = vmatpush1.bf16.msra.mxu0 %v2767
        %2773 = vmatprep.subr.bf16.mxu0 0
        %2774 = vmatpush1.bf16.msra.mxu0 %v2768
        %2775 = vmatprep.subr.bf16.mxu0 0
        %2776 = vmatpush1.bf16.msra.mxu0 0
        %2777 = vmatprep.subr.bf16.mxu0 0
        %2778 = vmatpush1.bf16.msra.mxu0 0
        %2779 = vmatprep.subr.bf16.mxu0 0
        %2780 = vmatpush1.bf16.msra.mxu0 0
        %2781 = vmatprep.subr.bf16.mxu0 0
        %2782 = vmatpush1.bf16.msra.mxu0 0
        %2783 = vmatprep.subr.bf16.mxu0 0
        %2784 = vmatpush1.bf16.msra.mxu0 0
        %2785 = vmatprep.subr.bf16.mxu0 0
        %2786 = vmatpush1.bf16.msra.mxu0 0
        %2787 = vmatprep.subr.bf16.mxu0 0
        %2788 = vmatpush1.bf16.msra.mxu0 0
        %2789 = vmatprep.subr.bf16.mxu0 0
        %2790 = vmatpush1.bf16.msra.mxu0 0
        %2791 = vmatprep.subr.bf16.mxu0 0
        %2792 = vmatpush1.bf16.msra.mxu0 0
        %2793 = vmatprep.subr.bf16.mxu0 0
        %2794 = vmatpush1.bf16.msra.mxu0 0
        %2795 = vmatprep.subr.bf16.mxu0 0
        %2796 = vmatpush1.bf16.msra.mxu0 0
        %2797 = vmatprep.subr.bf16.mxu0 0
        %2798 = vmatpush1.bf16.msra.mxu0 0
        %2799 = vmatprep.subr.bf16.mxu0 0
        %2800 = vmatpush1.bf16.msra.mxu0 0
        %2801 = vmatprep.subr.bf16.mxu0 0
        %2802 = vmatpush1.bf16.msra.mxu0 0
        %2803 = vmatprep.mubr.bf16.mxu0 0
        %2804 = vmatmul.mubr.bf16.gmra.mrb[0].mxu0 %v2663
        %v2805 = vpop.f32.mrb[0].mxu0
        %v2806 = vadd.f32 0.0, %v2805
        %v2807 = vpop.f32.mrb[0].mxu0
        %v2808 = vpop.f32.mrb[0].mxu0
        %v2809 = vadd.f32 0.0, %v2808
        %v2810 = vpop.f32.mrb[0].mxu0
        %2811 = vdwg.mxu0
        %v2816 = vunpack.c.l.b16 %v2646
        %v2817 = vunpack.c.l.b16 %v2647
        %v2818 = vunpack.c.l.b16 %v2648
        %v2819 = vunpack.c.l.b16 %v2649
        %v2820 = vpack.c.b16 %v2817, %v2816
        %v2821 = vpack.c.b16 %v2819, %v2818
        %2824 = vmatprep.subr.bf16.mxu0 0
        %2825 = vmatpush1.bf16.msra.mxu0 %v2820
        %2826 = vmatprep.subr.bf16.mxu0 0
        %2827 = vmatpush1.bf16.msra.mxu0 %v2821
        %2828 = vmatprep.subr.bf16.mxu0 0
        %2829 = vmatpush1.bf16.msra.mxu0 0
        %2830 = vmatprep.subr.bf16.mxu0 0
        %2831 = vmatpush1.bf16.msra.mxu0 0
        %2832 = vmatprep.subr.bf16.mxu0 0
        %2833 = vmatpush1.bf16.msra.mxu0 0
        %2834 = vmatprep.subr.bf16.mxu0 0
        %2835 = vmatpush1.bf16.msra.mxu0 0
        %2836 = vmatprep.subr.bf16.mxu0 0
        %2837 = vmatpush1.bf16.msra.mxu0 0
        %2838 = vmatprep.subr.bf16.mxu0 0
        %2839 = vmatpush1.bf16.msra.mxu0 0
        %2840 = vmatprep.subr.bf16.mxu0 0
        %2841 = vmatpush1.bf16.msra.mxu0 0
        %2842 = vmatprep.subr.bf16.mxu0 0
        %2843 = vmatpush1.bf16.msra.mxu0 0
        %2844 = vmatprep.subr.bf16.mxu0 0
        %2845 = vmatpush1.bf16.msra.mxu0 0
        %2846 = vmatprep.subr.bf16.mxu0 0
        %2847 = vmatpush1.bf16.msra.mxu0 0
        %2848 = vmatprep.subr.bf16.mxu0 0
        %2849 = vmatpush1.bf16.msra.mxu0 0
        %2850 = vmatprep.subr.bf16.mxu0 0
        %2851 = vmatpush1.bf16.msra.mxu0 0
        %2852 = vmatprep.subr.bf16.mxu0 0
        %2853 = vmatpush1.bf16.msra.mxu0 0
        %2854 = vmatprep.subr.bf16.mxu0 0
        %2855 = vmatpush1.bf16.msra.mxu0 0
        %2856 = vmatprep.mubr.bf16.mxu0 0
        %2857 = vmatmul.mubr.bf16.gmra.mrb[0].mxu0 %v2663
        %v2858 = vpop.f32.mrb[0].mxu0
        %v2859 = vadd.f32 0.0, %v2858
        %v2860 = vpop.f32.mrb[0].mxu0
        %v2861 = vpop.f32.mrb[0].mxu0
        %v2862 = vadd.f32 0.0, %v2861
        %v2863 = vpop.f32.mrb[0].mxu0
        %2864 = vdwg.mxu0
        %v2865 = vld [vmem:[#allocation26] sm:$0xf]
        %v2866 = vld [vmem:[#allocation26 + $0x4] sm:$0xf]
        %v2867 = vld [vmem:[#allocation26 + $0x8] sm:$0xf]
        %v2868 = vld [vmem:[#allocation26 + $0xc] sm:$0xf]
        %v2869 = vld [vmem:[#allocation26 + $0x10] sm:$0xf]
        %v2870 = vld [vmem:[#allocation26 + $0x14] sm:$0xf]
        %v2871 = vld [vmem:[#allocation26 + $0x18] sm:$0xf]
        %v2872 = vld [vmem:[#allocation26 + $0x1c] sm:$0xf]
        %v2875 = vunpack.c.l.b16 %v2865
        %v2876 = vunpack.c.l.b16 %v2866
        %v2877 = vpack.c.b16 %v2876, %v2875
        %v2880 = vsel %vm2090, %v2633, 0
        %2882 = vmatprep.subr.bf16.mxu0 0
        %2883 = vmatpush1.bf16.msra.mxu0 %v2877
        %2884 = vmatprep.subr.bf16.mxu0 0
        %2885 = vmatpush1.bf16.msra.mxu0 0
        %2886 = vmatprep.subr.bf16.mxu0 0
        %2887 = vmatpush1.bf16.msra.mxu0 0
        %2888 = vmatprep.subr.bf16.mxu0 0
        %2889 = vmatpush1.bf16.msra.mxu0 0
        %2890 = vmatprep.subr.bf16.mxu0 0
        %2891 = vmatpush1.bf16.msra.mxu0 0
        %2892 = vmatprep.subr.bf16.mxu0 0
        %2893 = vmatpush1.bf16.msra.mxu0 0
        %2894 = vmatprep.subr.bf16.mxu0 0
        %2895 = vmatpush1.bf16.msra.mxu0 0
        %2896 = vmatprep.subr.bf16.mxu0 0
        %2897 = vmatpush1.bf16.msra.mxu0 0
        %2898 = vmatprep.subr.bf16.mxu0 0
        %2899 = vmatpush1.bf16.msra.mxu0 0
        %2900 = vmatprep.subr.bf16.mxu0 0
        %2901 = vmatpush1.bf16.msra.mxu0 0
        %2902 = vmatprep.subr.bf16.mxu0 0
        %2903 = vmatpush1.bf16.msra.mxu0 0
        %2904 = vmatprep.subr.bf16.mxu0 0
        %2905 = vmatpush1.bf16.msra.mxu0 0
        %2906 = vmatprep.subr.bf16.mxu0 0
        %2907 = vmatpush1.bf16.msra.mxu0 0
        %2908 = vmatprep.subr.bf16.mxu0 0
        %2909 = vmatpush1.bf16.msra.mxu0 0
        %2910 = vmatprep.subr.bf16.mxu0 0
        %2911 = vmatpush1.bf16.msra.mxu0 0
        %2912 = vmatprep.subr.bf16.mxu0 0
        %2913 = vmatpush1.bf16.msra.mxu0 0
        %2914 = vmatprep.mubr.bf16.mxu0 0
        %2915 = vmatmul.mubr.bf16.gmra.mrb[0].mxu0 %v2880
        %v2916 = vpop.f32.mrb[0].mxu0
        %v2917 = vadd.f32 0.0, %v2916
        %v2918 = vpop.f32.mrb[0].mxu0
        %v2919 = vpop.f32.mrb[0].mxu0
        %v2920 = vpop.f32.mrb[0].mxu0
        %2921 = vdwg.mxu0
        %v2924 = vunpack.c.l.b16 %v2867
        %v2925 = vunpack.c.l.b16 %v2868
        %v2926 = vpack.c.b16 %v2925, %v2924
        %2928 = vmatprep.subr.bf16.mxu0 0
        %2929 = vmatpush1.bf16.msra.mxu0 %v2926
        %2930 = vmatprep.subr.bf16.mxu0 0
        %2931 = vmatpush1.bf16.msra.mxu0 0
        %2932 = vmatprep.subr.bf16.mxu0 0
        %2933 = vmatpush1.bf16.msra.mxu0 0
        %2934 = vmatprep.subr.bf16.mxu0 0
        %2935 = vmatpush1.bf16.msra.mxu0 0
        %2936 = vmatprep.subr.bf16.mxu0 0
        %2937 = vmatpush1.bf16.msra.mxu0 0
        %2938 = vmatprep.subr.bf16.mxu0 0
        %2939 = vmatpush1.bf16.msra.mxu0 0
        %2940 = vmatprep.subr.bf16.mxu0 0
        %2941 = vmatpush1.bf16.msra.mxu0 0
        %2942 = vmatprep.subr.bf16.mxu0 0
        %2943 = vmatpush1.bf16.msra.mxu0 0
        %2944 = vmatprep.subr.bf16.mxu0 0
        %2945 = vmatpush1.bf16.msra.mxu0 0
        %2946 = vmatprep.subr.bf16.mxu0 0
        %2947 = vmatpush1.bf16.msra.mxu0 0
        %2948 = vmatprep.subr.bf16.mxu0 0
        %2949 = vmatpush1.bf16.msra.mxu0 0
        %2950 = vmatprep.subr.bf16.mxu0 0
        %2951 = vmatpush1.bf16.msra.mxu0 0
        %2952 = vmatprep.subr.bf16.mxu0 0
        %2953 = vmatpush1.bf16.msra.mxu0 0
        %2954 = vmatprep.subr.bf16.mxu0 0
        %2955 = vmatpush1.bf16.msra.mxu0 0
        %2956 = vmatprep.subr.bf16.mxu0 0
        %2957 = vmatpush1.bf16.msra.mxu0 0
        %2958 = vmatprep.subr.bf16.mxu0 0
        %2959 = vmatpush1.bf16.msra.mxu0 0
        %2960 = vmatprep.mubr.bf16.mxu0 0
        %2961 = vmatmul.mubr.bf16.gmra.mrb[0].mxu0 %v2880
        %v2962 = vpop.f32.mrb[0].mxu0
        %v2963 = vadd.f32 0.0, %v2962
        %v2964 = vpop.f32.mrb[0].mxu0
        %v2965 = vpop.f32.mrb[0].mxu0
        %v2966 = vpop.f32.mrb[0].mxu0
        %2967 = vdwg.mxu0
        %v2970 = vunpack.c.l.b16 %v2869
        %v2971 = vunpack.c.l.b16 %v2870
        %v2972 = vpack.c.b16 %v2971, %v2970
        %2974 = vmatprep.subr.bf16.mxu0 0
        %2975 = vmatpush1.bf16.msra.mxu0 %v2972
        %2976 = vmatprep.subr.bf16.mxu0 0
        %2977 = vmatpush1.bf16.msra.mxu0 0
        %2978 = vmatprep.subr.bf16.mxu0 0
        %2979 = vmatpush1.bf16.msra.mxu0 0
        %2980 = vmatprep.subr.bf16.mxu0 0
        %2981 = vmatpush1.bf16.msra.mxu0 0
        %2982 = vmatprep.subr.bf16.mxu0 0
        %2983 = vmatpush1.bf16.msra.mxu0 0
        %2984 = vmatprep.subr.bf16.mxu0 0
        %2985 = vmatpush1.bf16.msra.mxu0 0
        %2986 = vmatprep.subr.bf16.mxu0 0
        %2987 = vmatpush1.bf16.msra.mxu0 0
        %2988 = vmatprep.subr.bf16.mxu0 0
        %2989 = vmatpush1.bf16.msra.mxu0 0
        %2990 = vmatprep.subr.bf16.mxu0 0
        %2991 = vmatpush1.bf16.msra.mxu0 0
        %2992 = vmatprep.subr.bf16.mxu0 0
        %2993 = vmatpush1.bf16.msra.mxu0 0
        %2994 = vmatprep.subr.bf16.mxu0 0
        %2995 = vmatpush1.bf16.msra.mxu0 0
        %2996 = vmatprep.subr.bf16.mxu0 0
        %2997 = vmatpush1.bf16.msra.mxu0 0
        %2998 = vmatprep.subr.bf16.mxu0 0
        %2999 = vmatpush1.bf16.msra.mxu0 0
        %3000 = vmatprep.subr.bf16.mxu0 0
        %3001 = vmatpush1.bf16.msra.mxu0 0
        %3002 = vmatprep.subr.bf16.mxu0 0
        %3003 = vmatpush1.bf16.msra.mxu0 0
        %3004 = vmatprep.subr.bf16.mxu0 0
        %3005 = vmatpush1.bf16.msra.mxu0 0
        %3006 = vmatprep.mubr.bf16.mxu0 0
        %3007 = vmatmul.mubr.bf16.gmra.mrb[0].mxu0 %v2880
        %v3008 = vpop.f32.mrb[0].mxu0
        %v3009 = vadd.f32 0.0, %v3008
        %v3010 = vpop.f32.mrb[0].mxu0
        %v3011 = vpop.f32.mrb[0].mxu0
        %v3012 = vpop.f32.mrb[0].mxu0
        %3013 = vdwg.mxu0
        %v3016 = vunpack.c.l.b16 %v2871
        %v3017 = vunpack.c.l.b16 %v2872
        %v3018 = vpack.c.b16 %v3017, %v3016
        %3020 = vmatprep.subr.bf16.mxu0 0
        %3021 = vmatpush1.bf16.msra.mxu0 %v3018
        %3022 = vmatprep.subr.bf16.mxu0 0
        %3023 = vmatpush1.bf16.msra.mxu0 0
        %3024 = vmatprep.subr.bf16.mxu0 0
        %3025 = vmatpush1.bf16.msra.mxu0 0
        %3026 = vmatprep.subr.bf16.mxu0 0
        %3027 = vmatpush1.bf16.msra.mxu0 0
        %3028 = vmatprep.subr.bf16.mxu0 0
        %3029 = vmatpush1.bf16.msra.mxu0 0
        %3030 = vmatprep.subr.bf16.mxu0 0
        %3031 = vmatpush1.bf16.msra.mxu0 0
        %3032 = vmatprep.subr.bf16.mxu0 0
        %3033 = vmatpush1.bf16.msra.mxu0 0
        %3034 = vmatprep.subr.bf16.mxu0 0
        %3035 = vmatpush1.bf16.msra.mxu0 0
        %3036 = vmatprep.subr.bf16.mxu0 0
        %3037 = vmatpush1.bf16.msra.mxu0 0
        %3038 = vmatprep.subr.bf16.mxu0 0
        %3039 = vmatpush1.bf16.msra.mxu0 0
        %3040 = vmatprep.subr.bf16.mxu0 0
        %3041 = vmatpush1.bf16.msra.mxu0 0
        %3042 = vmatprep.subr.bf16.mxu0 0
        %3043 = vmatpush1.bf16.msra.mxu0 0
        %3044 = vmatprep.subr.bf16.mxu0 0
        %3045 = vmatpush1.bf16.msra.mxu0 0
        %3046 = vmatprep.subr.bf16.mxu0 0
        %3047 = vmatpush1.bf16.msra.mxu0 0
        %3048 = vmatprep.subr.bf16.mxu0 0
        %3049 = vmatpush1.bf16.msra.mxu0 0
        %3050 = vmatprep.subr.bf16.mxu0 0
        %3051 = vmatpush1.bf16.msra.mxu0 0
        %3052 = vmatprep.mubr.bf16.mxu0 0
        %3053 = vmatmul.mubr.bf16.gmra.mrb[0].mxu0 %v2880
        %v3054 = vpop.f32.mrb[0].mxu0
        %v3055 = vadd.f32 0.0, %v3054
        %v3056 = vpop.f32.mrb[0].mxu0
        %v3057 = vpop.f32.mrb[0].mxu0
        %v3058 = vpop.f32.mrb[0].mxu0
        %3059 = vdwg.mxu0
        %v3060 = vld [vmem:[#allocation28] sm:$0xf]
        %v3061 = vld [vmem:[#allocation28 + $0x4] sm:$0xf]
        %v3062 = vld [vmem:[#allocation28 + $0x8] sm:$0xf]
        %v3063 = vld [vmem:[#allocation28 + $0xc] sm:$0xf]
        %v3064 = vld [vmem:[#allocation28 + $0x10] sm:$0xf]
        %v3065 = vld [vmem:[#allocation28 + $0x14] sm:$0xf]
        %v3066 = vld [vmem:[#allocation28 + $0x18] sm:$0xf]
        %v3067 = vld [vmem:[#allocation28 + $0x1c] sm:$0xf]
        %v3070 = vunpack.c.l.b16 %v3060
        %v3071 = vunpack.c.l.b16 %v3061
        %v3072 = vpack.c.b16 %v3071, %v3070
        %3074 = vmatprep.subr.bf16.mxu0 0
        %3075 = vmatpush1.bf16.msra.mxu0 %v3072
        %3076 = vmatprep.subr.bf16.mxu0 0
        %3077 = vmatpush1.bf16.msra.mxu0 0
        %3078 = vmatprep.subr.bf16.mxu0 0
        %3079 = vmatpush1.bf16.msra.mxu0 0
        %3080 = vmatprep.subr.bf16.mxu0 0
        %3081 = vmatpush1.bf16.msra.mxu0 0
        %3082 = vmatprep.subr.bf16.mxu0 0
        %3083 = vmatpush1.bf16.msra.mxu0 0
        %3084 = vmatprep.subr.bf16.mxu0 0
        %3085 = vmatpush1.bf16.msra.mxu0 0
        %3086 = vmatprep.subr.bf16.mxu0 0
        %3087 = vmatpush1.bf16.msra.mxu0 0
        %3088 = vmatprep.subr.bf16.mxu0 0
        %3089 = vmatpush1.bf16.msra.mxu0 0
        %3090 = vmatprep.subr.bf16.mxu0 0
        %3091 = vmatpush1.bf16.msra.mxu0 0
        %3092 = vmatprep.subr.bf16.mxu0 0
        %3093 = vmatpush1.bf16.msra.mxu0 0
        %3094 = vmatprep.subr.bf16.mxu0 0
        %3095 = vmatpush1.bf16.msra.mxu0 0
        %3096 = vmatprep.subr.bf16.mxu0 0
        %3097 = vmatpush1.bf16.msra.mxu0 0
        %3098 = vmatprep.subr.bf16.mxu0 0
        %3099 = vmatpush1.bf16.msra.mxu0 0
        %3100 = vmatprep.subr.bf16.mxu0 0
        %3101 = vmatpush1.bf16.msra.mxu0 0
        %3102 = vmatprep.subr.bf16.mxu0 0
        %3103 = vmatpush1.bf16.msra.mxu0 0
        %3104 = vmatprep.subr.bf16.mxu0 0
        %3105 = vmatpush1.bf16.msra.mxu0 0
        %3106 = vmatprep.mubr.bf16.mxu0 0
        %3107 = vmatmul.mubr.bf16.gmra.mrb[0].mxu0 %v2880
        %v3108 = vpop.f32.mrb[0].mxu0
        %v3109 = vadd.f32 0.0, %v3108
        %v3110 = vpop.f32.mrb[0].mxu0
        %v3111 = vpop.f32.mrb[0].mxu0
        %v3112 = vpop.f32.mrb[0].mxu0
        %3113 = vdwg.mxu0
        %v3116 = vunpack.c.l.b16 %v3062
        %v3117 = vunpack.c.l.b16 %v3063
        %v3118 = vpack.c.b16 %v3117, %v3116
        %3120 = vmatprep.subr.bf16.mxu0 0
        %3121 = vmatpush1.bf16.msra.mxu0 %v3118
        %3122 = vmatprep.subr.bf16.mxu0 0
        %3123 = vmatpush1.bf16.msra.mxu0 0
        %3124 = vmatprep.subr.bf16.mxu0 0
        %3125 = vmatpush1.bf16.msra.mxu0 0
        %3126 = vmatprep.subr.bf16.mxu0 0
        %3127 = vmatpush1.bf16.msra.mxu0 0
        %3128 = vmatprep.subr.bf16.mxu0 0
        %3129 = vmatpush1.bf16.msra.mxu0 0
        %3130 = vmatprep.subr.bf16.mxu0 0
        %3131 = vmatpush1.bf16.msra.mxu0 0
        %3132 = vmatprep.subr.bf16.mxu0 0
        %3133 = vmatpush1.bf16.msra.mxu0 0
        %3134 = vmatprep.subr.bf16.mxu0 0
        %3135 = vmatpush1.bf16.msra.mxu0 0
        %3136 = vmatprep.subr.bf16.mxu0 0
        %3137 = vmatpush1.bf16.msra.mxu0 0
        %3138 = vmatprep.subr.bf16.mxu0 0
        %3139 = vmatpush1.bf16.msra.mxu0 0
        %3140 = vmatprep.subr.bf16.mxu0 0
        %3141 = vmatpush1.bf16.msra.mxu0 0
        %3142 = vmatprep.subr.bf16.mxu0 0
        %3143 = vmatpush1.bf16.msra.mxu0 0
        %3144 = vmatprep.subr.bf16.mxu0 0
        %3145 = vmatpush1.bf16.msra.mxu0 0
        %3146 = vmatprep.subr.bf16.mxu0 0
        %3147 = vmatpush1.bf16.msra.mxu0 0
        %3148 = vmatprep.subr.bf16.mxu0 0
        %3149 = vmatpush1.bf16.msra.mxu0 0
        %3150 = vmatprep.subr.bf16.mxu0 0
        %3151 = vmatpush1.bf16.msra.mxu0 0
        %3152 = vmatprep.mubr.bf16.mxu0 0
        %3153 = vmatmul.mubr.bf16.gmra.mrb[0].mxu0 %v2880
        %v3154 = vpop.f32.mrb[0].mxu0
        %v3155 = vadd.f32 0.0, %v3154
        %v3156 = vpop.f32.mrb[0].mxu0
        %v3157 = vpop.f32.mrb[0].mxu0
        %v3158 = vpop.f32.mrb[0].mxu0
        %3159 = vdwg.mxu0
        %v3162 = vunpack.c.l.b16 %v3064
        %v3163 = vunpack.c.l.b16 %v3065
        %v3164 = vpack.c.b16 %v3163, %v3162
        %3166 = vmatprep.subr.bf16.mxu0 0
        %3167 = vmatpush1.bf16.msra.mxu0 %v3164
        %3168 = vmatprep.subr.bf16.mxu0 0
        %3169 = vmatpush1.bf16.msra.mxu0 0
        %3170 = vmatprep.subr.bf16.mxu0 0
        %3171 = vmatpush1.bf16.msra.mxu0 0
        %3172 = vmatprep.subr.bf16.mxu0 0
        %3173 = vmatpush1.bf16.msra.mxu0 0
        %3174 = vmatprep.subr.bf16.mxu0 0
        %3175 = vmatpush1.bf16.msra.mxu0 0
        %3176 = vmatprep.subr.bf16.mxu0 0
        %3177 = vmatpush1.bf16.msra.mxu0 0
        %3178 = vmatprep.subr.bf16.mxu0 0
        %3179 = vmatpush1.bf16.msra.mxu0 0
        %3180 = vmatprep.subr.bf16.mxu0 0
        %3181 = vmatpush1.bf16.msra.mxu0 0
        %3182 = vmatprep.subr.bf16.mxu0 0
        %3183 = vmatpush1.bf16.msra.mxu0 0
        %3184 = vmatprep.subr.bf16.mxu0 0
        %3185 = vmatpush1.bf16.msra.mxu0 0
        %3186 = vmatprep.subr.bf16.mxu0 0
        %3187 = vmatpush1.bf16.msra.mxu0 0
        %3188 = vmatprep.subr.bf16.mxu0 0
        %3189 = vmatpush1.bf16.msra.mxu0 0
        %3190 = vmatprep.subr.bf16.mxu0 0
        %3191 = vmatpush1.bf16.msra.mxu0 0
        %3192 = vmatprep.subr.bf16.mxu0 0
        %3193 = vmatpush1.bf16.msra.mxu0 0
        %3194 = vmatprep.subr.bf16.mxu0 0
        %3195 = vmatpush1.bf16.msra.mxu0 0
        %3196 = vmatprep.subr.bf16.mxu0 0
        %3197 = vmatpush1.bf16.msra.mxu0 0
        %3198 = vmatprep.mubr.bf16.mxu0 0
        %3199 = vmatmul.mubr.bf16.gmra.mrb[0].mxu0 %v2880
        %v3200 = vpop.f32.mrb[0].mxu0
        %v3201 = vadd.f32 0.0, %v3200
        %v3202 = vpop.f32.mrb[0].mxu0
        %v3203 = vpop.f32.mrb[0].mxu0
        %v3204 = vpop.f32.mrb[0].mxu0
        %3205 = vdwg.mxu0
        %v3208 = vunpack.c.l.b16 %v3066
        %v3209 = vunpack.c.l.b16 %v3067
        %v3210 = vpack.c.b16 %v3209, %v3208
        %3212 = vmatprep.subr.bf16.mxu0 0
        %3213 = vmatpush1.bf16.msra.mxu0 %v3210
        %3214 = vmatprep.subr.bf16.mxu0 0
        %3215 = vmatpush1.bf16.msra.mxu0 0
        %3216 = vmatprep.subr.bf16.mxu0 0
        %3217 = vmatpush1.bf16.msra.mxu0 0
        %3218 = vmatprep.subr.bf16.mxu0 0
        %3219 = vmatpush1.bf16.msra.mxu0 0
        %3220 = vmatprep.subr.bf16.mxu0 0
        %3221 = vmatpush1.bf16.msra.mxu0 0
        %3222 = vmatprep.subr.bf16.mxu0 0
        %3223 = vmatpush1.bf16.msra.mxu0 0
        %3224 = vmatprep.subr.bf16.mxu0 0
        %3225 = vmatpush1.bf16.msra.mxu0 0
        %3226 = vmatprep.subr.bf16.mxu0 0
        %3227 = vmatpush1.bf16.msra.mxu0 0
        %3228 = vmatprep.subr.bf16.mxu0 0
        %3229 = vmatpush1.bf16.msra.mxu0 0
        %3230 = vmatprep.subr.bf16.mxu0 0
        %3231 = vmatpush1.bf16.msra.mxu0 0
        %3232 = vmatprep.subr.bf16.mxu0 0
        %3233 = vmatpush1.bf16.msra.mxu0 0
        %3234 = vmatprep.subr.bf16.mxu0 0
        %3235 = vmatpush1.bf16.msra.mxu0 0
        %3236 = vmatprep.subr.bf16.mxu0 0
        %3237 = vmatpush1.bf16.msra.mxu0 0
        %3238 = vmatprep.subr.bf16.mxu0 0
        %3239 = vmatpush1.bf16.msra.mxu0 0
        %3240 = vmatprep.subr.bf16.mxu0 0
        %3241 = vmatpush1.bf16.msra.mxu0 0
        %3242 = vmatprep.subr.bf16.mxu0 0
        %3243 = vmatpush1.bf16.msra.mxu0 0
        %3244 = vmatprep.mubr.bf16.mxu0 0
        %3245 = vmatmul.mubr.bf16.gmra.mrb[0].mxu0 %v2880
        %v3246 = vpop.f32.mrb[0].mxu0
        %v3247 = vadd.f32 0.0, %v3246
        %v3248 = vpop.f32.mrb[0].mxu0
        %v3249 = vpop.f32.mrb[0].mxu0
        %v3250 = vpop.f32.mrb[0].mxu0
        %3251 = vdwg.mxu0
        %v3252 = vpack.c.bf16 %v2703, %v2700
        %v3253 = vpack.c.bf16 %v2756, %v2753
        %v3254 = vpack.c.bf16 %v2809, %v2806
        %v3255 = vpack.c.bf16 %v2862, %v2859
        %v3256 = vpack.c.bf16 %v2917, %v2917
        %v3257 = vpack.c.bf16 %v2963, %v2963
        %v3258 = vpack.c.bf16 %v3009, %v3009
        %v3259 = vpack.c.bf16 %v3055, %v3055
        %v3261 = vsel %vm1893, %v3252, 0
        %v3264 = vsel %vm1893, %v3256, 0
        %3266 = vmatprep.subr.bf16.mxu0 0
        %3267 = vmatpush1.bf16.xpose.msra.mxu0 %v3264
        %3268 = vmatprep.subr.bf16.mxu0 0
        %3269 = vmatpush1.bf16.xpose.msra.mxu0 0
        %3270 = vmatprep.subr.bf16.mxu0 0
        %3271 = vmatpush1.bf16.xpose.msra.mxu0 0
        %3272 = vmatprep.subr.bf16.mxu0 0
        %3273 = vmatpush1.bf16.xpose.msra.mxu0 0
        %3274 = vmatprep.subr.bf16.mxu0 0
        %3275 = vmatpush1.bf16.xpose.msra.mxu0 0
        %3276 = vmatprep.subr.bf16.mxu0 0
        %3277 = vmatpush1.bf16.xpose.msra.mxu0 0
        %3278 = vmatprep.subr.bf16.mxu0 0
        %3279 = vmatpush1.bf16.xpose.msra.mxu0 0
        %3280 = vmatprep.subr.bf16.mxu0 0
        %3281 = vmatpush1.bf16.xpose.msra.mxu0 0
        %3282 = vmatprep.subr.bf16.mxu0 0
        %3283 = vmatpush1.bf16.xpose.msra.mxu0 0
        %3284 = vmatprep.subr.bf16.mxu0 0
        %3285 = vmatpush1.bf16.xpose.msra.mxu0 0
        %3286 = vmatprep.subr.bf16.mxu0 0
        %3287 = vmatpush1.bf16.xpose.msra.mxu0 0
        %3288 = vmatprep.subr.bf16.mxu0 0
        %3289 = vmatpush1.bf16.xpose.msra.mxu0 0
        %3290 = vmatprep.subr.bf16.mxu0 0
        %3291 = vmatpush1.bf16.xpose.msra.mxu0 0
        %3292 = vmatprep.subr.bf16.mxu0 0
        %3293 = vmatpush1.bf16.xpose.msra.mxu0 0
        %3294 = vmatprep.subr.bf16.mxu0 0
        %3295 = vmatpush1.bf16.xpose.msra.mxu0 0
        %3296 = vmatprep.subr.bf16.mxu0 0
        %3297 = vmatpush1.bf16.xpose.msra.mxu0 0
        %3298 = vmatprep.mubr.bf16.mxu0 0
        %3299 = vmatmul.mubr.bf16.gmra.mrb[0].mxu0 %v3261
        %v3300 = vpop.f32.mrb[0].mxu0
        %v3301 = vadd.f32 0.0, %v3300
        %v3302 = vpop.f32.mrb[0].mxu0
        %v3303 = vpop.f32.mrb[0].mxu0
        %v3304 = vadd.f32 0.0, %v3303
        %v3305 = vpop.f32.mrb[0].mxu0
        %3306 = vdwg.mxu0
        %v3308 = vsel %vm1893, %v3253, 0
        %v3311 = vsel %vm1893, %v3257, 0
        %3313 = vmatprep.subr.bf16.mxu0 0
        %3314 = vmatpush1.bf16.xpose.msra.mxu0 %v3311
        %3315 = vmatprep.subr.bf16.mxu0 0
        %3316 = vmatpush1.bf16.xpose.msra.mxu0 0
        %3317 = vmatprep.subr.bf16.mxu0 0
        %3318 = vmatpush1.bf16.xpose.msra.mxu0 0
        %3319 = vmatprep.subr.bf16.mxu0 0
        %3320 = vmatpush1.bf16.xpose.msra.mxu0 0
        %3321 = vmatprep.subr.bf16.mxu0 0
        %3322 = vmatpush1.bf16.xpose.msra.mxu0 0
        %3323 = vmatprep.subr.bf16.mxu0 0
        %3324 = vmatpush1.bf16.xpose.msra.mxu0 0
        %3325 = vmatprep.subr.bf16.mxu0 0
        %3326 = vmatpush1.bf16.xpose.msra.mxu0 0
        %3327 = vmatprep.subr.bf16.mxu0 0
        %3328 = vmatpush1.bf16.xpose.msra.mxu0 0
        %3329 = vmatprep.subr.bf16.mxu0 0
        %3330 = vmatpush1.bf16.xpose.msra.mxu0 0
        %3331 = vmatprep.subr.bf16.mxu0 0
        %3332 = vmatpush1.bf16.xpose.msra.mxu0 0
        %3333 = vmatprep.subr.bf16.mxu0 0
        %3334 = vmatpush1.bf16.xpose.msra.mxu0 0
        %3335 = vmatprep.subr.bf16.mxu0 0
        %3336 = vmatpush1.bf16.xpose.msra.mxu0 0
        %3337 = vmatprep.subr.bf16.mxu0 0
        %3338 = vmatpush1.bf16.xpose.msra.mxu0 0
        %3339 = vmatprep.subr.bf16.mxu0 0
        %3340 = vmatpush1.bf16.xpose.msra.mxu0 0
        %3341 = vmatprep.subr.bf16.mxu0 0
        %3342 = vmatpush1.bf16.xpose.msra.mxu0 0
        %3343 = vmatprep.subr.bf16.mxu0 0
        %3344 = vmatpush1.bf16.xpose.msra.mxu0 0
        %3345 = vmatprep.mubr.bf16.mxu0 0
        %3346 = vmatmul.mubr.bf16.gmra.mrb[0].mxu0 %v3308
        %v3347 = vpop.f32.mrb[0].mxu0
        %v3348 = vadd.f32 0.0, %v3347
        %v3349 = vpop.f32.mrb[0].mxu0
        %v3350 = vpop.f32.mrb[0].mxu0
        %v3351 = vadd.f32 0.0, %v3350
        %v3352 = vpop.f32.mrb[0].mxu0
        %3353 = vdwg.mxu0
        %v3355 = vsel %vm1893, %v3254, 0
        %v3358 = vsel %vm1893, %v3258, 0
        %3360 = vmatprep.subr.bf16.mxu0 0
        %3361 = vmatpush1.bf16.xpose.msra.mxu0 %v3358
        %3362 = vmatprep.subr.bf16.mxu0 0
        %3363 = vmatpush1.bf16.xpose.msra.mxu0 0
        %3364 = vmatprep.subr.bf16.mxu0 0
        %3365 = vmatpush1.bf16.xpose.msra.mxu0 0
        %3366 = vmatprep.subr.bf16.mxu0 0
        %3367 = vmatpush1.bf16.xpose.msra.mxu0 0
        %3368 = vmatprep.subr.bf16.mxu0 0
        %3369 = vmatpush1.bf16.xpose.msra.mxu0 0
        %3370 = vmatprep.subr.bf16.mxu0 0
        %3371 = vmatpush1.bf16.xpose.msra.mxu0 0
        %3372 = vmatprep.subr.bf16.mxu0 0
        %3373 = vmatpush1.bf16.xpose.msra.mxu0 0
        %3374 = vmatprep.subr.bf16.mxu0 0
        %3375 = vmatpush1.bf16.xpose.msra.mxu0 0
        %3376 = vmatprep.subr.bf16.mxu0 0
        %3377 = vmatpush1.bf16.xpose.msra.mxu0 0
        %3378 = vmatprep.subr.bf16.mxu0 0
        %3379 = vmatpush1.bf16.xpose.msra.mxu0 0
        %3380 = vmatprep.subr.bf16.mxu0 0
        %3381 = vmatpush1.bf16.xpose.msra.mxu0 0
        %3382 = vmatprep.subr.bf16.mxu0 0
        %3383 = vmatpush1.bf16.xpose.msra.mxu0 0
        %3384 = vmatprep.subr.bf16.mxu0 0
        %3385 = vmatpush1.bf16.xpose.msra.mxu0 0
        %3386 = vmatprep.subr.bf16.mxu0 0
        %3387 = vmatpush1.bf16.xpose.msra.mxu0 0
        %3388 = vmatprep.subr.bf16.mxu0 0
        %3389 = vmatpush1.bf16.xpose.msra.mxu0 0
        %3390 = vmatprep.subr.bf16.mxu0 0
        %3391 = vmatpush1.bf16.xpose.msra.mxu0 0
        %3392 = vmatprep.mubr.bf16.mxu0 0
        %3393 = vmatmul.mubr.bf16.gmra.mrb[0].mxu0 %v3355
        %v3394 = vpop.f32.mrb[0].mxu0
        %v3395 = vadd.f32 0.0, %v3394
        %v3396 = vpop.f32.mrb[0].mxu0
        %v3397 = vpop.f32.mrb[0].mxu0
        %v3398 = vadd.f32 0.0, %v3397
        %v3399 = vpop.f32.mrb[0].mxu0
        %3400 = vdwg.mxu0
        %v3402 = vsel %vm1893, %v3255, 0
        %v3405 = vsel %vm1893, %v3259, 0
        %3407 = vmatprep.subr.bf16.mxu0 0
        %3408 = vmatpush1.bf16.xpose.msra.mxu0 %v3405
        %3409 = vmatprep.subr.bf16.mxu0 0
        %3410 = vmatpush1.bf16.xpose.msra.mxu0 0
        %3411 = vmatprep.subr.bf16.mxu0 0
        %3412 = vmatpush1.bf16.xpose.msra.mxu0 0
        %3413 = vmatprep.subr.bf16.mxu0 0
        %3414 = vmatpush1.bf16.xpose.msra.mxu0 0
        %3415 = vmatprep.subr.bf16.mxu0 0
        %3416 = vmatpush1.bf16.xpose.msra.mxu0 0
        %3417 = vmatprep.subr.bf16.mxu0 0
        %3418 = vmatpush1.bf16.xpose.msra.mxu0 0
        %3419 = vmatprep.subr.bf16.mxu0 0
        %3420 = vmatpush1.bf16.xpose.msra.mxu0 0
        %3421 = vmatprep.subr.bf16.mxu0 0
        %3422 = vmatpush1.bf16.xpose.msra.mxu0 0
        %3423 = vmatprep.subr.bf16.mxu0 0
        %3424 = vmatpush1.bf16.xpose.msra.mxu0 0
        %3425 = vmatprep.subr.bf16.mxu0 0
        %3426 = vmatpush1.bf16.xpose.msra.mxu0 0
        %3427 = vmatprep.subr.bf16.mxu0 0
        %3428 = vmatpush1.bf16.xpose.msra.mxu0 0
        %3429 = vmatprep.subr.bf16.mxu0 0
        %3430 = vmatpush1.bf16.xpose.msra.mxu0 0
        %3431 = vmatprep.subr.bf16.mxu0 0
        %3432 = vmatpush1.bf16.xpose.msra.mxu0 0
        %3433 = vmatprep.subr.bf16.mxu0 0
        %3434 = vmatpush1.bf16.xpose.msra.mxu0 0
        %3435 = vmatprep.subr.bf16.mxu0 0
        %3436 = vmatpush1.bf16.xpose.msra.mxu0 0
        %3437 = vmatprep.subr.bf16.mxu0 0
        %3438 = vmatpush1.bf16.xpose.msra.mxu0 0
        %3439 = vmatprep.mubr.bf16.mxu0 0
        %3440 = vmatmul.mubr.bf16.gmra.mrb[0].mxu0 %v3402
        %v3441 = vpop.f32.mrb[0].mxu0
        %v3442 = vadd.f32 0.0, %v3441
        %v3443 = vpop.f32.mrb[0].mxu0
        %v3444 = vpop.f32.mrb[0].mxu0
        %v3445 = vadd.f32 0.0, %v3444
        %v3446 = vpop.f32.mrb[0].mxu0
        %3447 = vdwg.mxu0
        %v3448 = vmul.f32 %v3301, 0.35355338
        %v3449 = vmul.f32 %v3304, 0.35355338
        %v3450 = vmul.f32 %v3348, 0.35355338
        %v3451 = vmul.f32 %v3351, 0.35355338
        %v3452 = vmul.f32 %v3395, 0.35355338
        %v3453 = vmul.f32 %v3398, 0.35355338
        %v3454 = vmul.f32 %v3442, 0.35355338
        %v3455 = vmul.f32 %v3445, 0.35355338
        %v3456 = vsel %vm2631, 1, 0
        %v3457 = vlaneseq
        %v3458 = vshrl.u32 %v3457, 7
        %v3459 = vsub.s32 0, %v3458
        %v3460 = vrot.slane %v3456, %v3459
        %vm3461 = vcmp.eq.s32.totalorder %v3460, 1
        %v3462 = vsel %vm3461, %v3448, -3.4028235e+38
        %v3463 = vsel %vm3461, %v3449, -3.4028235e+38
        %v3464 = vsel %vm3461, %v3450, -3.4028235e+38
        %v3465 = vsel %vm3461, %v3451, -3.4028235e+38
        %v3466 = vsel %vm3461, %v3452, -3.4028235e+38
        %v3467 = vsel %vm3461, %v3453, -3.4028235e+38
        %v3468 = vsel %vm3461, %v3454, -3.4028235e+38
        %v3469 = vsel %vm3461, %v3455, -3.4028235e+38
        %v3470 = vsel %vm1893, %v3462, -inf
        %3471 = vmax.xlane.f32.xlu0 %v3470
        %v3472 = vpop.xlane.xlu0 %3471
        %v3473 = vsel %vm1893, %v3463, -inf
        %3474 = vmax.xlane.f32.xlu0 %v3473
        %v3475 = vpop.xlane.xlu0 %3474
        %v3476 = vsel %vm1893, %v3464, -inf
        %3477 = vmax.xlane.f32.xlu0 %v3476
        %v3478 = vpop.xlane.xlu0 %3477
        %v3479 = vsel %vm1893, %v3465, -inf
        %3480 = vmax.xlane.f32.xlu0 %v3479
        %v3481 = vpop.xlane.xlu0 %3480
        %v3482 = vsel %vm1893, %v3466, -inf
        %3483 = vmax.xlane.f32.xlu0 %v3482
        %v3484 = vpop.xlane.xlu0 %3483
        %v3485 = vsel %vm1893, %v3467, -inf
        %3486 = vmax.xlane.f32.xlu0 %v3485
        %v3487 = vpop.xlane.xlu0 %3486
        %v3488 = vsel %vm1893, %v3468, -inf
        %3489 = vmax.xlane.f32.xlu0 %v3488
        %v3490 = vpop.xlane.xlu0 %3489
        %v3491 = vsel %vm1893, %v3469, -inf
        %3492 = vmax.xlane.f32.xlu0 %v3491
        %v3493 = vpop.xlane.xlu0 %3492
        %v3494 = vsub.f32 %v3462, %v3472
        %v3495 = vsub.f32 %v3463, %v3475
        %v3496 = vsub.f32 %v3464, %v3478
        %v3497 = vsub.f32 %v3465, %v3481
        %v3498 = vsub.f32 %v3466, %v3484
        %v3499 = vsub.f32 %v3467, %v3487
        %v3500 = vsub.f32 %v3468, %v3490
        %v3501 = vsub.f32 %v3469, %v3493
        %v3502 = vmul.f32 %v3494, 1.442695
        %v3503 = vpow.pop %v3502
        %v3504 = vmul.f32 %v3495, 1.442695
        %v3505 = vpow.pop %v3504
        %v3506 = vmul.f32 %v3496, 1.442695
        %v3507 = vpow.pop %v3506
        %v3508 = vmul.f32 %v3497, 1.442695
        %v3509 = vpow.pop %v3508
        %v3510 = vmul.f32 %v3498, 1.442695
        %v3511 = vpow.pop %v3510
        %v3512 = vmul.f32 %v3499, 1.442695
        %v3513 = vpow.pop %v3512
        %v3514 = vmul.f32 %v3500, 1.442695
        %v3515 = vpow.pop %v3514
        %v3516 = vmul.f32 %v3501, 1.442695
        %v3517 = vpow.pop %v3516
        %v3518 = vsel %vm1893, %v3503, 0.0
        %3519 = vadd.xlane.f32.xlu0 %v3518
        %v3520 = vpop.xlane.xlu0 %3519
        %v3521 = vsel %vm1893, %v3505, 0.0
        %3522 = vadd.xlane.f32.xlu0 %v3521
        %v3523 = vpop.xlane.xlu0 %3522
        %v3524 = vsel %vm1893, %v3507, 0.0
        %3525 = vadd.xlane.f32.xlu0 %v3524
        %v3526 = vpop.xlane.xlu0 %3525
        %v3527 = vsel %vm1893, %v3509, 0.0
        %3528 = vadd.xlane.f32.xlu0 %v3527
        %v3529 = vpop.xlane.xlu0 %3528
        %v3530 = vsel %vm1893, %v3511, 0.0
        %3531 = vadd.xlane.f32.xlu0 %v3530
        %v3532 = vpop.xlane.xlu0 %3531
        %v3533 = vsel %vm1893, %v3513, 0.0
        %3534 = vadd.xlane.f32.xlu0 %v3533
        %v3535 = vpop.xlane.xlu0 %3534
        %v3536 = vsel %vm1893, %v3515, 0.0
        %3537 = vadd.xlane.f32.xlu0 %v3536
        %v3538 = vpop.xlane.xlu0 %3537
        %v3539 = vsel %vm1893, %v3517, 0.0
        %3540 = vadd.xlane.f32.xlu0 %v3539
        %v3541 = vpop.xlane.xlu0 %3540
        %v3542 = vrcp.pop %v3520
        %v3543 = vrcp.pop %v3523
        %v3544 = vrcp.pop %v3526
        %v3545 = vrcp.pop %v3529
        %v3546 = vrcp.pop %v3532
        %v3547 = vrcp.pop %v3535
        %v3548 = vrcp.pop %v3538
        %v3549 = vrcp.pop %v3541
        %v3550 = vmul.f32 %v3503, %v3542
        %v3551 = vmul.f32 %v3505, %v3543
        %v3552 = vmul.f32 %v3507, %v3544
        %v3553 = vmul.f32 %v3509, %v3545
        %v3554 = vmul.f32 %v3511, %v3546
        %v3555 = vmul.f32 %v3513, %v3547
        %v3556 = vmul.f32 %v3515, %v3548
        %v3557 = vmul.f32 %v3517, %v3549
        %v3558 = vpack.c.bf16 %v3551, %v3550
        %v3559 = vpack.c.bf16 %v3553, %v3552
        %v3560 = vpack.c.bf16 %v3555, %v3554
        %v3561 = vpack.c.bf16 %v3557, %v3556
        %v3562 = vpack.c.bf16 %v3109, %v3109
        %v3563 = vpack.c.bf16 %v3155, %v3155
        %v3564 = vpack.c.bf16 %v3201, %v3201
        %v3565 = vpack.c.bf16 %v3247, %v3247
        %v3567 = vsel %vm1893, %v3558, 0
        %v3570 = vsel %vm2374, %v3562, 0
        %3572 = vmatprep.subr.bf16.mxu0 0
        %3573 = vmatpush1.bf16.msra.mxu0 %v3570
        %3574 = vmatprep.subr.bf16.mxu0 0
        %3575 = vmatpush1.bf16.msra.mxu0 0
        %3576 = vmatprep.subr.bf16.mxu0 0
        %3577 = vmatpush1.bf16.msra.mxu0 0
        %3578 = vmatprep.subr.bf16.mxu0 0
        %3579 = vmatpush1.bf16.msra.mxu0 0
        %3580 = vmatprep.subr.bf16.mxu0 0
        %3581 = vmatpush1.bf16.msra.mxu0 0
        %3582 = vmatprep.subr.bf16.mxu0 0
        %3583 = vmatpush1.bf16.msra.mxu0 0
        %3584 = vmatprep.subr.bf16.mxu0 0
        %3585 = vmatpush1.bf16.msra.mxu0 0
        %3586 = vmatprep.subr.bf16.mxu0 0
        %3587 = vmatpush1.bf16.msra.mxu0 0
        %3588 = vmatprep.subr.bf16.mxu0 0
        %3589 = vmatpush1.bf16.msra.mxu0 0
        %3590 = vmatprep.subr.bf16.mxu0 0
        %3591 = vmatpush1.bf16.msra.mxu0 0
        %3592 = vmatprep.subr.bf16.mxu0 0
        %3593 = vmatpush1.bf16.msra.mxu0 0
        %3594 = vmatprep.subr.bf16.mxu0 0
        %3595 = vmatpush1.bf16.msra.mxu0 0
        %3596 = vmatprep.subr.bf16.mxu0 0
        %3597 = vmatpush1.bf16.msra.mxu0 0
        %3598 = vmatprep.subr.bf16.mxu0 0
        %3599 = vmatpush1.bf16.msra.mxu0 0
        %3600 = vmatprep.subr.bf16.mxu0 0
        %3601 = vmatpush1.bf16.msra.mxu0 0
        %3602 = vmatprep.subr.bf16.mxu0 0
        %3603 = vmatpush1.bf16.msra.mxu0 0
        %3604 = vmatprep.mubr.bf16.mxu0 0
        %3605 = vmatmul.mubr.bf16.gmra.mrb[0].mxu0 %v3567
        %v3606 = vpop.f32.mrb[0].mxu0
        %v3607 = vadd.f32 0.0, %v3606
        %v3608 = vpop.f32.mrb[0].mxu0
        %v3609 = vpop.f32.mrb[0].mxu0
        %v3610 = vadd.f32 0.0, %v3609
        %v3611 = vpop.f32.mrb[0].mxu0
        %3612 = vdwg.mxu0
        %v3614 = vsel %vm1893, %v3559, 0
        %v3617 = vsel %vm2374, %v3563, 0
        %3619 = vmatprep.subr.bf16.mxu0 0
        %3620 = vmatpush1.bf16.msra.mxu0 %v3617
        %3621 = vmatprep.subr.bf16.mxu0 0
        %3622 = vmatpush1.bf16.msra.mxu0 0
        %3623 = vmatprep.subr.bf16.mxu0 0
        %3624 = vmatpush1.bf16.msra.mxu0 0
        %3625 = vmatprep.subr.bf16.mxu0 0
        %3626 = vmatpush1.bf16.msra.mxu0 0
        %3627 = vmatprep.subr.bf16.mxu0 0
        %3628 = vmatpush1.bf16.msra.mxu0 0
        %3629 = vmatprep.subr.bf16.mxu0 0
        %3630 = vmatpush1.bf16.msra.mxu0 0
        %3631 = vmatprep.subr.bf16.mxu0 0
        %3632 = vmatpush1.bf16.msra.mxu0 0
        %3633 = vmatprep.subr.bf16.mxu0 0
        %3634 = vmatpush1.bf16.msra.mxu0 0
        %3635 = vmatprep.subr.bf16.mxu0 0
        %3636 = vmatpush1.bf16.msra.mxu0 0
        %3637 = vmatprep.subr.bf16.mxu0 0
        %3638 = vmatpush1.bf16.msra.mxu0 0
        %3639 = vmatprep.subr.bf16.mxu0 0
        %3640 = vmatpush1.bf16.msra.mxu0 0
        %3641 = vmatprep.subr.bf16.mxu0 0
        %3642 = vmatpush1.bf16.msra.mxu0 0
        %3643 = vmatprep.subr.bf16.mxu0 0
        %3644 = vmatpush1.bf16.msra.mxu0 0
        %3645 = vmatprep.subr.bf16.mxu0 0
        %3646 = vmatpush1.bf16.msra.mxu0 0
        %3647 = vmatprep.subr.bf16.mxu0 0
        %3648 = vmatpush1.bf16.msra.mxu0 0
        %3649 = vmatprep.subr.bf16.mxu0 0
        %3650 = vmatpush1.bf16.msra.mxu0 0
        %3651 = vmatprep.mubr.bf16.mxu0 0
        %3652 = vmatmul.mubr.bf16.gmra.mrb[0].mxu0 %v3614
        %v3653 = vpop.f32.mrb[0].mxu0
        %v3654 = vadd.f32 0.0, %v3653
        %v3655 = vpop.f32.mrb[0].mxu0
        %v3656 = vpop.f32.mrb[0].mxu0
        %v3657 = vadd.f32 0.0, %v3656
        %v3658 = vpop.f32.mrb[0].mxu0
        %3659 = vdwg.mxu0
        %v3661 = vsel %vm1893, %v3560, 0
        %v3664 = vsel %vm2374, %v3564, 0
        %3666 = vmatprep.subr.bf16.mxu0 0
        %3667 = vmatpush1.bf16.msra.mxu0 %v3664
        %3668 = vmatprep.subr.bf16.mxu0 0
        %3669 = vmatpush1.bf16.msra.mxu0 0
        %3670 = vmatprep.subr.bf16.mxu0 0
        %3671 = vmatpush1.bf16.msra.mxu0 0
        %3672 = vmatprep.subr.bf16.mxu0 0
        %3673 = vmatpush1.bf16.msra.mxu0 0
        %3674 = vmatprep.subr.bf16.mxu0 0
        %3675 = vmatpush1.bf16.msra.mxu0 0
        %3676 = vmatprep.subr.bf16.mxu0 0
        %3677 = vmatpush1.bf16.msra.mxu0 0
        %3678 = vmatprep.subr.bf16.mxu0 0
        %3679 = vmatpush1.bf16.msra.mxu0 0
        %3680 = vmatprep.subr.bf16.mxu0 0
        %3681 = vmatpush1.bf16.msra.mxu0 0
        %3682 = vmatprep.subr.bf16.mxu0 0
        %3683 = vmatpush1.bf16.msra.mxu0 0
        %3684 = vmatprep.subr.bf16.mxu0 0
        %3685 = vmatpush1.bf16.msra.mxu0 0
        %3686 = vmatprep.subr.bf16.mxu0 0
        %3687 = vmatpush1.bf16.msra.mxu0 0
        %3688 = vmatprep.subr.bf16.mxu0 0
        %3689 = vmatpush1.bf16.msra.mxu0 0
        %3690 = vmatprep.subr.bf16.mxu0 0
        %3691 = vmatpush1.bf16.msra.mxu0 0
        %3692 = vmatprep.subr.bf16.mxu0 0
        %3693 = vmatpush1.bf16.msra.mxu0 0
        %3694 = vmatprep.subr.bf16.mxu0 0
        %3695 = vmatpush1.bf16.msra.mxu0 0
        %3696 = vmatprep.subr.bf16.mxu0 0
        %3697 = vmatpush1.bf16.msra.mxu0 0
        %3698 = vmatprep.mubr.bf16.mxu0 0
        %3699 = vmatmul.mubr.bf16.gmra.mrb[0].mxu0 %v3661
        %v3700 = vpop.f32.mrb[0].mxu0
        %v3701 = vadd.f32 0.0, %v3700
        %v3702 = vpop.f32.mrb[0].mxu0
        %v3703 = vpop.f32.mrb[0].mxu0
        %v3704 = vadd.f32 0.0, %v3703
        %v3705 = vpop.f32.mrb[0].mxu0
        %3706 = vdwg.mxu0
        %v3708 = vsel %vm1893, %v3561, 0
        %v3711 = vsel %vm2374, %v3565, 0
        %3713 = vmatprep.subr.bf16.mxu0 0
        %3714 = vmatpush1.bf16.msra.mxu0 %v3711
        %3715 = vmatprep.subr.bf16.mxu0 0
        %3716 = vmatpush1.bf16.msra.mxu0 0
        %3717 = vmatprep.subr.bf16.mxu0 0
        %3718 = vmatpush1.bf16.msra.mxu0 0
        %3719 = vmatprep.subr.bf16.mxu0 0
        %3720 = vmatpush1.bf16.msra.mxu0 0
        %3721 = vmatprep.subr.bf16.mxu0 0
        %3722 = vmatpush1.bf16.msra.mxu0 0
        %3723 = vmatprep.subr.bf16.mxu0 0
        %3724 = vmatpush1.bf16.msra.mxu0 0
        %3725 = vmatprep.subr.bf16.mxu0 0
        %3726 = vmatpush1.bf16.msra.mxu0 0
        %3727 = vmatprep.subr.bf16.mxu0 0
        %3728 = vmatpush1.bf16.msra.mxu0 0
        %3729 = vmatprep.subr.bf16.mxu0 0
        %3730 = vmatpush1.bf16.msra.mxu0 0
        %3731 = vmatprep.subr.bf16.mxu0 0
        %3732 = vmatpush1.bf16.msra.mxu0 0
        %3733 = vmatprep.subr.bf16.mxu0 0
        %3734 = vmatpush1.bf16.msra.mxu0 0
        %3735 = vmatprep.subr.bf16.mxu0 0
        %3736 = vmatpush1.bf16.msra.mxu0 0
        %3737 = vmatprep.subr.bf16.mxu0 0
        %3738 = vmatpush1.bf16.msra.mxu0 0
        %3739 = vmatprep.subr.bf16.mxu0 0
        %3740 = vmatpush1.bf16.msra.mxu0 0
        %3741 = vmatprep.subr.bf16.mxu0 0
        %3742 = vmatpush1.bf16.msra.mxu0 0
        %3743 = vmatprep.subr.bf16.mxu0 0
        %3744 = vmatpush1.bf16.msra.mxu0 0
        %3745 = vmatprep.mubr.bf16.mxu0 0
        %3746 = vmatmul.mubr.bf16.gmra.mrb[0].mxu0 %v3708
        %v3747 = vpop.f32.mrb[0].mxu0
        %v3748 = vadd.f32 0.0, %v3747
        %v3749 = vpop.f32.mrb[0].mxu0
        %v3750 = vpop.f32.mrb[0].mxu0
        %v3751 = vadd.f32 0.0, %v3750
        %v3752 = vpop.f32.mrb[0].mxu0
        %3753 = vdwg.mxu0
        %v3754 = vpack.c.bf16 %v3610, %v3607
        %v3755 = vpack.c.bf16 %v3657, %v3654
        %v3756 = vpack.c.bf16 %v3704, %v3701
        %v3757 = vpack.c.bf16 %v3751, %v3748
        %v3758 = vld [vmem:[#allocation29] sm:$0xf]
        %v3759 = vld [vmem:[#allocation29 + $0x4] sm:$0xf]
        %v3760 = vld [vmem:[#allocation29 + $0x8] sm:$0xf]
        %v3761 = vld [vmem:[#allocation29 + $0xc] sm:$0xf]
        %v3763 = vsel %vm1893, %v3754, 0
        %v3766 = vsel %vm2374, %v3758, 0
        %3768 = vmatprep.subr.bf16.mxu0 0
        %3769 = vmatpush1.bf16.msra.mxu0 %v3766
        %3770 = vmatprep.subr.bf16.mxu0 0
        %3771 = vmatpush1.bf16.msra.mxu0 0
        %3772 = vmatprep.subr.bf16.mxu0 0
        %3773 = vmatpush1.bf16.msra.mxu0 0
        %3774 = vmatprep.subr.bf16.mxu0 0
        %3775 = vmatpush1.bf16.msra.mxu0 0
        %3776 = vmatprep.subr.bf16.mxu0 0
        %3777 = vmatpush1.bf16.msra.mxu0 0
        %3778 = vmatprep.subr.bf16.mxu0 0
        %3779 = vmatpush1.bf16.msra.mxu0 0
        %3780 = vmatprep.subr.bf16.mxu0 0
        %3781 = vmatpush1.bf16.msra.mxu0 0
        %3782 = vmatprep.subr.bf16.mxu0 0
        %3783 = vmatpush1.bf16.msra.mxu0 0
        %3784 = vmatprep.subr.bf16.mxu0 0
        %3785 = vmatpush1.bf16.msra.mxu0 0
        %3786 = vmatprep.subr.bf16.mxu0 0
        %3787 = vmatpush1.bf16.msra.mxu0 0
        %3788 = vmatprep.subr.bf16.mxu0 0
        %3789 = vmatpush1.bf16.msra.mxu0 0
        %3790 = vmatprep.subr.bf16.mxu0 0
        %3791 = vmatpush1.bf16.msra.mxu0 0
        %3792 = vmatprep.subr.bf16.mxu0 0
        %3793 = vmatpush1.bf16.msra.mxu0 0
        %3794 = vmatprep.subr.bf16.mxu0 0
        %3795 = vmatpush1.bf16.msra.mxu0 0
        %3796 = vmatprep.subr.bf16.mxu0 0
        %3797 = vmatpush1.bf16.msra.mxu0 0
        %3798 = vmatprep.subr.bf16.mxu0 0
        %3799 = vmatpush1.bf16.msra.mxu0 0
        %3800 = vmatprep.mubr.bf16.mxu0 0
        %3801 = vmatmul.mubr.bf16.gmra.mrb[0].mxu0 %v3763
        %v3802 = vpop.f32.mrb[0].mxu0
        %v3803 = vadd.f32 0.0, %v3802
        %v3804 = vpop.f32.mrb[0].mxu0
        %v3805 = vpop.f32.mrb[0].mxu0
        %v3806 = vadd.f32 0.0, %v3805
        %v3807 = vpop.f32.mrb[0].mxu0
        %3808 = vdwg.mxu0
        %v3810 = vsel %vm1893, %v3755, 0
        %v3813 = vsel %vm2374, %v3759, 0
        %3815 = vmatprep.subr.bf16.mxu0 0
        %3816 = vmatpush1.bf16.msra.mxu0 %v3813
        %3817 = vmatprep.subr.bf16.mxu0 0
        %3818 = vmatpush1.bf16.msra.mxu0 0
        %3819 = vmatprep.subr.bf16.mxu0 0
        %3820 = vmatpush1.bf16.msra.mxu0 0
        %3821 = vmatprep.subr.bf16.mxu0 0
        %3822 = vmatpush1.bf16.msra.mxu0 0
        %3823 = vmatprep.subr.bf16.mxu0 0
        %3824 = vmatpush1.bf16.msra.mxu0 0
        %3825 = vmatprep.subr.bf16.mxu0 0
        %3826 = vmatpush1.bf16.msra.mxu0 0
        %3827 = vmatprep.subr.bf16.mxu0 0
        %3828 = vmatpush1.bf16.msra.mxu0 0
        %3829 = vmatprep.subr.bf16.mxu0 0
        %3830 = vmatpush1.bf16.msra.mxu0 0
        %3831 = vmatprep.subr.bf16.mxu0 0
        %3832 = vmatpush1.bf16.msra.mxu0 0
        %3833 = vmatprep.subr.bf16.mxu0 0
        %3834 = vmatpush1.bf16.msra.mxu0 0
        %3835 = vmatprep.subr.bf16.mxu0 0
        %3836 = vmatpush1.bf16.msra.mxu0 0
        %3837 = vmatprep.subr.bf16.mxu0 0
        %3838 = vmatpush1.bf16.msra.mxu0 0
        %3839 = vmatprep.subr.bf16.mxu0 0
        %3840 = vmatpush1.bf16.msra.mxu0 0
        %3841 = vmatprep.subr.bf16.mxu0 0
        %3842 = vmatpush1.bf16.msra.mxu0 0
        %3843 = vmatprep.subr.bf16.mxu0 0
        %3844 = vmatpush1.bf16.msra.mxu0 0
        %3845 = vmatprep.subr.bf16.mxu0 0
        %3846 = vmatpush1.bf16.msra.mxu0 0
        %3847 = vmatprep.mubr.bf16.mxu0 0
        %3848 = vmatmul.mubr.bf16.gmra.mrb[0].mxu0 %v3810
        %v3849 = vpop.f32.mrb[0].mxu0
        %v3850 = vadd.f32 0.0, %v3849
        %v3851 = vpop.f32.mrb[0].mxu0
        %v3852 = vpop.f32.mrb[0].mxu0
        %v3853 = vadd.f32 0.0, %v3852
        %v3854 = vpop.f32.mrb[0].mxu0
        %3855 = vdwg.mxu0
        %v3857 = vsel %vm1893, %v3756, 0
        %v3860 = vsel %vm2374, %v3760, 0
        %3862 = vmatprep.subr.bf16.mxu0 0
        %3863 = vmatpush1.bf16.msra.mxu0 %v3860
        %3864 = vmatprep.subr.bf16.mxu0 0
        %3865 = vmatpush1.bf16.msra.mxu0 0
        %3866 = vmatprep.subr.bf16.mxu0 0
        %3867 = vmatpush1.bf16.msra.mxu0 0
        %3868 = vmatprep.subr.bf16.mxu0 0
        %3869 = vmatpush1.bf16.msra.mxu0 0
        %3870 = vmatprep.subr.bf16.mxu0 0
        %3871 = vmatpush1.bf16.msra.mxu0 0
        %3872 = vmatprep.subr.bf16.mxu0 0
        %3873 = vmatpush1.bf16.msra.mxu0 0
        %3874 = vmatprep.subr.bf16.mxu0 0
        %3875 = vmatpush1.bf16.msra.mxu0 0
        %3876 = vmatprep.subr.bf16.mxu0 0
        %3877 = vmatpush1.bf16.msra.mxu0 0
        %3878 = vmatprep.subr.bf16.mxu0 0
        %3879 = vmatpush1.bf16.msra.mxu0 0
        %3880 = vmatprep.subr.bf16.mxu0 0
        %3881 = vmatpush1.bf16.msra.mxu0 0
        %3882 = vmatprep.subr.bf16.mxu0 0
        %3883 = vmatpush1.bf16.msra.mxu0 0
        %3884 = vmatprep.subr.bf16.mxu0 0
        %3885 = vmatpush1.bf16.msra.mxu0 0
        %3886 = vmatprep.subr.bf16.mxu0 0
        %3887 = vmatpush1.bf16.msra.mxu0 0
        %3888 = vmatprep.subr.bf16.mxu0 0
        %3889 = vmatpush1.bf16.msra.mxu0 0
        %3890 = vmatprep.subr.bf16.mxu0 0
        %3891 = vmatpush1.bf16.msra.mxu0 0
        %3892 = vmatprep.subr.bf16.mxu0 0
        %3893 = vmatpush1.bf16.msra.mxu0 0
        %3894 = vmatprep.mubr.bf16.mxu0 0
        %3895 = vmatmul.mubr.bf16.gmra.mrb[0].mxu0 %v3857
        %v3896 = vpop.f32.mrb[0].mxu0
        %v3897 = vadd.f32 0.0, %v3896
        %v3898 = vpop.f32.mrb[0].mxu0
        %v3899 = vpop.f32.mrb[0].mxu0
        %v3900 = vadd.f32 0.0, %v3899
        %v3901 = vpop.f32.mrb[0].mxu0
        %3902 = vdwg.mxu0
        %v3904 = vsel %vm1893, %v3757, 0
        %v3907 = vsel %vm2374, %v3761, 0
        %3909 = vmatprep.subr.bf16.mxu0 0
        %3910 = vmatpush1.bf16.msra.mxu0 %v3907
        %3911 = vmatprep.subr.bf16.mxu0 0
        %3912 = vmatpush1.bf16.msra.mxu0 0
        %3913 = vmatprep.subr.bf16.mxu0 0
        %3914 = vmatpush1.bf16.msra.mxu0 0
        %3915 = vmatprep.subr.bf16.mxu0 0
        %3916 = vmatpush1.bf16.msra.mxu0 0
        %3917 = vmatprep.subr.bf16.mxu0 0
        %3918 = vmatpush1.bf16.msra.mxu0 0
        %3919 = vmatprep.subr.bf16.mxu0 0
        %3920 = vmatpush1.bf16.msra.mxu0 0
        %3921 = vmatprep.subr.bf16.mxu0 0
        %3922 = vmatpush1.bf16.msra.mxu0 0
        %3923 = vmatprep.subr.bf16.mxu0 0
        %3924 = vmatpush1.bf16.msra.mxu0 0
        %3925 = vmatprep.subr.bf16.mxu0 0
        %3926 = vmatpush1.bf16.msra.mxu0 0
        %3927 = vmatprep.subr.bf16.mxu0 0
        %3928 = vmatpush1.bf16.msra.mxu0 0
        %3929 = vmatprep.subr.bf16.mxu0 0
        %3930 = vmatpush1.bf16.msra.mxu0 0
        %3931 = vmatprep.subr.bf16.mxu0 0
        %3932 = vmatpush1.bf16.msra.mxu0 0
        %3933 = vmatprep.subr.bf16.mxu0 0
        %3934 = vmatpush1.bf16.msra.mxu0 0
        %3935 = vmatprep.subr.bf16.mxu0 0
        %3936 = vmatpush1.bf16.msra.mxu0 0
        %3937 = vmatprep.subr.bf16.mxu0 0
        %3938 = vmatpush1.bf16.msra.mxu0 0
        %3939 = vmatprep.subr.bf16.mxu0 0
        %3940 = vmatpush1.bf16.msra.mxu0 0
        %3941 = vmatprep.mubr.bf16.mxu0 0
        %3942 = vmatmul.mubr.bf16.gmra.mrb[0].mxu0 %v3904
        %v3943 = vpop.f32.mrb[0].mxu0
        %v3944 = vadd.f32 0.0, %v3943
        %v3945 = vpop.f32.mrb[0].mxu0
        %v3946 = vpop.f32.mrb[0].mxu0
        %v3947 = vadd.f32 0.0, %v3946
        %v3948 = vpop.f32.mrb[0].mxu0
        %3949 = vdwg.mxu0
        %v3950 = vsel %vm1151, %v3803, 0.0
        %v3951 = vsel %vm1151, %v3850, 0.0
        %v3952 = vadd.f32 %v3950, %v3951
        %v3953 = vsel %vm1151, %v3897, 0.0
        %v3954 = vadd.f32 %v3952, %v3953
        %v3955 = vsel %vm1151, %v3944, 0.0
        %v3956 = vadd.f32 %v3954, %v3955
        %v3957 = vsel %vm1151, %v3806, 0.0
        %v3958 = vsel %vm1151, %v3853, 0.0
        %v3959 = vadd.f32 %v3957, %v3958
        %v3960 = vsel %vm1151, %v3900, 0.0
        %v3961 = vadd.f32 %v3959, %v3960
        %v3962 = vsel %vm1151, %v3947, 0.0
        %v3963 = vadd.f32 %v3961, %v3962
        %v3964 = vld [vmem:[#allocation31] sm:$0x1]
        %v3966 = vlaneseq
        %v3967 = vshrl.u32 %v3966, 7
        %v3968 = vsub.s32 0, %v3967
        %v3969 = vrot.slane %v3964, %v3968
        %v3971 = vadd.f32 %v3956, %v3969
        %v3972 = vadd.f32 %v3963, %v3969
        %v3973 = vadd.f32 %v2583, %v3971
        %v3974 = vadd.f32 %v2584, %v3972
        %v3975 = vsel %vm1151, %v3973, 0.0
        %3976 = vadd.xlane.f32.xlu0 %v3975
        %v3977 = vpop.xlane.xlu0 %3976
        %v3978 = vsel %vm1151, %v3974, 0.0
        %3979 = vadd.xlane.f32.xlu0 %v3978
        %v3980 = vpop.xlane.xlu0 %3979
        %v3981 = vmul.f32 %v3977, %v1158
        %v3982 = vmul.f32 %v3980, %v1158
        %v3983 = vsub.f32 %v3973, %v3981
        %v3984 = vsub.f32 %v3974, %v3982
        %v3985 = vmul.f32 %v3983, %v3983
        %v3986 = vmul.f32 %v3984, %v3984
        %v3987 = vsel %vm1151, %v3985, 0.0
        %3988 = vadd.xlane.f32.xlu0 %v3987
        %v3989 = vpop.xlane.xlu0 %3988
        %v3990 = vsel %vm1151, %v3986, 0.0
        %3991 = vadd.xlane.f32.xlu0 %v3990
        %v3992 = vpop.xlane.xlu0 %3991
        %v3993 = vmul.f32 %v3989, %v1158
        %v3994 = vmul.f32 %v3992, %v1158
        %v3995 = vadd.f32 %v3993, 1e-05
        %v3996 = vadd.f32 %v3994, 1e-05
        %v3997 = vrsqrt.pop %v3995
        %v3998 = vrsqrt.pop %v3996
        %v3999 = vmul.f32 %v3983, %v3997
        %v4000 = vmul.f32 %v3984, %v3998
        %v4001 = vld [vmem:[#allocation14] sm:$0x1]
        %v4003 = vlaneseq
        %v4004 = vshrl.u32 %v4003, 7
        %v4005 = vsub.s32 0, %v4004
        %v4006 = vrot.slane %v4001, %v4005
        %v4008 = vmul.f32 %v3999, %v4006
        %v4009 = vmul.f32 %v4000, %v4006
        %v4010 = vld [vmem:[#allocation16] sm:$0x1]
        %v4012 = vlaneseq
        %v4013 = vshrl.u32 %v4012, 7
        %v4014 = vsub.s32 0, %v4013
        %v4015 = vrot.slane %v4010, %v4014
        %v4017 = vadd.f32 %v4008, %v4015
        %v4018 = vadd.f32 %v4009, %v4015
        %v4019 = vpack.c.bf16 %v4018, %v4017
        %v4020 = vld [vmem:[#allocation32] sm:$0xf]
        %v4021 = vld [vmem:[#allocation32 + $0x4] sm:$0xf]
        %v4022 = vld [vmem:[#allocation32 + $0x8] sm:$0xf]
        %v4023 = vld [vmem:[#allocation32 + $0xc] sm:$0xf]
        %v4024 = vld [vmem:[#allocation34] sm:$0x1]
        %v4026 = vlaneseq
        %v4027 = vshrl.u32 %v4026, 7
        %v4028 = vsub.s32 0, %v4027
        %v4029 = vrot.slane %v4024, %v4028
        %v4035 = vunpack.c.l.b16 %v4020
        %v4036 = vunpack.c.l.b16 %v4021
        %v4037 = vunpack.c.l.b16 %v4022
        %v4038 = vunpack.c.l.b16 %v4023
        %v4039 = vpack.c.b16 %v4036, %v4035
        %v4040 = vpack.c.b16 %v4038, %v4037
        %v4044 = vsel %vm1151, %v4019, 0
        %4046 = vmatprep.subr.bf16.mxu0 0
        %4047 = vmatpush1.bf16.msra.mxu0 %v4039
        %4048 = vmatprep.subr.bf16.mxu0 0
        %4049 = vmatpush1.bf16.msra.mxu0 %v4040
        %4050 = vmatprep.subr.bf16.mxu0 0
        %4051 = vmatpush1.bf16.msra.mxu0 0
        %4052 = vmatprep.subr.bf16.mxu0 0
        %4053 = vmatpush1.bf16.msra.mxu0 0
        %4054 = vmatprep.subr.bf16.mxu0 0
        %4055 = vmatpush1.bf16.msra.mxu0 0
        %4056 = vmatprep.subr.bf16.mxu0 0
        %4057 = vmatpush1.bf16.msra.mxu0 0
        %4058 = vmatprep.subr.bf16.mxu0 0
        %4059 = vmatpush1.bf16.msra.mxu0 0
        %4060 = vmatprep.subr.bf16.mxu0 0
        %4061 = vmatpush1.bf16.msra.mxu0 0
        %4062 = vmatprep.subr.bf16.mxu0 0
        %4063 = vmatpush1.bf16.msra.mxu0 0
        %4064 = vmatprep.subr.bf16.mxu0 0
        %4065 = vmatpush1.bf16.msra.mxu0 0
        %4066 = vmatprep.subr.bf16.mxu0 0
        %4067 = vmatpush1.bf16.msra.mxu0 0
        %4068 = vmatprep.subr.bf16.mxu0 0
        %4069 = vmatpush1.bf16.msra.mxu0 0
        %4070 = vmatprep.subr.bf16.mxu0 0
        %4071 = vmatpush1.bf16.msra.mxu0 0
        %4072 = vmatprep.subr.bf16.mxu0 0
        %4073 = vmatpush1.bf16.msra.mxu0 0
        %4074 = vmatprep.subr.bf16.mxu0 0
        %4075 = vmatpush1.bf16.msra.mxu0 0
        %4076 = vmatprep.subr.bf16.mxu0 0
        %4077 = vmatpush1.bf16.msra.mxu0 0
        %4078 = vmatprep.mubr.bf16.mxu0 0
        %4079 = vmatmul.mubr.bf16.gmra.mrb[0].mxu0 %v4044
        %v4080 = vpop.f32.mrb[0].mxu0
        %v4081 = vadd.f32 %v4029, %v4080
        %v4082 = vpop.f32.mrb[0].mxu0
        %v4083 = vpop.f32.mrb[0].mxu0
        %v4084 = vadd.f32 %v4029, %v4083
        %v4085 = vpop.f32.mrb[0].mxu0
        %4086 = vdwg.mxu0
        %v4087 = vld [vmem:[#allocation35] sm:$0xf]
        %v4088 = vld [vmem:[#allocation35 + $0x4] sm:$0xf]
        %v4089 = vld [vmem:[#allocation35 + $0x8] sm:$0xf]
        %v4090 = vld [vmem:[#allocation35 + $0xc] sm:$0xf]
        %v4091 = vld [vmem:[#allocation37] sm:$0x1]
        %v4093 = vlaneseq
        %v4094 = vshrl.u32 %v4093, 7
        %v4095 = vsub.s32 0, %v4094
        %v4096 = vrot.slane %v4091, %v4095
        %v4102 = vunpack.c.l.b16 %v4087
        %v4103 = vunpack.c.l.b16 %v4088
        %v4104 = vunpack.c.l.b16 %v4089
        %v4105 = vunpack.c.l.b16 %v4090
        %v4106 = vpack.c.b16 %v4103, %v4102
        %v4107 = vpack.c.b16 %v4105, %v4104
        %4110 = vmatprep.subr.bf16.mxu0 0
        %4111 = vmatpush1.bf16.msra.mxu0 %v4106
        %4112 = vmatprep.subr.bf16.mxu0 0
        %4113 = vmatpush1.bf16.msra.mxu0 %v4107
        %4114 = vmatprep.subr.bf16.mxu0 0
        %4115 = vmatpush1.bf16.msra.mxu0 0
        %4116 = vmatprep.subr.bf16.mxu0 0
        %4117 = vmatpush1.bf16.msra.mxu0 0
        %4118 = vmatprep.subr.bf16.mxu0 0
        %4119 = vmatpush1.bf16.msra.mxu0 0
        %4120 = vmatprep.subr.bf16.mxu0 0
        %4121 = vmatpush1.bf16.msra.mxu0 0
        %4122 = vmatprep.subr.bf16.mxu0 0
        %4123 = vmatpush1.bf16.msra.mxu0 0
        %4124 = vmatprep.subr.bf16.mxu0 0
        %4125 = vmatpush1.bf16.msra.mxu0 0
        %4126 = vmatprep.subr.bf16.mxu0 0
        %4127 = vmatpush1.bf16.msra.mxu0 0
        %4128 = vmatprep.subr.bf16.mxu0 0
        %4129 = vmatpush1.bf16.msra.mxu0 0
        %4130 = vmatprep.subr.bf16.mxu0 0
        %4131 = vmatpush1.bf16.msra.mxu0 0
        %4132 = vmatprep.subr.bf16.mxu0 0
        %4133 = vmatpush1.bf16.msra.mxu0 0
        %4134 = vmatprep.subr.bf16.mxu0 0
        %4135 = vmatpush1.bf16.msra.mxu0 0
        %4136 = vmatprep.subr.bf16.mxu0 0
        %4137 = vmatpush1.bf16.msra.mxu0 0
        %4138 = vmatprep.subr.bf16.mxu0 0
        %4139 = vmatpush1.bf16.msra.mxu0 0
        %4140 = vmatprep.subr.bf16.mxu0 0
        %4141 = vmatpush1.bf16.msra.mxu0 0
        %4142 = vmatprep.mubr.bf16.mxu0 0
        %4143 = vmatmul.mubr.bf16.gmra.mrb[0].mxu0 %v4044
        %v4144 = vpop.f32.mrb[0].mxu0
        %v4145 = vadd.f32 %v4096, %v4144
        %v4146 = vpop.f32.mrb[0].mxu0
        %v4147 = vpop.f32.mrb[0].mxu0
        %v4148 = vadd.f32 %v4096, %v4147
        %v4149 = vpop.f32.mrb[0].mxu0
        %4150 = vdwg.mxu0
        %v4151 = vmul.f32 %v4145, 0.5
        %v4152 = vmul.f32 %v4148, 0.5
        %v4153 = vmul.f32 %v4145, 0.70710677
        %v4154 = vmul.f32 %v4148, 0.70710677
        %v4155 = verf.f32.pop %v4153
        %v4156 = verf.f32.pop %v4154
        %v4157 = vadd.f32 %v4155, 1.0
        %v4158 = vadd.f32 %v4156, 1.0
        %v4159 = vmul.f32 %v4151, %v4157
        %v4160 = vmul.f32 %v4152, %v4158
        %v4161 = vmul.f32 %v4081, %v4159
        %v4162 = vmul.f32 %v4084, %v4160
        %v4163 = vpack.c.bf16 %v4162, %v4161
        %v4164 = vld [vmem:[#allocation38] sm:$0xf]
        %v4165 = vld [vmem:[#allocation38 + $0x4] sm:$0xf]
        %v4166 = vld [vmem:[#allocation38 + $0x8] sm:$0xf]
        %v4167 = vld [vmem:[#allocation38 + $0xc] sm:$0xf]
        %v4168 = vld [vmem:[#allocation38 + $0x10] sm:$0xf]
        %v4169 = vld [vmem:[#allocation38 + $0x14] sm:$0xf]
        %v4170 = vld [vmem:[#allocation38 + $0x18] sm:$0xf]
        %v4171 = vld [vmem:[#allocation38 + $0x1c] sm:$0xf]
        %v4172 = vld [vmem:[#allocation38 + $0x20] sm:$0xf]
        %v4173 = vld [vmem:[#allocation38 + $0x24] sm:$0xf]
        %v4174 = vld [vmem:[#allocation38 + $0x28] sm:$0xf]
        %v4175 = vld [vmem:[#allocation38 + $0x2c] sm:$0xf]
        %v4176 = vld [vmem:[#allocation38 + $0x30] sm:$0xf]
        %v4177 = vld [vmem:[#allocation38 + $0x34] sm:$0xf]
        %v4178 = vld [vmem:[#allocation38 + $0x38] sm:$0xf]
        %v4179 = vld [vmem:[#allocation38 + $0x3c] sm:$0xf]
        %v4180 = vld [vmem:[#allocation40] sm:$0x1]
        %v4182 = vlaneseq
        %v4183 = vshrl.u32 %v4182, 7
        %v4184 = vsub.s32 0, %v4183
        %v4185 = vrot.slane %v4180, %v4184
        %v4203 = vunpack.c.l.b16 %v4164
        %v4204 = vunpack.c.l.b16 %v4165
        %v4205 = vunpack.c.l.b16 %v4166
        %v4206 = vunpack.c.l.b16 %v4167
        %v4207 = vunpack.c.l.b16 %v4168
        %v4208 = vunpack.c.l.b16 %v4169
        %v4209 = vunpack.c.l.b16 %v4170
        %v4210 = vunpack.c.l.b16 %v4171
        %v4211 = vunpack.c.l.b16 %v4172
        %v4212 = vunpack.c.l.b16 %v4173
        %v4213 = vunpack.c.l.b16 %v4174
        %v4214 = vunpack.c.l.b16 %v4175
        %v4215 = vunpack.c.l.b16 %v4176
        %v4216 = vunpack.c.l.b16 %v4177
        %v4217 = vunpack.c.l.b16 %v4178
        %v4218 = vunpack.c.l.b16 %v4179
        %v4219 = vpack.c.b16 %v4204, %v4203
        %v4220 = vpack.c.b16 %v4206, %v4205
        %v4221 = vpack.c.b16 %v4208, %v4207
        %v4222 = vpack.c.b16 %v4210, %v4209
        %v4223 = vpack.c.b16 %v4212, %v4211
        %v4224 = vpack.c.b16 %v4214, %v4213
        %v4225 = vpack.c.b16 %v4216, %v4215
        %v4226 = vpack.c.b16 %v4218, %v4217
        %4235 = vmatprep.subr.bf16.mxu0 0
        %4236 = vmatpush1.bf16.msra.mxu0 %v4219
        %4237 = vmatprep.subr.bf16.mxu0 0
        %4238 = vmatpush1.bf16.msra.mxu0 %v4220
        %4239 = vmatprep.subr.bf16.mxu0 0
        %4240 = vmatpush1.bf16.msra.mxu0 %v4221
        %4241 = vmatprep.subr.bf16.mxu0 0
        %4242 = vmatpush1.bf16.msra.mxu0 %v4222
        %4243 = vmatprep.subr.bf16.mxu0 0
        %4244 = vmatpush1.bf16.msra.mxu0 %v4223
        %4245 = vmatprep.subr.bf16.mxu0 0
        %4246 = vmatpush1.bf16.msra.mxu0 %v4224
        %4247 = vmatprep.subr.bf16.mxu0 0
        %4248 = vmatpush1.bf16.msra.mxu0 %v4225
        %4249 = vmatprep.subr.bf16.mxu0 0
        %4250 = vmatpush1.bf16.msra.mxu0 %v4226
        %4251 = vmatprep.subr.bf16.mxu0 0
        %4252 = vmatpush1.bf16.msra.mxu0 0
        %4253 = vmatprep.subr.bf16.mxu0 0
        %4254 = vmatpush1.bf16.msra.mxu0 0
        %4255 = vmatprep.subr.bf16.mxu0 0
        %4256 = vmatpush1.bf16.msra.mxu0 0
        %4257 = vmatprep.subr.bf16.mxu0 0
        %4258 = vmatpush1.bf16.msra.mxu0 0
        %4259 = vmatprep.subr.bf16.mxu0 0
        %4260 = vmatpush1.bf16.msra.mxu0 0
        %4261 = vmatprep.subr.bf16.mxu0 0
        %4262 = vmatpush1.bf16.msra.mxu0 0
        %4263 = vmatprep.subr.bf16.mxu0 0
        %4264 = vmatpush1.bf16.msra.mxu0 0
        %4265 = vmatprep.subr.bf16.mxu0 0
        %4266 = vmatpush1.bf16.msra.mxu0 0
        %4267 = vmatprep.mubr.bf16.mxu0 0
        %4268 = vmatmul.mubr.bf16.gmra.mrb[0].mxu0 %v4163
        %v4269 = vpop.f32.mrb[0].mxu0
        %v4270 = vadd.f32 %v4185, %v4269
        %v4271 = vpop.f32.mrb[0].mxu0
        %v4272 = vpop.f32.mrb[0].mxu0
        %v4273 = vadd.f32 %v4185, %v4272
        %v4274 = vpop.f32.mrb[0].mxu0
        %4275 = vdwg.mxu0
        %v4276 = vadd.f32 %v3973, %v4270
        %v4277 = vadd.f32 %v3974, %v4273
        %4278 = vst.msk [vmem:[%s1147] sm:$0xff] %vm1151, %v4276
        %4279 = vst.msk [vmem:[%s1147 + $0x8] sm:$0xff] %vm1151, %v4277
        %s4280 = sand.u32 %s604, 1
        %s4281 = scalar_lea.sflag [#allocation4], %s4280
        %s4282 = sand.u32 %s604, 1
        %s4283 = smul.addr %s4282, 16
        %s4284 = scalar_lea.vmem [#allocation41], %s4283
        // Predicated region
        $region221: #{basic_transformer_block.1} parent=119 // pred_check
          %p4285 = pneg %p614
        $region222: #{basic_transformer_block.1} parent=119 // pred_check_branch
          %4287 = sbr.rel (%p4285) target = $region224
        $region223: #{basic_transformer_block.1} parent=119 // pred_region
          %s4289 = ssub.s32 256, 256
          %4290 = vsyncadd %s4281, %s4289
          %s4291 = smul.addr %s56, 2
          %s4292 = smul.addr %s4291, 128
          %s4293 = scalar_lea.hbm %s25, %s4292
          %s4294 = sshll.u32 %s4284, 4
          %s4295 = int_to_ptr.vmem [resolvable:$true] %s4294
          %4300 = dma.vmem_to_hbm [thread:$0]  %s4295, 256, %s4293, %s4281, 128, 128, 8
        $region224: #{basic_transformer_block.1} parent=119 // pred_fallthru
          _
      $region120: #{basic_transformer_block.1} parent=5 // pred_fallthru
        _
      %p4301 = scmp.le.s32.totalorder 2, %s51
      // Predicated region
      $region225: #{basic_transformer_block.1} parent=5 // pred_check
        %p4302 = pneg %p4301
      $region226: #{basic_transformer_block.1} parent=5 // pred_check_branch
        %4304 = sbr.rel (%p4302) target = $region228
      $region227: #{basic_transformer_block.1} parent=5 // pred_region
        %s4305 = ssub.s32 %s51, 2
        // Predicated region
        $region229: #{basic_transformer_block.1} parent=227 // pred_check
          %p4306 = pneg %p620
        $region230: #{basic_transformer_block.1} parent=227 // pred_check_branch
          %4308 = sbr.rel (%p4306) target = $region232
        $region231: #{basic_transformer_block.1} parent=227 // pred_region
          %s4309 = sand.u32 %s605, 1
          %s4310 = scalar_lea.sflag [#allocation4], %s4309
          %s4311 = sand.u32 %s605, 1
          %s4312 = smul.addr %s4311, 16
          %s4313 = scalar_lea.vmem [#allocation41], %s4312
          %4314 = dma.done %s4310, 256
        $region232: #{basic_transformer_block.1} parent=227 // pred_fallthru
          _
      $region228: #{basic_transformer_block.1} parent=5 // pred_fallthru
        _
    $region6: #{basic_transformer_block.1} parent=1 // loop_footer
      %s55 = sadd.s32 1, %s51
    $region7: #{basic_transformer_block.1} parent=1 // loop_footer_branch
      %50 = sbr.rel target = $region3
    $region8: #{basic_transformer_block.1} parent=1 // loop_exit
      _
    %4315 = vsyncpa [#allocation3], 1
    %s4316 = scalar_lea.sflag [#allocation3], 1
    %4317 = vsyncpa %s4316, 1
    %4318 = vsyncpa [#allocation6], 1
    %s4319 = scalar_lea.sflag [#allocation6], 1
    %4320 = vsyncpa %s4319, 1
    %4321 = vsyncpa [#allocation9], 1
    %4322 = vsyncpa [#allocation12], 1
    %4323 = vsyncpa [#allocation15], 1
    %4324 = vsyncpa [#allocation18], 1
    %4325 = vsyncpa [#allocation21], 1
    %4326 = vsyncpa [#allocation24], 1
    %4327 = vsyncpa [#allocation27], 1
    %4328 = vsyncpa [#allocation30], 1
    %4329 = vsyncpa [#allocation33], 1
    %4330 = vsyncpa [#allocation36], 1
    %4331 = vsyncpa [#allocation39], 1
    %4332 = vsyncpa [#allocation4], 1
    %s4333 = scalar_lea.sflag [#allocation4], 1
    %4334 = vsyncpa %s4333, 1

</llo_original>
